<compile_context>
chip_gen: v5e
topology: v5e:2x2
jax: 0.10.0
libtpu: 0.0.40
codegen_flags: <defaults>
</compile_context>

<pallas_src>
from functools import partial

import jax
import jax.numpy as jnp
from jax import lax
from jax.experimental import pallas as pl
from jax.experimental.pallas import tpu as pltpu


def _acos_poly(t):
    """arccos(t) for t in [0, 1] via Abramowitz & Stegun 4.4.46 polynomial
    (|err| < 2e-8). Avoids relying on atan2/acos lowering inside Mosaic."""
    coeffs = (1.5707963050, -0.2145988016, 0.0889789874, -0.0501743046,
              0.0308918810, -0.0170881256, 0.0066700901, -0.0012624911)
    p = jnp.full_like(t, coeffs[-1])
    for c in coeffs[-2::-1]:
        p = p * t + c
    return jnp.sqrt(jnp.maximum(1.0 - t, 0.0)) * p


def sinkhorn_kernel(xt_ref, yt_ref, wx_ref, wy_ref, out_ref, *,
                    eps, max_iter, use_exp_kernel):
    # xt_ref: (B, D, P1)   yt_ref: (B, D, P2)
    # wx_ref: (B, 1, P1)   wy_ref: (B, 1, P2)   out_ref: (1, 1, B)
    xt = xt_ref[...]          # (B, D, P1)  lane-dense
    yt = yt_ref[...]          # (B, D, P2)  lane-dense
    wx = wx_ref[...]          # (B, 1, P1)  lane-dense row
    wy = wy_ref[...]          # (B, 1, P2)  lane-dense row

    eps = jnp.float32(eps)
    inv_eps = jnp.float32(1.0) / eps

    # Quaternion geodesic distance cost matrix: batched contraction of the
    # tiny D=4 axis of the two (B, D, P) slabs on the MXU.
    dot = lax.dot_general(xt, yt, (((1,), (1,)), ((0,), (0,))),
                          preferred_element_type=jnp.float32)     # (B, P1, P2)
    t = jnp.clip(jnp.abs(dot), 0.0, 1.0 - 1e-7)
    C_over_eps = (2.0 * inv_eps) * _acos_poly(t)                  # (B, P1, P2)

    # Clamp so exactly-zero (sparse) weights cannot turn log() into -inf/NaN.
    log_wx = jnp.log(jnp.maximum(wx, 1e-30))                      # (B, 1, P1)
    log_wy = jnp.log(jnp.maximum(wy, 1e-30))                      # (B, 1, P2)

    if use_exp_kernel:
        # Fast path (eps >= ~0.08): kernel matrix computed once, then every
        # half-iteration is a (1,P) exp + one MXU matvec + a (1,P) log.
        K = jnp.exp(-C_over_eps)                                  # (B, P1, P2)

        def body(_, carry):
            f, g = carry                                          # rows
            fe = f * inv_eps + log_wx                             # (B, 1, P1)
            m = jnp.max(fe, axis=2, keepdims=True)                # (B, 1, 1)
            u = jnp.exp(fe - m)                                   # (B, 1, P1)
            col = lax.dot_general(u, K, (((2,), (1,)), ((0,), (0,))),
                                  preferred_element_type=jnp.float32)  # (B,1,P2)
            g = -eps * (jnp.log(col) + m)
            ge = g * inv_eps + log_wy                             # (B, 1, P2)
            m2 = jnp.max(ge, axis=2, keepdims=True)               # (B, 1, 1)
            v = jnp.exp(ge - m2)                                  # (B, 1, P2)
            row = lax.dot_general(v, K, (((2,), (2,)), ((0,), (0,))),
                                  preferred_element_type=jnp.float32)  # (B,1,P1)
            f = -eps * (jnp.log(row) + m2)
            return f, g

        f0 = jnp.zeros(wx.shape, jnp.float32)
        g0 = jnp.zeros(wy.shape, jnp.float32)
        # max_iter is a static Python int: fully unroll so the B independent
        # exp -> matvec -> log chains overlap across EUP / MXU / VPU slots.
        f, g = lax.fori_loop(0, max_iter, body, (f0, g0), unroll=True)
    else:
        # Fallback for small eps: full log-domain softmin with per-row/column
        # maxima (numerically safe for any eps; correctness-only path).
        log_wx_col = jnp.transpose(log_wx, (0, 2, 1))             # (B, P1, 1)

        def body(_, carry):
            f, g = carry                         # f (B,P1,1), g (B,1,P2)
            fe = f * inv_eps + log_wx_col
            Mg = fe - C_over_eps
            mg = jnp.max(Mg, axis=1, keepdims=True)               # (B, 1, P2)
            g = -eps * (jnp.log(jnp.sum(jnp.exp(Mg - mg), axis=1,
                                        keepdims=True)) + mg)
            ge = g * inv_eps + log_wy
            Mf = ge - C_over_eps
            mf = jnp.max(Mf, axis=2, keepdims=True)               # (B, P1, 1)
            f = -eps * (jnp.log(jnp.sum(jnp.exp(Mf - mf), axis=2,
                                        keepdims=True)) + mf)
            return f, g

        f0 = jnp.zeros((wx.shape[0], wx.shape[2], 1), jnp.float32)
        g0 = jnp.zeros(wy.shape, jnp.float32)
        fc, g = lax.fori_loop(0, max_iter, body, (f0, g0), unroll=True)
        f = jnp.transpose(fc, (0, 2, 1))                          # (B, 1, P1)

    # Regularized OT dual value per batch element, stored as one lane-dense
    # (1, B) row (single store per grid step).
    loss = jnp.sum(wx * f, axis=2) + jnp.sum(wy * g, axis=2)      # (B, 1)
    out_ref[...] = jnp.reshape(loss, (1, 1, loss.shape[0]))


def sinkhorn_eval(x, w_x, y, w_y, *, eps, max_iter, block_batch=None):
    """Mean over batch of the Sinkhorn OT cost between weighted quaternion
    point clouds (x, w_x) and (y, w_y)  (matches torch.mean(self.loss(...)))."""
    N, P1, D = x.shape
    _, P2, _ = y.shape

    if block_batch is None:
        # Several batch elements per grid step amortize the ~0.35us step
        # overhead and fill the EUP/MXU pipelines; keep >= 2 grid blocks so a
        # 2-TC part (v7x) can shard the batch axis across TensorCores.
        block_batch = 1
        for cand in (8, 4, 2):
            if N % cand == 0 and N // cand >= 2:
                block_batch = cand
                break
    B = block_batch
    assert N % B == 0, "block_batch must divide the batch size"
    NB = N // B

    # Lane-dense layouts: put the point axis on the 128-wide lane dimension.
    xt = jnp.transpose(x.astype(jnp.float32), (0, 2, 1))          # (N, D, P1)
    yt = jnp.transpose(y.astype(jnp.float32), (0, 2, 1))          # (N, D, P2)
    wx = w_x.reshape(N, 1, P1).astype(jnp.float32)                # (N, 1, P1)
    wy = w_y.reshape(N, 1, P2).astype(jnp.float32)                # (N, 1, P2)

    # exp(-C/eps) kernel-matrix path is f32-safe while 2*pi/eps <~ 80.
    use_exp_kernel = float(eps) >= 0.08

    kernel = partial(sinkhorn_kernel, eps=float(eps), max_iter=int(max_iter),
                     use_exp_kernel=use_exp_kernel)

    per_elem = pl.pallas_call(
        kernel,
        out_shape=jax.ShapeDtypeStruct((NB, 1, B), jnp.float32),
        grid_spec=pltpu.PrefetchScalarGridSpec(
            num_scalar_prefetch=0,
            grid=(NB,),
            in_specs=[
                pl.BlockSpec((B, D, P1), lambda b: (b, 0, 0)),
                pl.BlockSpec((B, D, P2), lambda b: (b, 0, 0)),
                pl.BlockSpec((B, 1, P1), lambda b: (b, 0, 0)),
                pl.BlockSpec((B, 1, P2), lambda b: (b, 0, 0)),
            ],
            out_specs=pl.BlockSpec((1, 1, B), lambda b: (b, 0, 0)),
        ),
        # Batch axis is independent -> "parallel" (shards grid blocks across
        # TensorCores on 2-TC parts such as v7x; no-op on v5e/v6e).
        compiler_params=pltpu.CompilerParams(
            dimension_semantics=("parallel",)),
    )(xt, yt, wx, wy)

    return jnp.mean(per_elem)   # torch.mean(self.loss(...)), reduction over N


if __name__ == "__main__":
    key = jax.random.PRNGKey(0)
    N, P1, P2, D = 4, 128, 128, 4          # quaternions: D = 4
    eps, max_iter = 0.1, 20

    k1, k2 = jax.random.split(key)

    # synthetic self.particles.data passed through an identity RM map -> x, w_x
    x = jax.random.normal(k1, (N, P1, D), jnp.float32)
    x = x / jnp.linalg.norm(x, axis=-1, keepdims=True)           # unit quaternions
    w_x = jnp.full((N, P1), 1.0 / P1, jnp.float32)

    # forward() inputs: y, w_y
    y = jax.random.normal(k2, (N, P2, D), jnp.float32)
    y = y / jnp.linalg.norm(y, axis=-1, keepdims=True)
    w_y = jnp.full((N, P2), 1.0 / P2, jnp.float32)
    edges = None  # TODO(synk): edges only feed the external RM_map graph remapping

    out = sinkhorn_eval(x, w_x, y, w_y, eps=eps, max_iter=max_iter)
    jax.block_until_ready(out)
    assert out.shape == () and bool(jnp.isfinite(out))
    print("KERNEL_OK")
</pallas_src>

<mosaic_0001>
module attributes {stable_mosaic.version = 11 : i64} {
  func.func @sinkhorn_kernel(%arg0: i32, %arg1: memref<2x4x128xf32, #tpu.memory_space<vmem>>, %arg2: memref<2x4x128xf32, #tpu.memory_space<vmem>>, %arg3: memref<2x1x128xf32, #tpu.memory_space<vmem>>, %arg4: memref<2x1x128xf32, #tpu.memory_space<vmem>>, %arg5: memref<1x1x2xf32, #tpu.memory_space<vmem>>) attributes {dimension_semantics = [#tpu.dimension_semantics<parallel>], iteration_bounds = array<i64: 2>, scalar_prefetch = 0 : i64, scratch_operands = 0 : i64, tpu.core_type = #tpu.core_type<tc>, window_params = [{transform_indices = @transform_0, window_bounds = array<i64: 2, 4, 128>}, {transform_indices = @transform_1, window_bounds = array<i64: 2, 4, 128>}, {transform_indices = @transform_2, window_bounds = array<i64: 2, 1, 128>}, {transform_indices = @transform_3, window_bounds = array<i64: 2, 1, 128>}, {transform_indices = @transform_4, window_bounds = array<i64: 1, 1, 2>}]} {
    %c0 = arith.constant 0 : index
    %c0_0 = arith.constant 0 : index
    %c0_1 = arith.constant 0 : index
    %0 = vector.load %arg1[%c0, %c0_0, %c0_1] : memref<2x4x128xf32, #tpu.memory_space<vmem>>, vector<2x4x128xf32>
    %c0_2 = arith.constant 0 : index
    %c0_3 = arith.constant 0 : index
    %c0_4 = arith.constant 0 : index
    %1 = vector.load %arg2[%c0_2, %c0_3, %c0_4] : memref<2x4x128xf32, #tpu.memory_space<vmem>>, vector<2x4x128xf32>
    %c0_5 = arith.constant 0 : index
    %c0_6 = arith.constant 0 : index
    %c0_7 = arith.constant 0 : index
    %2 = vector.load %arg3[%c0_5, %c0_6, %c0_7] : memref<2x1x128xf32, #tpu.memory_space<vmem>>, vector<2x1x128xf32>
    %c0_8 = arith.constant 0 : index
    %c0_9 = arith.constant 0 : index
    %c0_10 = arith.constant 0 : index
    %3 = vector.load %arg4[%c0_8, %c0_9, %c0_10] : memref<2x1x128xf32, #tpu.memory_space<vmem>>, vector<2x1x128xf32>
    %cst = arith.constant 1.000000e+00 : f32
    %cst_11 = arith.constant 1.000000e-01 : f32
    %4 = arith.divf %cst, %cst_11 : f32
    %cst_12 = arith.constant dense<0.000000e+00> : vector<2x128x128xf32>
    %5 = tpu.matmul %0, %1, %cst_12 {dimension_numbers = #tpu.dot_dimension_numbers<[1], [1], [2], [2], [0, 0, 0, 2, 1, 2], [0], [0]>} : vector<2x4x128xf32>, vector<2x4x128xf32>, vector<2x128x128xf32> -> vector<2x128x128xf32>
    %6 = math.absf %5 : vector<2x128x128xf32>
    %cst_13 = arith.constant 0.000000e+00 : f32
    %cst_14 = arith.constant 0.99999988 : f32
    %7 = vector.broadcast %cst_13 : f32 to vector<2x128x128xf32>
    %8 = arith.maximumf %7, %6 : vector<2x128x128xf32>
    %9 = vector.broadcast %cst_14 : f32 to vector<2x128x128xf32>
    %10 = arith.minimumf %9, %8 : vector<2x128x128xf32>
    %cst_15 = arith.constant 2.000000e+00 : f32
    %11 = arith.mulf %cst_15, %4 : f32
    %cst_16 = arith.constant -0.0012624911 : f32
    %12 = vector.broadcast %cst_16 : f32 to vector<2x128x128xf32>
    %13 = arith.mulf %12, %10 : vector<2x128x128xf32>
    %cst_17 = arith.constant 6.670090e-03 : f32
    %14 = vector.broadcast %cst_17 : f32 to vector<2x128x128xf32>
    %15 = arith.addf %13, %14 : vector<2x128x128xf32>
    %16 = arith.mulf %15, %10 : vector<2x128x128xf32>
    %cst_18 = arith.constant -0.0170881264 : f32
    %17 = vector.broadcast %cst_18 : f32 to vector<2x128x128xf32>
    %18 = arith.addf %16, %17 : vector<2x128x128xf32>
    %19 = arith.mulf %18, %10 : vector<2x128x128xf32>
    %cst_19 = arith.constant 0.0308918804 : f32
    %20 = vector.broadcast %cst_19 : f32 to vector<2x128x128xf32>
    %21 = arith.addf %19, %20 : vector<2x128x128xf32>
    %22 = arith.mulf %21, %10 : vector<2x128x128xf32>
    %cst_20 = arith.constant -0.0501743034 : f32
    %23 = vector.broadcast %cst_20 : f32 to vector<2x128x128xf32>
    %24 = arith.addf %22, %23 : vector<2x128x128xf32>
    %25 = arith.mulf %24, %10 : vector<2x128x128xf32>
    %cst_21 = arith.constant 0.0889789909 : f32
    %26 = vector.broadcast %cst_21 : f32 to vector<2x128x128xf32>
    %27 = arith.addf %25, %26 : vector<2x128x128xf32>
    %28 = arith.mulf %27, %10 : vector<2x128x128xf32>
    %cst_22 = arith.constant -0.214598805 : f32
    %29 = vector.broadcast %cst_22 : f32 to vector<2x128x128xf32>
    %30 = arith.addf %28, %29 : vector<2x128x128xf32>
    %31 = arith.mulf %30, %10 : vector<2x128x128xf32>
    %cst_23 = arith.constant 1.57079625 : f32
    %32 = vector.broadcast %cst_23 : f32 to vector<2x128x128xf32>
    %33 = arith.addf %31, %32 : vector<2x128x128xf32>
    %cst_24 = arith.constant 1.000000e+00 : f32
    %34 = vector.broadcast %cst_24 : f32 to vector<2x128x128xf32>
    %35 = arith.subf %34, %10 : vector<2x128x128xf32>
    %cst_25 = arith.constant 0.000000e+00 : f32
    %36 = vector.broadcast %cst_25 : f32 to vector<2x128x128xf32>
    %37 = arith.maximumf %35, %36 : vector<2x128x128xf32>
    %38 = math.sqrt %37 : vector<2x128x128xf32>
    %39 = arith.mulf %38, %33 : vector<2x128x128xf32>
    %40 = vector.broadcast %11 : f32 to vector<2x128x128xf32>
    %41 = arith.mulf %40, %39 : vector<2x128x128xf32>
    %cst_26 = arith.constant 1.000000e-30 : f32
    %42 = vector.broadcast %cst_26 : f32 to vector<2x1x128xf32>
    %43 = arith.maximumf %2, %42 : vector<2x1x128xf32>
    %44 = math.log %43 : vector<2x1x128xf32>
    %cst_27 = arith.constant 1.000000e-30 : f32
    %45 = vector.broadcast %cst_27 : f32 to vector<2x1x128xf32>
    %46 = arith.maximumf %3, %45 : vector<2x1x128xf32>
    %47 = math.log %46 : vector<2x1x128xf32>
    %cst_28 = arith.constant 0.000000e+00 : f32
    %48 = vector.broadcast %cst_28 : f32 to vector<2x128x128xf32>
    %49 = arith.subf %48, %41 : vector<2x128x128xf32>
    %50 = math.exp %49 : vector<2x128x128xf32>
    %cst_29 = arith.constant 0.000000e+00 : f32
    %51 = vector.broadcast %cst_29 : f32 to vector<2x1x128xf32>
    %cst_30 = arith.constant 0.000000e+00 : f32
    %52 = vector.broadcast %cst_30 : f32 to vector<2x1x128xf32>
    %cst_31 = arith.constant 1.000000e-01 : f32
    %c0_i32 = arith.constant 0 : i32
    %53 = vector.broadcast %4 : f32 to vector<2x1x128xf32>
    %54 = arith.mulf %51, %53 : vector<2x1x128xf32>
    %55 = arith.addf %54, %44 : vector<2x1x128xf32>
    %cst_32 = arith.constant dense<0xFF800000> : vector<2x1xf32>
    %56 = vector.multi_reduction <maximumf>, %55, %cst_32 [2] : vector<2x1x128xf32> to vector<2x1xf32>
    %57 = vector.shape_cast %56 : vector<2x1xf32> to vector<2x1x1xf32>
    %58 = vector.broadcast %57 : vector<2x1x1xf32> to vector<2x1x128xf32>
    %59 = arith.subf %55, %58 : vector<2x1x128xf32>
    %60 = math.exp %59 : vector<2x1x128xf32>
    %cst_33 = arith.constant dense<0.000000e+00> : vector<2x1x128xf32>
    %61 = tpu.matmul %60, %50, %cst_33 {dimension_numbers = #tpu.dot_dimension_numbers<[2], [1], [1], [2], [0, 0, 0, 1, 1, 2], [0], [0]>} : vector<2x1x128xf32>, vector<2x128x128xf32>, vector<2x1x128xf32> -> vector<2x1x128xf32>
    %cst_34 = arith.constant 0.000000e+00 : f32
    %62 = arith.subf %cst_34, %cst_31 : f32
    %63 = math.log %61 : vector<2x1x128xf32>
    %64 = vector.broadcast %57 : vector<2x1x1xf32> to vector<2x1x128xf32>
    %65 = arith.addf %63, %64 : vector<2x1x128xf32>
    %66 = vector.broadcast %62 : f32 to vector<2x1x128xf32>
    %67 = arith.mulf %66, %65 : vector<2x1x128xf32>
    %68 = vector.broadcast %4 : f32 to vector<2x1x128xf32>
    %69 = arith.mulf %67, %68 : vector<2x1x128xf32>
    %70 = arith.addf %69, %47 : vector<2x1x128xf32>
    %cst_35 = arith.constant dense<0xFF800000> : vector<2x1xf32>
    %71 = vector.multi_reduction <maximumf>, %70, %cst_35 [2] : vector<2x1x128xf32> to vector<2x1xf32>
    %72 = vector.shape_cast %71 : vector<2x1xf32> to vector<2x1x1xf32>
    %73 = vector.broadcast %72 : vector<2x1x1xf32> to vector<2x1x128xf32>
    %74 = arith.subf %70, %73 : vector<2x1x128xf32>
    %75 = math.exp %74 : vector<2x1x128xf32>
    %cst_36 = arith.constant dense<0.000000e+00> : vector<2x1x128xf32>
    %76 = tpu.matmul %75, %50, %cst_36 {dimension_numbers = #tpu.dot_dimension_numbers<[2], [2], [1], [1], [0, 0, 0, 1, 1, 1], [0], [0]>} : vector<2x1x128xf32>, vector<2x128x128xf32>, vector<2x1x128xf32> -> vector<2x1x128xf32>
    %cst_37 = arith.constant 0.000000e+00 : f32
    %77 = arith.subf %cst_37, %cst_31 : f32
    %78 = math.log %76 : vector<2x1x128xf32>
    %79 = vector.broadcast %72 : vector<2x1x1xf32> to vector<2x1x128xf32>
    %80 = arith.addf %78, %79 : vector<2x1x128xf32>
    %81 = vector.broadcast %77 : f32 to vector<2x1x128xf32>
    %82 = arith.mulf %81, %80 : vector<2x1x128xf32>
    %c1_i32 = arith.constant 1 : i32
    %83 = vector.broadcast %4 : f32 to vector<2x1x128xf32>
    %84 = arith.mulf %82, %83 : vector<2x1x128xf32>
    %85 = arith.addf %84, %44 : vector<2x1x128xf32>
    %cst_38 = arith.constant dense<0xFF800000> : vector<2x1xf32>
    %86 = vector.multi_reduction <maximumf>, %85, %cst_38 [2] : vector<2x1x128xf32> to vector<2x1xf32>
    %87 = vector.shape_cast %86 : vector<2x1xf32> to vector<2x1x1xf32>
    %88 = vector.broadcast %87 : vector<2x1x1xf32> to vector<2x1x128xf32>
    %89 = arith.subf %85, %88 : vector<2x1x128xf32>
    %90 = math.exp %89 : vector<2x1x128xf32>
    %cst_39 = arith.constant dense<0.000000e+00> : vector<2x1x128xf32>
    %91 = tpu.matmul %90, %50, %cst_39 {dimension_numbers = #tpu.dot_dimension_numbers<[2], [1], [1], [2], [0, 0, 0, 1, 1, 2], [0], [0]>} : vector<2x1x128xf32>, vector<2x128x128xf32>, vector<2x1x128xf32> -> vector<2x1x128xf32>
    %cst_40 = arith.constant 0.000000e+00 : f32
    %92 = arith.subf %cst_40, %cst_31 : f32
    %93 = math.log %91 : vector<2x1x128xf32>
    %94 = vector.broadcast %87 : vector<2x1x1xf32> to vector<2x1x128xf32>
    %95 = arith.addf %93, %94 : vector<2x1x128xf32>
    %96 = vector.broadcast %92 : f32 to vector<2x1x128xf32>
    %97 = arith.mulf %96, %95 : vector<2x1x128xf32>
    %98 = vector.broadcast %4 : f32 to vector<2x1x128xf32>
    %99 = arith.mulf %97, %98 : vector<2x1x128xf32>
    %100 = arith.addf %99, %47 : vector<2x1x128xf32>
    %cst_41 = arith.constant dense<0xFF800000> : vector<2x1xf32>
    %101 = vector.multi_reduction <maximumf>, %100, %cst_41 [2] : vector<2x1x128xf32> to vector<2x1xf32>
    %102 = vector.shape_cast %101 : vector<2x1xf32> to vector<2x1x1xf32>
    %103 = vector.broadcast %102 : vector<2x1x1xf32> to vector<2x1x128xf32>
    %104 = arith.subf %100, %103 : vector<2x1x128xf32>
    %105 = math.exp %104 : vector<2x1x128xf32>
    %cst_42 = arith.constant dense<0.000000e+00> : vector<2x1x128xf32>
    %106 = tpu.matmul %105, %50, %cst_42 {dimension_numbers = #tpu.dot_dimension_numbers<[2], [2], [1], [1], [0, 0, 0, 1, 1, 1], [0], [0]>} : vector<2x1x128xf32>, vector<2x128x128xf32>, vector<2x1x128xf32> -> vector<2x1x128xf32>
    %cst_43 = arith.constant 0.000000e+00 : f32
    %107 = arith.subf %cst_43, %cst_31 : f32
    %108 = math.log %106 : vector<2x1x128xf32>
    %109 = vector.broadcast %102 : vector<2x1x1xf32> to vector<2x1x128xf32>
    %110 = arith.addf %108, %109 : vector<2x1x128xf32>
    %111 = vector.broadcast %107 : f32 to vector<2x1x128xf32>
    %112 = arith.mulf %111, %110 : vector<2x1x128xf32>
    %c2_i32 = arith.constant 2 : i32
    %113 = vector.broadcast %4 : f32 to vector<2x1x128xf32>
    %114 = arith.mulf %112, %113 : vector<2x1x128xf32>
    %115 = arith.addf %114, %44 : vector<2x1x128xf32>
    %cst_44 = arith.constant dense<0xFF800000> : vector<2x1xf32>
    %116 = vector.multi_reduction <maximumf>, %115, %cst_44 [2] : vector<2x1x128xf32> to vector<2x1xf32>
    %117 = vector.shape_cast %116 : vector<2x1xf32> to vector<2x1x1xf32>
    %118 = vector.broadcast %117 : vector<2x1x1xf32> to vector<2x1x128xf32>
    %119 = arith.subf %115, %118 : vector<2x1x128xf32>
    %120 = math.exp %119 : vector<2x1x128xf32>
    %cst_45 = arith.constant dense<0.000000e+00> : vector<2x1x128xf32>
    %121 = tpu.matmul %120, %50, %cst_45 {dimension_numbers = #tpu.dot_dimension_numbers<[2], [1], [1], [2], [0, 0, 0, 1, 1, 2], [0], [0]>} : vector<2x1x128xf32>, vector<2x128x128xf32>, vector<2x1x128xf32> -> vector<2x1x128xf32>
    %cst_46 = arith.constant 0.000000e+00 : f32
    %122 = arith.subf %cst_46, %cst_31 : f32
    %123 = math.log %121 : vector<2x1x128xf32>
    %124 = vector.broadcast %117 : vector<2x1x1xf32> to vector<2x1x128xf32>
    %125 = arith.addf %123, %124 : vector<2x1x128xf32>
    %126 = vector.broadcast %122 : f32 to vector<2x1x128xf32>
    %127 = arith.mulf %126, %125 : vector<2x1x128xf32>
    %128 = vector.broadcast %4 : f32 to vector<2x1x128xf32>
    %129 = arith.mulf %127, %128 : vector<2x1x128xf32>
    %130 = arith.addf %129, %47 : vector<2x1x128xf32>
    %cst_47 = arith.constant dense<0xFF800000> : vector<2x1xf32>
    %131 = vector.multi_reduction <maximumf>, %130, %cst_47 [2] : vector<2x1x128xf32> to vector<2x1xf32>
    %132 = vector.shape_cast %131 : vector<2x1xf32> to vector<2x1x1xf32>
    %133 = vector.broadcast %132 : vector<2x1x1xf32> to vector<2x1x128xf32>
    %134 = arith.subf %130, %133 : vector<2x1x128xf32>
    %135 = math.exp %134 : vector<2x1x128xf32>
    %cst_48 = arith.constant dense<0.000000e+00> : vector<2x1x128xf32>
    %136 = tpu.matmul %135, %50, %cst_48 {dimension_numbers = #tpu.dot_dimension_numbers<[2], [2], [1], [1], [0, 0, 0, 1, 1, 1], [0], [0]>} : vector<2x1x128xf32>, vector<2x128x128xf32>, vector<2x1x128xf32> -> vector<2x1x128xf32>
    %cst_49 = arith.constant 0.000000e+00 : f32
    %137 = arith.subf %cst_49, %cst_31 : f32
    %138 = math.log %136 : vector<2x1x128xf32>
    %139 = vector.broadcast %132 : vector<2x1x1xf32> to vector<2x1x128xf32>
    %140 = arith.addf %138, %139 : vector<2x1x128xf32>
    %141 = vector.broadcast %137 : f32 to vector<2x1x128xf32>
    %142 = arith.mulf %141, %140 : vector<2x1x128xf32>
    %c3_i32 = arith.constant 3 : i32
    %143 = vector.broadcast %4 : f32 to vector<2x1x128xf32>
    %144 = arith.mulf %142, %143 : vector<2x1x128xf32>
    %145 = arith.addf %144, %44 : vector<2x1x128xf32>
    %cst_50 = arith.constant dense<0xFF800000> : vector<2x1xf32>
    %146 = vector.multi_reduction <maximumf>, %145, %cst_50 [2] : vector<2x1x128xf32> to vector<2x1xf32>
    %147 = vector.shape_cast %146 : vector<2x1xf32> to vector<2x1x1xf32>
    %148 = vector.broadcast %147 : vector<2x1x1xf32> to vector<2x1x128xf32>
    %149 = arith.subf %145, %148 : vector<2x1x128xf32>
    %150 = math.exp %149 : vector<2x1x128xf32>
    %cst_51 = arith.constant dense<0.000000e+00> : vector<2x1x128xf32>
    %151 = tpu.matmul %150, %50, %cst_51 {dimension_numbers = #tpu.dot_dimension_numbers<[2], [1], [1], [2], [0, 0, 0, 1, 1, 2], [0], [0]>} : vector<2x1x128xf32>, vector<2x128x128xf32>, vector<2x1x128xf32> -> vector<2x1x128xf32>
    %cst_52 = arith.constant 0.000000e+00 : f32
    %152 = arith.subf %cst_52, %cst_31 : f32
    %153 = math.log %151 : vector<2x1x128xf32>
    %154 = vector.broadcast %147 : vector<2x1x1xf32> to vector<2x1x128xf32>
    %155 = arith.addf %153, %154 : vector<2x1x128xf32>
    %156 = vector.broadcast %152 : f32 to vector<2x1x128xf32>
    %157 = arith.mulf %156, %155 : vector<2x1x128xf32>
    %158 = vector.broadcast %4 : f32 to vector<2x1x128xf32>
    %159 = arith.mulf %157, %158 : vector<2x1x128xf32>
    %160 = arith.addf %159, %47 : vector<2x1x128xf32>
    %cst_53 = arith.constant dense<0xFF800000> : vector<2x1xf32>
    %161 = vector.multi_reduction <maximumf>, %160, %cst_53 [2] : vector<2x1x128xf32> to vector<2x1xf32>
    %162 = vector.shape_cast %161 : vector<2x1xf32> to vector<2x1x1xf32>
    %163 = vector.broadcast %162 : vector<2x1x1xf32> to vector<2x1x128xf32>
    %164 = arith.subf %160, %163 : vector<2x1x128xf32>
    %165 = math.exp %164 : vector<2x1x128xf32>
    %cst_54 = arith.constant dense<0.000000e+00> : vector<2x1x128xf32>
    %166 = tpu.matmul %165, %50, %cst_54 {dimension_numbers = #tpu.dot_dimension_numbers<[2], [2], [1], [1], [0, 0, 0, 1, 1, 1], [0], [0]>} : vector<2x1x128xf32>, vector<2x128x128xf32>, vector<2x1x128xf32> -> vector<2x1x128xf32>
    %cst_55 = arith.constant 0.000000e+00 : f32
    %167 = arith.subf %cst_55, %cst_31 : f32
    %168 = math.log %166 : vector<2x1x128xf32>
    %169 = vector.broadcast %162 : vector<2x1x1xf32> to vector<2x1x128xf32>
    %170 = arith.addf %168, %169 : vector<2x1x128xf32>
    %171 = vector.broadcast %167 : f32 to vector<2x1x128xf32>
    %172 = arith.mulf %171, %170 : vector<2x1x128xf32>
    %c4_i32 = arith.constant 4 : i32
    %173 = vector.broadcast %4 : f32 to vector<2x1x128xf32>
    %174 = arith.mulf %172, %173 : vector<2x1x128xf32>
    %175 = arith.addf %174, %44 : vector<2x1x128xf32>
    %cst_56 = arith.constant dense<0xFF800000> : vector<2x1xf32>
    %176 = vector.multi_reduction <maximumf>, %175, %cst_56 [2] : vector<2x1x128xf32> to vector<2x1xf32>
    %177 = vector.shape_cast %176 : vector<2x1xf32> to vector<2x1x1xf32>
    %178 = vector.broadcast %177 : vector<2x1x1xf32> to vector<2x1x128xf32>
    %179 = arith.subf %175, %178 : vector<2x1x128xf32>
    %180 = math.exp %179 : vector<2x1x128xf32>
    %cst_57 = arith.constant dense<0.000000e+00> : vector<2x1x128xf32>
    %181 = tpu.matmul %180, %50, %cst_57 {dimension_numbers = #tpu.dot_dimension_numbers<[2], [1], [1], [2], [0, 0, 0, 1, 1, 2], [0], [0]>} : vector<2x1x128xf32>, vector<2x128x128xf32>, vector<2x1x128xf32> -> vector<2x1x128xf32>
    %cst_58 = arith.constant 0.000000e+00 : f32
    %182 = arith.subf %cst_58, %cst_31 : f32
    %183 = math.log %181 : vector<2x1x128xf32>
    %184 = vector.broadcast %177 : vector<2x1x1xf32> to vector<2x1x128xf32>
    %185 = arith.addf %183, %184 : vector<2x1x128xf32>
    %186 = vector.broadcast %182 : f32 to vector<2x1x128xf32>
    %187 = arith.mulf %186, %185 : vector<2x1x128xf32>
    %188 = vector.broadcast %4 : f32 to vector<2x1x128xf32>
    %189 = arith.mulf %187, %188 : vector<2x1x128xf32>
    %190 = arith.addf %189, %47 : vector<2x1x128xf32>
    %cst_59 = arith.constant dense<0xFF800000> : vector<2x1xf32>
    %191 = vector.multi_reduction <maximumf>, %190, %cst_59 [2] : vector<2x1x128xf32> to vector<2x1xf32>
    %192 = vector.shape_cast %191 : vector<2x1xf32> to vector<2x1x1xf32>
    %193 = vector.broadcast %192 : vector<2x1x1xf32> to vector<2x1x128xf32>
    %194 = arith.subf %190, %193 : vector<2x1x128xf32>
    %195 = math.exp %194 : vector<2x1x128xf32>
    %cst_60 = arith.constant dense<0.000000e+00> : vector<2x1x128xf32>
    %196 = tpu.matmul %195, %50, %cst_60 {dimension_numbers = #tpu.dot_dimension_numbers<[2], [2], [1], [1], [0, 0, 0, 1, 1, 1], [0], [0]>} : vector<2x1x128xf32>, vector<2x128x128xf32>, vector<2x1x128xf32> -> vector<2x1x128xf32>
    %cst_61 = arith.constant 0.000000e+00 : f32
    %197 = arith.subf %cst_61, %cst_31 : f32
    %198 = math.log %196 : vector<2x1x128xf32>
    %199 = vector.broadcast %192 : vector<2x1x1xf32> to vector<2x1x128xf32>
    %200 = arith.addf %198, %199 : vector<2x1x128xf32>
    %201 = vector.broadcast %197 : f32 to vector<2x1x128xf32>
    %202 = arith.mulf %201, %200 : vector<2x1x128xf32>
    %c5_i32 = arith.constant 5 : i32
    %203 = vector.broadcast %4 : f32 to vector<2x1x128xf32>
    %204 = arith.mulf %202, %203 : vector<2x1x128xf32>
    %205 = arith.addf %204, %44 : vector<2x1x128xf32>
    %cst_62 = arith.constant dense<0xFF800000> : vector<2x1xf32>
    %206 = vector.multi_reduction <maximumf>, %205, %cst_62 [2] : vector<2x1x128xf32> to vector<2x1xf32>
    %207 = vector.shape_cast %206 : vector<2x1xf32> to vector<2x1x1xf32>
    %208 = vector.broadcast %207 : vector<2x1x1xf32> to vector<2x1x128xf32>
    %209 = arith.subf %205, %208 : vector<2x1x128xf32>
    %210 = math.exp %209 : vector<2x1x128xf32>
    %cst_63 = arith.constant dense<0.000000e+00> : vector<2x1x128xf32>
    %211 = tpu.matmul %210, %50, %cst_63 {dimension_numbers = #tpu.dot_dimension_numbers<[2], [1], [1], [2], [0, 0, 0, 1, 1, 2], [0], [0]>} : vector<2x1x128xf32>, vector<2x128x128xf32>, vector<2x1x128xf32> -> vector<2x1x128xf32>
    %cst_64 = arith.constant 0.000000e+00 : f32
    %212 = arith.subf %cst_64, %cst_31 : f32
    %213 = math.log %211 : vector<2x1x128xf32>
    %214 = vector.broadcast %207 : vector<2x1x1xf32> to vector<2x1x128xf32>
    %215 = arith.addf %213, %214 : vector<2x1x128xf32>
    %216 = vector.broadcast %212 : f32 to vector<2x1x128xf32>
    %217 = arith.mulf %216, %215 : vector<2x1x128xf32>
    %218 = vector.broadcast %4 : f32 to vector<2x1x128xf32>
    %219 = arith.mulf %217, %218 : vector<2x1x128xf32>
    %220 = arith.addf %219, %47 : vector<2x1x128xf32>
    %cst_65 = arith.constant dense<0xFF800000> : vector<2x1xf32>
    %221 = vector.multi_reduction <maximumf>, %220, %cst_65 [2] : vector<2x1x128xf32> to vector<2x1xf32>
    %222 = vector.shape_cast %221 : vector<2x1xf32> to vector<2x1x1xf32>
    %223 = vector.broadcast %222 : vector<2x1x1xf32> to vector<2x1x128xf32>
    %224 = arith.subf %220, %223 : vector<2x1x128xf32>
    %225 = math.exp %224 : vector<2x1x128xf32>
    %cst_66 = arith.constant dense<0.000000e+00> : vector<2x1x128xf32>
    %226 = tpu.matmul %225, %50, %cst_66 {dimension_numbers = #tpu.dot_dimension_numbers<[2], [2], [1], [1], [0, 0, 0, 1, 1, 1], [0], [0]>} : vector<2x1x128xf32>, vector<2x128x128xf32>, vector<2x1x128xf32> -> vector<2x1x128xf32>
    %cst_67 = arith.constant 0.000000e+00 : f32
    %227 = arith.subf %cst_67, %cst_31 : f32
    %228 = math.log %226 : vector<2x1x128xf32>
    %229 = vector.broadcast %222 : vector<2x1x1xf32> to vector<2x1x128xf32>
    %230 = arith.addf %228, %229 : vector<2x1x128xf32>
    %231 = vector.broadcast %227 : f32 to vector<2x1x128xf32>
    %232 = arith.mulf %231, %230 : vector<2x1x128xf32>
    %c6_i32 = arith.constant 6 : i32
    %233 = vector.broadcast %4 : f32 to vector<2x1x128xf32>
    %234 = arith.mulf %232, %233 : vector<2x1x128xf32>
    %235 = arith.addf %234, %44 : vector<2x1x128xf32>
    %cst_68 = arith.constant dense<0xFF800000> : vector<2x1xf32>
    %236 = vector.multi_reduction <maximumf>, %235, %cst_68 [2] : vector<2x1x128xf32> to vector<2x1xf32>
    %237 = vector.shape_cast %236 : vector<2x1xf32> to vector<2x1x1xf32>
    %238 = vector.broadcast %237 : vector<2x1x1xf32> to vector<2x1x128xf32>
    %239 = arith.subf %235, %238 : vector<2x1x128xf32>
    %240 = math.exp %239 : vector<2x1x128xf32>
    %cst_69 = arith.constant dense<0.000000e+00> : vector<2x1x128xf32>
    %241 = tpu.matmul %240, %50, %cst_69 {dimension_numbers = #tpu.dot_dimension_numbers<[2], [1], [1], [2], [0, 0, 0, 1, 1, 2], [0], [0]>} : vector<2x1x128xf32>, vector<2x128x128xf32>, vector<2x1x128xf32> -> vector<2x1x128xf32>
    %cst_70 = arith.constant 0.000000e+00 : f32
    %242 = arith.subf %cst_70, %cst_31 : f32
    %243 = math.log %241 : vector<2x1x128xf32>
    %244 = vector.broadcast %237 : vector<2x1x1xf32> to vector<2x1x128xf32>
    %245 = arith.addf %243, %244 : vector<2x1x128xf32>
    %246 = vector.broadcast %242 : f32 to vector<2x1x128xf32>
    %247 = arith.mulf %246, %245 : vector<2x1x128xf32>
    %248 = vector.broadcast %4 : f32 to vector<2x1x128xf32>
    %249 = arith.mulf %247, %248 : vector<2x1x128xf32>
    %250 = arith.addf %249, %47 : vector<2x1x128xf32>
    %cst_71 = arith.constant dense<0xFF800000> : vector<2x1xf32>
    %251 = vector.multi_reduction <maximumf>, %250, %cst_71 [2] : vector<2x1x128xf32> to vector<2x1xf32>
    %252 = vector.shape_cast %251 : vector<2x1xf32> to vector<2x1x1xf32>
    %253 = vector.broadcast %252 : vector<2x1x1xf32> to vector<2x1x128xf32>
    %254 = arith.subf %250, %253 : vector<2x1x128xf32>
    %255 = math.exp %254 : vector<2x1x128xf32>
    %cst_72 = arith.constant dense<0.000000e+00> : vector<2x1x128xf32>
    %256 = tpu.matmul %255, %50, %cst_72 {dimension_numbers = #tpu.dot_dimension_numbers<[2], [2], [1], [1], [0, 0, 0, 1, 1, 1], [0], [0]>} : vector<2x1x128xf32>, vector<2x128x128xf32>, vector<2x1x128xf32> -> vector<2x1x128xf32>
    %cst_73 = arith.constant 0.000000e+00 : f32
    %257 = arith.subf %cst_73, %cst_31 : f32
    %258 = math.log %256 : vector<2x1x128xf32>
    %259 = vector.broadcast %252 : vector<2x1x1xf32> to vector<2x1x128xf32>
    %260 = arith.addf %258, %259 : vector<2x1x128xf32>
    %261 = vector.broadcast %257 : f32 to vector<2x1x128xf32>
    %262 = arith.mulf %261, %260 : vector<2x1x128xf32>
    %c7_i32 = arith.constant 7 : i32
    %263 = vector.broadcast %4 : f32 to vector<2x1x128xf32>
    %264 = arith.mulf %262, %263 : vector<2x1x128xf32>
    %265 = arith.addf %264, %44 : vector<2x1x128xf32>
    %cst_74 = arith.constant dense<0xFF800000> : vector<2x1xf32>
    %266 = vector.multi_reduction <maximumf>, %265, %cst_74 [2] : vector<2x1x128xf32> to vector<2x1xf32>
    %267 = vector.shape_cast %266 : vector<2x1xf32> to vector<2x1x1xf32>
    %268 = vector.broadcast %267 : vector<2x1x1xf32> to vector<2x1x128xf32>
    %269 = arith.subf %265, %268 : vector<2x1x128xf32>
    %270 = math.exp %269 : vector<2x1x128xf32>
    %cst_75 = arith.constant dense<0.000000e+00> : vector<2x1x128xf32>
    %271 = tpu.matmul %270, %50, %cst_75 {dimension_numbers = #tpu.dot_dimension_numbers<[2], [1], [1], [2], [0, 0, 0, 1, 1, 2], [0], [0]>} : vector<2x1x128xf32>, vector<2x128x128xf32>, vector<2x1x128xf32> -> vector<2x1x128xf32>
    %cst_76 = arith.constant 0.000000e+00 : f32
    %272 = arith.subf %cst_76, %cst_31 : f32
    %273 = math.log %271 : vector<2x1x128xf32>
    %274 = vector.broadcast %267 : vector<2x1x1xf32> to vector<2x1x128xf32>
    %275 = arith.addf %273, %274 : vector<2x1x128xf32>
    %276 = vector.broadcast %272 : f32 to vector<2x1x128xf32>
    %277 = arith.mulf %276, %275 : vector<2x1x128xf32>
    %278 = vector.broadcast %4 : f32 to vector<2x1x128xf32>
    %279 = arith.mulf %277, %278 : vector<2x1x128xf32>
    %280 = arith.addf %279, %47 : vector<2x1x128xf32>
    %cst_77 = arith.constant dense<0xFF800000> : vector<2x1xf32>
    %281 = vector.multi_reduction <maximumf>, %280, %cst_77 [2] : vector<2x1x128xf32> to vector<2x1xf32>
    %282 = vector.shape_cast %281 : vector<2x1xf32> to vector<2x1x1xf32>
    %283 = vector.broadcast %282 : vector<2x1x1xf32> to vector<2x1x128xf32>
    %284 = arith.subf %280, %283 : vector<2x1x128xf32>
    %285 = math.exp %284 : vector<2x1x128xf32>
    %cst_78 = arith.constant dense<0.000000e+00> : vector<2x1x128xf32>
    %286 = tpu.matmul %285, %50, %cst_78 {dimension_numbers = #tpu.dot_dimension_numbers<[2], [2], [1], [1], [0, 0, 0, 1, 1, 1], [0], [0]>} : vector<2x1x128xf32>, vector<2x128x128xf32>, vector<2x1x128xf32> -> vector<2x1x128xf32>
    %cst_79 = arith.constant 0.000000e+00 : f32
    %287 = arith.subf %cst_79, %cst_31 : f32
    %288 = math.log %286 : vector<2x1x128xf32>
    %289 = vector.broadcast %282 : vector<2x1x1xf32> to vector<2x1x128xf32>
    %290 = arith.addf %288, %289 : vector<2x1x128xf32>
    %291 = vector.broadcast %287 : f32 to vector<2x1x128xf32>
    %292 = arith.mulf %291, %290 : vector<2x1x128xf32>
    %c8_i32 = arith.constant 8 : i32
    %293 = vector.broadcast %4 : f32 to vector<2x1x128xf32>
    %294 = arith.mulf %292, %293 : vector<2x1x128xf32>
    %295 = arith.addf %294, %44 : vector<2x1x128xf32>
    %cst_80 = arith.constant dense<0xFF800000> : vector<2x1xf32>
    %296 = vector.multi_reduction <maximumf>, %295, %cst_80 [2] : vector<2x1x128xf32> to vector<2x1xf32>
    %297 = vector.shape_cast %296 : vector<2x1xf32> to vector<2x1x1xf32>
    %298 = vector.broadcast %297 : vector<2x1x1xf32> to vector<2x1x128xf32>
    %299 = arith.subf %295, %298 : vector<2x1x128xf32>
    %300 = math.exp %299 : vector<2x1x128xf32>
    %cst_81 = arith.constant dense<0.000000e+00> : vector<2x1x128xf32>
    %301 = tpu.matmul %300, %50, %cst_81 {dimension_numbers = #tpu.dot_dimension_numbers<[2], [1], [1], [2], [0, 0, 0, 1, 1, 2], [0], [0]>} : vector<2x1x128xf32>, vector<2x128x128xf32>, vector<2x1x128xf32> -> vector<2x1x128xf32>
    %cst_82 = arith.constant 0.000000e+00 : f32
    %302 = arith.subf %cst_82, %cst_31 : f32
    %303 = math.log %301 : vector<2x1x128xf32>
    %304 = vector.broadcast %297 : vector<2x1x1xf32> to vector<2x1x128xf32>
    %305 = arith.addf %303, %304 : vector<2x1x128xf32>
    %306 = vector.broadcast %302 : f32 to vector<2x1x128xf32>
    %307 = arith.mulf %306, %305 : vector<2x1x128xf32>
    %308 = vector.broadcast %4 : f32 to vector<2x1x128xf32>
    %309 = arith.mulf %307, %308 : vector<2x1x128xf32>
    %310 = arith.addf %309, %47 : vector<2x1x128xf32>
    %cst_83 = arith.constant dense<0xFF800000> : vector<2x1xf32>
    %311 = vector.multi_reduction <maximumf>, %310, %cst_83 [2] : vector<2x1x128xf32> to vector<2x1xf32>
    %312 = vector.shape_cast %311 : vector<2x1xf32> to vector<2x1x1xf32>
    %313 = vector.broadcast %312 : vector<2x1x1xf32> to vector<2x1x128xf32>
    %314 = arith.subf %310, %313 : vector<2x1x128xf32>
    %315 = math.exp %314 : vector<2x1x128xf32>
    %cst_84 = arith.constant dense<0.000000e+00> : vector<2x1x128xf32>
    %316 = tpu.matmul %315, %50, %cst_84 {dimension_numbers = #tpu.dot_dimension_numbers<[2], [2], [1], [1], [0, 0, 0, 1, 1, 1], [0], [0]>} : vector<2x1x128xf32>, vector<2x128x128xf32>, vector<2x1x128xf32> -> vector<2x1x128xf32>
    %cst_85 = arith.constant 0.000000e+00 : f32
    %317 = arith.subf %cst_85, %cst_31 : f32
    %318 = math.log %316 : vector<2x1x128xf32>
    %319 = vector.broadcast %312 : vector<2x1x1xf32> to vector<2x1x128xf32>
    %320 = arith.addf %318, %319 : vector<2x1x128xf32>
    %321 = vector.broadcast %317 : f32 to vector<2x1x128xf32>
    %322 = arith.mulf %321, %320 : vector<2x1x128xf32>
    %c9_i32 = arith.constant 9 : i32
    %323 = vector.broadcast %4 : f32 to vector<2x1x128xf32>
    %324 = arith.mulf %322, %323 : vector<2x1x128xf32>
    %325 = arith.addf %324, %44 : vector<2x1x128xf32>
    %cst_86 = arith.constant dense<0xFF800000> : vector<2x1xf32>
    %326 = vector.multi_reduction <maximumf>, %325, %cst_86 [2] : vector<2x1x128xf32> to vector<2x1xf32>
    %327 = vector.shape_cast %326 : vector<2x1xf32> to vector<2x1x1xf32>
    %328 = vector.broadcast %327 : vector<2x1x1xf32> to vector<2x1x128xf32>
    %329 = arith.subf %325, %328 : vector<2x1x128xf32>
    %330 = math.exp %329 : vector<2x1x128xf32>
    %cst_87 = arith.constant dense<0.000000e+00> : vector<2x1x128xf32>
    %331 = tpu.matmul %330, %50, %cst_87 {dimension_numbers = #tpu.dot_dimension_numbers<[2], [1], [1], [2], [0, 0, 0, 1, 1, 2], [0], [0]>} : vector<2x1x128xf32>, vector<2x128x128xf32>, vector<2x1x128xf32> -> vector<2x1x128xf32>
    %cst_88 = arith.constant 0.000000e+00 : f32
    %332 = arith.subf %cst_88, %cst_31 : f32
    %333 = math.log %331 : vector<2x1x128xf32>
    %334 = vector.broadcast %327 : vector<2x1x1xf32> to vector<2x1x128xf32>
    %335 = arith.addf %333, %334 : vector<2x1x128xf32>
    %336 = vector.broadcast %332 : f32 to vector<2x1x128xf32>
    %337 = arith.mulf %336, %335 : vector<2x1x128xf32>
    %338 = vector.broadcast %4 : f32 to vector<2x1x128xf32>
    %339 = arith.mulf %337, %338 : vector<2x1x128xf32>
    %340 = arith.addf %339, %47 : vector<2x1x128xf32>
    %cst_89 = arith.constant dense<0xFF800000> : vector<2x1xf32>
    %341 = vector.multi_reduction <maximumf>, %340, %cst_89 [2] : vector<2x1x128xf32> to vector<2x1xf32>
    %342 = vector.shape_cast %341 : vector<2x1xf32> to vector<2x1x1xf32>
    %343 = vector.broadcast %342 : vector<2x1x1xf32> to vector<2x1x128xf32>
    %344 = arith.subf %340, %343 : vector<2x1x128xf32>
    %345 = math.exp %344 : vector<2x1x128xf32>
    %cst_90 = arith.constant dense<0.000000e+00> : vector<2x1x128xf32>
    %346 = tpu.matmul %345, %50, %cst_90 {dimension_numbers = #tpu.dot_dimension_numbers<[2], [2], [1], [1], [0, 0, 0, 1, 1, 1], [0], [0]>} : vector<2x1x128xf32>, vector<2x128x128xf32>, vector<2x1x128xf32> -> vector<2x1x128xf32>
    %cst_91 = arith.constant 0.000000e+00 : f32
    %347 = arith.subf %cst_91, %cst_31 : f32
    %348 = math.log %346 : vector<2x1x128xf32>
    %349 = vector.broadcast %342 : vector<2x1x1xf32> to vector<2x1x128xf32>
    %350 = arith.addf %348, %349 : vector<2x1x128xf32>
    %351 = vector.broadcast %347 : f32 to vector<2x1x128xf32>
    %352 = arith.mulf %351, %350 : vector<2x1x128xf32>
    %c10_i32 = arith.constant 10 : i32
    %353 = vector.broadcast %4 : f32 to vector<2x1x128xf32>
    %354 = arith.mulf %352, %353 : vector<2x1x128xf32>
    %355 = arith.addf %354, %44 : vector<2x1x128xf32>
    %cst_92 = arith.constant dense<0xFF800000> : vector<2x1xf32>
    %356 = vector.multi_reduction <maximumf>, %355, %cst_92 [2] : vector<2x1x128xf32> to vector<2x1xf32>
    %357 = vector.shape_cast %356 : vector<2x1xf32> to vector<2x1x1xf32>
    %358 = vector.broadcast %357 : vector<2x1x1xf32> to vector<2x1x128xf32>
    %359 = arith.subf %355, %358 : vector<2x1x128xf32>
    %360 = math.exp %359 : vector<2x1x128xf32>
    %cst_93 = arith.constant dense<0.000000e+00> : vector<2x1x128xf32>
    %361 = tpu.matmul %360, %50, %cst_93 {dimension_numbers = #tpu.dot_dimension_numbers<[2], [1], [1], [2], [0, 0, 0, 1, 1, 2], [0], [0]>} : vector<2x1x128xf32>, vector<2x128x128xf32>, vector<2x1x128xf32> -> vector<2x1x128xf32>
    %cst_94 = arith.constant 0.000000e+00 : f32
    %362 = arith.subf %cst_94, %cst_31 : f32
    %363 = math.log %361 : vector<2x1x128xf32>
    %364 = vector.broadcast %357 : vector<2x1x1xf32> to vector<2x1x128xf32>
    %365 = arith.addf %363, %364 : vector<2x1x128xf32>
    %366 = vector.broadcast %362 : f32 to vector<2x1x128xf32>
    %367 = arith.mulf %366, %365 : vector<2x1x128xf32>
    %368 = vector.broadcast %4 : f32 to vector<2x1x128xf32>
    %369 = arith.mulf %367, %368 : vector<2x1x128xf32>
    %370 = arith.addf %369, %47 : vector<2x1x128xf32>
    %cst_95 = arith.constant dense<0xFF800000> : vector<2x1xf32>
    %371 = vector.multi_reduction <maximumf>, %370, %cst_95 [2] : vector<2x1x128xf32> to vector<2x1xf32>
    %372 = vector.shape_cast %371 : vector<2x1xf32> to vector<2x1x1xf32>
    %373 = vector.broadcast %372 : vector<2x1x1xf32> to vector<2x1x128xf32>
    %374 = arith.subf %370, %373 : vector<2x1x128xf32>
    %375 = math.exp %374 : vector<2x1x128xf32>
    %cst_96 = arith.constant dense<0.000000e+00> : vector<2x1x128xf32>
    %376 = tpu.matmul %375, %50, %cst_96 {dimension_numbers = #tpu.dot_dimension_numbers<[2], [2], [1], [1], [0, 0, 0, 1, 1, 1], [0], [0]>} : vector<2x1x128xf32>, vector<2x128x128xf32>, vector<2x1x128xf32> -> vector<2x1x128xf32>
    %cst_97 = arith.constant 0.000000e+00 : f32
    %377 = arith.subf %cst_97, %cst_31 : f32
    %378 = math.log %376 : vector<2x1x128xf32>
    %379 = vector.broadcast %372 : vector<2x1x1xf32> to vector<2x1x128xf32>
    %380 = arith.addf %378, %379 : vector<2x1x128xf32>
    %381 = vector.broadcast %377 : f32 to vector<2x1x128xf32>
    %382 = arith.mulf %381, %380 : vector<2x1x128xf32>
    %c11_i32 = arith.constant 11 : i32
    %383 = vector.broadcast %4 : f32 to vector<2x1x128xf32>
    %384 = arith.mulf %382, %383 : vector<2x1x128xf32>
    %385 = arith.addf %384, %44 : vector<2x1x128xf32>
    %cst_98 = arith.constant dense<0xFF800000> : vector<2x1xf32>
    %386 = vector.multi_reduction <maximumf>, %385, %cst_98 [2] : vector<2x1x128xf32> to vector<2x1xf32>
    %387 = vector.shape_cast %386 : vector<2x1xf32> to vector<2x1x1xf32>
    %388 = vector.broadcast %387 : vector<2x1x1xf32> to vector<2x1x128xf32>
    %389 = arith.subf %385, %388 : vector<2x1x128xf32>
    %390 = math.exp %389 : vector<2x1x128xf32>
    %cst_99 = arith.constant dense<0.000000e+00> : vector<2x1x128xf32>
    %391 = tpu.matmul %390, %50, %cst_99 {dimension_numbers = #tpu.dot_dimension_numbers<[2], [1], [1], [2], [0, 0, 0, 1, 1, 2], [0], [0]>} : vector<2x1x128xf32>, vector<2x128x128xf32>, vector<2x1x128xf32> -> vector<2x1x128xf32>
    %cst_100 = arith.constant 0.000000e+00 : f32
    %392 = arith.subf %cst_100, %cst_31 : f32
    %393 = math.log %391 : vector<2x1x128xf32>
    %394 = vector.broadcast %387 : vector<2x1x1xf32> to vector<2x1x128xf32>
    %395 = arith.addf %393, %394 : vector<2x1x128xf32>
    %396 = vector.broadcast %392 : f32 to vector<2x1x128xf32>
    %397 = arith.mulf %396, %395 : vector<2x1x128xf32>
    %398 = vector.broadcast %4 : f32 to vector<2x1x128xf32>
    %399 = arith.mulf %397, %398 : vector<2x1x128xf32>
    %400 = arith.addf %399, %47 : vector<2x1x128xf32>
    %cst_101 = arith.constant dense<0xFF800000> : vector<2x1xf32>
    %401 = vector.multi_reduction <maximumf>, %400, %cst_101 [2] : vector<2x1x128xf32> to vector<2x1xf32>
    %402 = vector.shape_cast %401 : vector<2x1xf32> to vector<2x1x1xf32>
    %403 = vector.broadcast %402 : vector<2x1x1xf32> to vector<2x1x128xf32>
    %404 = arith.subf %400, %403 : vector<2x1x128xf32>
    %405 = math.exp %404 : vector<2x1x128xf32>
    %cst_102 = arith.constant dense<0.000000e+00> : vector<2x1x128xf32>
    %406 = tpu.matmul %405, %50, %cst_102 {dimension_numbers = #tpu.dot_dimension_numbers<[2], [2], [1], [1], [0, 0, 0, 1, 1, 1], [0], [0]>} : vector<2x1x128xf32>, vector<2x128x128xf32>, vector<2x1x128xf32> -> vector<2x1x128xf32>
    %cst_103 = arith.constant 0.000000e+00 : f32
    %407 = arith.subf %cst_103, %cst_31 : f32
    %408 = math.log %406 : vector<2x1x128xf32>
    %409 = vector.broadcast %402 : vector<2x1x1xf32> to vector<2x1x128xf32>
    %410 = arith.addf %408, %409 : vector<2x1x128xf32>
    %411 = vector.broadcast %407 : f32 to vector<2x1x128xf32>
    %412 = arith.mulf %411, %410 : vector<2x1x128xf32>
    %c12_i32 = arith.constant 12 : i32
    %413 = vector.broadcast %4 : f32 to vector<2x1x128xf32>
    %414 = arith.mulf %412, %413 : vector<2x1x128xf32>
    %415 = arith.addf %414, %44 : vector<2x1x128xf32>
    %cst_104 = arith.constant dense<0xFF800000> : vector<2x1xf32>
    %416 = vector.multi_reduction <maximumf>, %415, %cst_104 [2] : vector<2x1x128xf32> to vector<2x1xf32>
    %417 = vector.shape_cast %416 : vector<2x1xf32> to vector<2x1x1xf32>
    %418 = vector.broadcast %417 : vector<2x1x1xf32> to vector<2x1x128xf32>
    %419 = arith.subf %415, %418 : vector<2x1x128xf32>
    %420 = math.exp %419 : vector<2x1x128xf32>
    %cst_105 = arith.constant dense<0.000000e+00> : vector<2x1x128xf32>
    %421 = tpu.matmul %420, %50, %cst_105 {dimension_numbers = #tpu.dot_dimension_numbers<[2], [1], [1], [2], [0, 0, 0, 1, 1, 2], [0], [0]>} : vector<2x1x128xf32>, vector<2x128x128xf32>, vector<2x1x128xf32> -> vector<2x1x128xf32>
    %cst_106 = arith.constant 0.000000e+00 : f32
    %422 = arith.subf %cst_106, %cst_31 : f32
    %423 = math.log %421 : vector<2x1x128xf32>
    %424 = vector.broadcast %417 : vector<2x1x1xf32> to vector<2x1x128xf32>
    %425 = arith.addf %423, %424 : vector<2x1x128xf32>
    %426 = vector.broadcast %422 : f32 to vector<2x1x128xf32>
    %427 = arith.mulf %426, %425 : vector<2x1x128xf32>
    %428 = vector.broadcast %4 : f32 to vector<2x1x128xf32>
    %429 = arith.mulf %427, %428 : vector<2x1x128xf32>
    %430 = arith.addf %429, %47 : vector<2x1x128xf32>
    %cst_107 = arith.constant dense<0xFF800000> : vector<2x1xf32>
    %431 = vector.multi_reduction <maximumf>, %430, %cst_107 [2] : vector<2x1x128xf32> to vector<2x1xf32>
    %432 = vector.shape_cast %431 : vector<2x1xf32> to vector<2x1x1xf32>
    %433 = vector.broadcast %432 : vector<2x1x1xf32> to vector<2x1x128xf32>
    %434 = arith.subf %430, %433 : vector<2x1x128xf32>
    %435 = math.exp %434 : vector<2x1x128xf32>
    %cst_108 = arith.constant dense<0.000000e+00> : vector<2x1x128xf32>
    %436 = tpu.matmul %435, %50, %cst_108 {dimension_numbers = #tpu.dot_dimension_numbers<[2], [2], [1], [1], [0, 0, 0, 1, 1, 1], [0], [0]>} : vector<2x1x128xf32>, vector<2x128x128xf32>, vector<2x1x128xf32> -> vector<2x1x128xf32>
    %cst_109 = arith.constant 0.000000e+00 : f32
    %437 = arith.subf %cst_109, %cst_31 : f32
    %438 = math.log %436 : vector<2x1x128xf32>
    %439 = vector.broadcast %432 : vector<2x1x1xf32> to vector<2x1x128xf32>
    %440 = arith.addf %438, %439 : vector<2x1x128xf32>
    %441 = vector.broadcast %437 : f32 to vector<2x1x128xf32>
    %442 = arith.mulf %441, %440 : vector<2x1x128xf32>
    %c13_i32 = arith.constant 13 : i32
    %443 = vector.broadcast %4 : f32 to vector<2x1x128xf32>
    %444 = arith.mulf %442, %443 : vector<2x1x128xf32>
    %445 = arith.addf %444, %44 : vector<2x1x128xf32>
    %cst_110 = arith.constant dense<0xFF800000> : vector<2x1xf32>
    %446 = vector.multi_reduction <maximumf>, %445, %cst_110 [2] : vector<2x1x128xf32> to vector<2x1xf32>
    %447 = vector.shape_cast %446 : vector<2x1xf32> to vector<2x1x1xf32>
    %448 = vector.broadcast %447 : vector<2x1x1xf32> to vector<2x1x128xf32>
    %449 = arith.subf %445, %448 : vector<2x1x128xf32>
    %450 = math.exp %449 : vector<2x1x128xf32>
    %cst_111 = arith.constant dense<0.000000e+00> : vector<2x1x128xf32>
    %451 = tpu.matmul %450, %50, %cst_111 {dimension_numbers = #tpu.dot_dimension_numbers<[2], [1], [1], [2], [0, 0, 0, 1, 1, 2], [0], [0]>} : vector<2x1x128xf32>, vector<2x128x128xf32>, vector<2x1x128xf32> -> vector<2x1x128xf32>
    %cst_112 = arith.constant 0.000000e+00 : f32
    %452 = arith.subf %cst_112, %cst_31 : f32
    %453 = math.log %451 : vector<2x1x128xf32>
    %454 = vector.broadcast %447 : vector<2x1x1xf32> to vector<2x1x128xf32>
    %455 = arith.addf %453, %454 : vector<2x1x128xf32>
    %456 = vector.broadcast %452 : f32 to vector<2x1x128xf32>
    %457 = arith.mulf %456, %455 : vector<2x1x128xf32>
    %458 = vector.broadcast %4 : f32 to vector<2x1x128xf32>
    %459 = arith.mulf %457, %458 : vector<2x1x128xf32>
    %460 = arith.addf %459, %47 : vector<2x1x128xf32>
    %cst_113 = arith.constant dense<0xFF800000> : vector<2x1xf32>
    %461 = vector.multi_reduction <maximumf>, %460, %cst_113 [2] : vector<2x1x128xf32> to vector<2x1xf32>
    %462 = vector.shape_cast %461 : vector<2x1xf32> to vector<2x1x1xf32>
    %463 = vector.broadcast %462 : vector<2x1x1xf32> to vector<2x1x128xf32>
    %464 = arith.subf %460, %463 : vector<2x1x128xf32>
    %465 = math.exp %464 : vector<2x1x128xf32>
    %cst_114 = arith.constant dense<0.000000e+00> : vector<2x1x128xf32>
    %466 = tpu.matmul %465, %50, %cst_114 {dimension_numbers = #tpu.dot_dimension_numbers<[2], [2], [1], [1], [0, 0, 0, 1, 1, 1], [0], [0]>} : vector<2x1x128xf32>, vector<2x128x128xf32>, vector<2x1x128xf32> -> vector<2x1x128xf32>
    %cst_115 = arith.constant 0.000000e+00 : f32
    %467 = arith.subf %cst_115, %cst_31 : f32
    %468 = math.log %466 : vector<2x1x128xf32>
    %469 = vector.broadcast %462 : vector<2x1x1xf32> to vector<2x1x128xf32>
    %470 = arith.addf %468, %469 : vector<2x1x128xf32>
    %471 = vector.broadcast %467 : f32 to vector<2x1x128xf32>
    %472 = arith.mulf %471, %470 : vector<2x1x128xf32>
    %c14_i32 = arith.constant 14 : i32
    %473 = vector.broadcast %4 : f32 to vector<2x1x128xf32>
    %474 = arith.mulf %472, %473 : vector<2x1x128xf32>
    %475 = arith.addf %474, %44 : vector<2x1x128xf32>
    %cst_116 = arith.constant dense<0xFF800000> : vector<2x1xf32>
    %476 = vector.multi_reduction <maximumf>, %475, %cst_116 [2] : vector<2x1x128xf32> to vector<2x1xf32>
    %477 = vector.shape_cast %476 : vector<2x1xf32> to vector<2x1x1xf32>
    %478 = vector.broadcast %477 : vector<2x1x1xf32> to vector<2x1x128xf32>
    %479 = arith.subf %475, %478 : vector<2x1x128xf32>
    %480 = math.exp %479 : vector<2x1x128xf32>
    %cst_117 = arith.constant dense<0.000000e+00> : vector<2x1x128xf32>
    %481 = tpu.matmul %480, %50, %cst_117 {dimension_numbers = #tpu.dot_dimension_numbers<[2], [1], [1], [2], [0, 0, 0, 1, 1, 2], [0], [0]>} : vector<2x1x128xf32>, vector<2x128x128xf32>, vector<2x1x128xf32> -> vector<2x1x128xf32>
    %cst_118 = arith.constant 0.000000e+00 : f32
    %482 = arith.subf %cst_118, %cst_31 : f32
    %483 = math.log %481 : vector<2x1x128xf32>
    %484 = vector.broadcast %477 : vector<2x1x1xf32> to vector<2x1x128xf32>
    %485 = arith.addf %483, %484 : vector<2x1x128xf32>
    %486 = vector.broadcast %482 : f32 to vector<2x1x128xf32>
    %487 = arith.mulf %486, %485 : vector<2x1x128xf32>
    %488 = vector.broadcast %4 : f32 to vector<2x1x128xf32>
    %489 = arith.mulf %487, %488 : vector<2x1x128xf32>
    %490 = arith.addf %489, %47 : vector<2x1x128xf32>
    %cst_119 = arith.constant dense<0xFF800000> : vector<2x1xf32>
    %491 = vector.multi_reduction <maximumf>, %490, %cst_119 [2] : vector<2x1x128xf32> to vector<2x1xf32>
    %492 = vector.shape_cast %491 : vector<2x1xf32> to vector<2x1x1xf32>
    %493 = vector.broadcast %492 : vector<2x1x1xf32> to vector<2x1x128xf32>
    %494 = arith.subf %490, %493 : vector<2x1x128xf32>
    %495 = math.exp %494 : vector<2x1x128xf32>
    %cst_120 = arith.constant dense<0.000000e+00> : vector<2x1x128xf32>
    %496 = tpu.matmul %495, %50, %cst_120 {dimension_numbers = #tpu.dot_dimension_numbers<[2], [2], [1], [1], [0, 0, 0, 1, 1, 1], [0], [0]>} : vector<2x1x128xf32>, vector<2x128x128xf32>, vector<2x1x128xf32> -> vector<2x1x128xf32>
    %cst_121 = arith.constant 0.000000e+00 : f32
    %497 = arith.subf %cst_121, %cst_31 : f32
    %498 = math.log %496 : vector<2x1x128xf32>
    %499 = vector.broadcast %492 : vector<2x1x1xf32> to vector<2x1x128xf32>
    %500 = arith.addf %498, %499 : vector<2x1x128xf32>
    %501 = vector.broadcast %497 : f32 to vector<2x1x128xf32>
    %502 = arith.mulf %501, %500 : vector<2x1x128xf32>
    %c15_i32 = arith.constant 15 : i32
    %503 = vector.broadcast %4 : f32 to vector<2x1x128xf32>
    %504 = arith.mulf %502, %503 : vector<2x1x128xf32>
    %505 = arith.addf %504, %44 : vector<2x1x128xf32>
    %cst_122 = arith.constant dense<0xFF800000> : vector<2x1xf32>
    %506 = vector.multi_reduction <maximumf>, %505, %cst_122 [2] : vector<2x1x128xf32> to vector<2x1xf32>
    %507 = vector.shape_cast %506 : vector<2x1xf32> to vector<2x1x1xf32>
    %508 = vector.broadcast %507 : vector<2x1x1xf32> to vector<2x1x128xf32>
    %509 = arith.subf %505, %508 : vector<2x1x128xf32>
    %510 = math.exp %509 : vector<2x1x128xf32>
    %cst_123 = arith.constant dense<0.000000e+00> : vector<2x1x128xf32>
    %511 = tpu.matmul %510, %50, %cst_123 {dimension_numbers = #tpu.dot_dimension_numbers<[2], [1], [1], [2], [0, 0, 0, 1, 1, 2], [0], [0]>} : vector<2x1x128xf32>, vector<2x128x128xf32>, vector<2x1x128xf32> -> vector<2x1x128xf32>
    %cst_124 = arith.constant 0.000000e+00 : f32
    %512 = arith.subf %cst_124, %cst_31 : f32
    %513 = math.log %511 : vector<2x1x128xf32>
    %514 = vector.broadcast %507 : vector<2x1x1xf32> to vector<2x1x128xf32>
    %515 = arith.addf %513, %514 : vector<2x1x128xf32>
    %516 = vector.broadcast %512 : f32 to vector<2x1x128xf32>
    %517 = arith.mulf %516, %515 : vector<2x1x128xf32>
    %518 = vector.broadcast %4 : f32 to vector<2x1x128xf32>
    %519 = arith.mulf %517, %518 : vector<2x1x128xf32>
    %520 = arith.addf %519, %47 : vector<2x1x128xf32>
    %cst_125 = arith.constant dense<0xFF800000> : vector<2x1xf32>
    %521 = vector.multi_reduction <maximumf>, %520, %cst_125 [2] : vector<2x1x128xf32> to vector<2x1xf32>
    %522 = vector.shape_cast %521 : vector<2x1xf32> to vector<2x1x1xf32>
    %523 = vector.broadcast %522 : vector<2x1x1xf32> to vector<2x1x128xf32>
    %524 = arith.subf %520, %523 : vector<2x1x128xf32>
    %525 = math.exp %524 : vector<2x1x128xf32>
    %cst_126 = arith.constant dense<0.000000e+00> : vector<2x1x128xf32>
    %526 = tpu.matmul %525, %50, %cst_126 {dimension_numbers = #tpu.dot_dimension_numbers<[2], [2], [1], [1], [0, 0, 0, 1, 1, 1], [0], [0]>} : vector<2x1x128xf32>, vector<2x128x128xf32>, vector<2x1x128xf32> -> vector<2x1x128xf32>
    %cst_127 = arith.constant 0.000000e+00 : f32
    %527 = arith.subf %cst_127, %cst_31 : f32
    %528 = math.log %526 : vector<2x1x128xf32>
    %529 = vector.broadcast %522 : vector<2x1x1xf32> to vector<2x1x128xf32>
    %530 = arith.addf %528, %529 : vector<2x1x128xf32>
    %531 = vector.broadcast %527 : f32 to vector<2x1x128xf32>
    %532 = arith.mulf %531, %530 : vector<2x1x128xf32>
    %c16_i32 = arith.constant 16 : i32
    %533 = vector.broadcast %4 : f32 to vector<2x1x128xf32>
    %534 = arith.mulf %532, %533 : vector<2x1x128xf32>
    %535 = arith.addf %534, %44 : vector<2x1x128xf32>
    %cst_128 = arith.constant dense<0xFF800000> : vector<2x1xf32>
    %536 = vector.multi_reduction <maximumf>, %535, %cst_128 [2] : vector<2x1x128xf32> to vector<2x1xf32>
    %537 = vector.shape_cast %536 : vector<2x1xf32> to vector<2x1x1xf32>
    %538 = vector.broadcast %537 : vector<2x1x1xf32> to vector<2x1x128xf32>
    %539 = arith.subf %535, %538 : vector<2x1x128xf32>
    %540 = math.exp %539 : vector<2x1x128xf32>
    %cst_129 = arith.constant dense<0.000000e+00> : vector<2x1x128xf32>
    %541 = tpu.matmul %540, %50, %cst_129 {dimension_numbers = #tpu.dot_dimension_numbers<[2], [1], [1], [2], [0, 0, 0, 1, 1, 2], [0], [0]>} : vector<2x1x128xf32>, vector<2x128x128xf32>, vector<2x1x128xf32> -> vector<2x1x128xf32>
    %cst_130 = arith.constant 0.000000e+00 : f32
    %542 = arith.subf %cst_130, %cst_31 : f32
    %543 = math.log %541 : vector<2x1x128xf32>
    %544 = vector.broadcast %537 : vector<2x1x1xf32> to vector<2x1x128xf32>
    %545 = arith.addf %543, %544 : vector<2x1x128xf32>
    %546 = vector.broadcast %542 : f32 to vector<2x1x128xf32>
    %547 = arith.mulf %546, %545 : vector<2x1x128xf32>
    %548 = vector.broadcast %4 : f32 to vector<2x1x128xf32>
    %549 = arith.mulf %547, %548 : vector<2x1x128xf32>
    %550 = arith.addf %549, %47 : vector<2x1x128xf32>
    %cst_131 = arith.constant dense<0xFF800000> : vector<2x1xf32>
    %551 = vector.multi_reduction <maximumf>, %550, %cst_131 [2] : vector<2x1x128xf32> to vector<2x1xf32>
    %552 = vector.shape_cast %551 : vector<2x1xf32> to vector<2x1x1xf32>
    %553 = vector.broadcast %552 : vector<2x1x1xf32> to vector<2x1x128xf32>
    %554 = arith.subf %550, %553 : vector<2x1x128xf32>
    %555 = math.exp %554 : vector<2x1x128xf32>
    %cst_132 = arith.constant dense<0.000000e+00> : vector<2x1x128xf32>
    %556 = tpu.matmul %555, %50, %cst_132 {dimension_numbers = #tpu.dot_dimension_numbers<[2], [2], [1], [1], [0, 0, 0, 1, 1, 1], [0], [0]>} : vector<2x1x128xf32>, vector<2x128x128xf32>, vector<2x1x128xf32> -> vector<2x1x128xf32>
    %cst_133 = arith.constant 0.000000e+00 : f32
    %557 = arith.subf %cst_133, %cst_31 : f32
    %558 = math.log %556 : vector<2x1x128xf32>
    %559 = vector.broadcast %552 : vector<2x1x1xf32> to vector<2x1x128xf32>
    %560 = arith.addf %558, %559 : vector<2x1x128xf32>
    %561 = vector.broadcast %557 : f32 to vector<2x1x128xf32>
    %562 = arith.mulf %561, %560 : vector<2x1x128xf32>
    %c17_i32 = arith.constant 17 : i32
    %563 = vector.broadcast %4 : f32 to vector<2x1x128xf32>
    %564 = arith.mulf %562, %563 : vector<2x1x128xf32>
    %565 = arith.addf %564, %44 : vector<2x1x128xf32>
    %cst_134 = arith.constant dense<0xFF800000> : vector<2x1xf32>
    %566 = vector.multi_reduction <maximumf>, %565, %cst_134 [2] : vector<2x1x128xf32> to vector<2x1xf32>
    %567 = vector.shape_cast %566 : vector<2x1xf32> to vector<2x1x1xf32>
    %568 = vector.broadcast %567 : vector<2x1x1xf32> to vector<2x1x128xf32>
    %569 = arith.subf %565, %568 : vector<2x1x128xf32>
    %570 = math.exp %569 : vector<2x1x128xf32>
    %cst_135 = arith.constant dense<0.000000e+00> : vector<2x1x128xf32>
    %571 = tpu.matmul %570, %50, %cst_135 {dimension_numbers = #tpu.dot_dimension_numbers<[2], [1], [1], [2], [0, 0, 0, 1, 1, 2], [0], [0]>} : vector<2x1x128xf32>, vector<2x128x128xf32>, vector<2x1x128xf32> -> vector<2x1x128xf32>
    %cst_136 = arith.constant 0.000000e+00 : f32
    %572 = arith.subf %cst_136, %cst_31 : f32
    %573 = math.log %571 : vector<2x1x128xf32>
    %574 = vector.broadcast %567 : vector<2x1x1xf32> to vector<2x1x128xf32>
    %575 = arith.addf %573, %574 : vector<2x1x128xf32>
    %576 = vector.broadcast %572 : f32 to vector<2x1x128xf32>
    %577 = arith.mulf %576, %575 : vector<2x1x128xf32>
    %578 = vector.broadcast %4 : f32 to vector<2x1x128xf32>
    %579 = arith.mulf %577, %578 : vector<2x1x128xf32>
    %580 = arith.addf %579, %47 : vector<2x1x128xf32>
    %cst_137 = arith.constant dense<0xFF800000> : vector<2x1xf32>
    %581 = vector.multi_reduction <maximumf>, %580, %cst_137 [2] : vector<2x1x128xf32> to vector<2x1xf32>
    %582 = vector.shape_cast %581 : vector<2x1xf32> to vector<2x1x1xf32>
    %583 = vector.broadcast %582 : vector<2x1x1xf32> to vector<2x1x128xf32>
    %584 = arith.subf %580, %583 : vector<2x1x128xf32>
    %585 = math.exp %584 : vector<2x1x128xf32>
    %cst_138 = arith.constant dense<0.000000e+00> : vector<2x1x128xf32>
    %586 = tpu.matmul %585, %50, %cst_138 {dimension_numbers = #tpu.dot_dimension_numbers<[2], [2], [1], [1], [0, 0, 0, 1, 1, 1], [0], [0]>} : vector<2x1x128xf32>, vector<2x128x128xf32>, vector<2x1x128xf32> -> vector<2x1x128xf32>
    %cst_139 = arith.constant 0.000000e+00 : f32
    %587 = arith.subf %cst_139, %cst_31 : f32
    %588 = math.log %586 : vector<2x1x128xf32>
    %589 = vector.broadcast %582 : vector<2x1x1xf32> to vector<2x1x128xf32>
    %590 = arith.addf %588, %589 : vector<2x1x128xf32>
    %591 = vector.broadcast %587 : f32 to vector<2x1x128xf32>
    %592 = arith.mulf %591, %590 : vector<2x1x128xf32>
    %c18_i32 = arith.constant 18 : i32
    %593 = vector.broadcast %4 : f32 to vector<2x1x128xf32>
    %594 = arith.mulf %592, %593 : vector<2x1x128xf32>
    %595 = arith.addf %594, %44 : vector<2x1x128xf32>
    %cst_140 = arith.constant dense<0xFF800000> : vector<2x1xf32>
    %596 = vector.multi_reduction <maximumf>, %595, %cst_140 [2] : vector<2x1x128xf32> to vector<2x1xf32>
    %597 = vector.shape_cast %596 : vector<2x1xf32> to vector<2x1x1xf32>
    %598 = vector.broadcast %597 : vector<2x1x1xf32> to vector<2x1x128xf32>
    %599 = arith.subf %595, %598 : vector<2x1x128xf32>
    %600 = math.exp %599 : vector<2x1x128xf32>
    %cst_141 = arith.constant dense<0.000000e+00> : vector<2x1x128xf32>
    %601 = tpu.matmul %600, %50, %cst_141 {dimension_numbers = #tpu.dot_dimension_numbers<[2], [1], [1], [2], [0, 0, 0, 1, 1, 2], [0], [0]>} : vector<2x1x128xf32>, vector<2x128x128xf32>, vector<2x1x128xf32> -> vector<2x1x128xf32>
    %cst_142 = arith.constant 0.000000e+00 : f32
    %602 = arith.subf %cst_142, %cst_31 : f32
    %603 = math.log %601 : vector<2x1x128xf32>
    %604 = vector.broadcast %597 : vector<2x1x1xf32> to vector<2x1x128xf32>
    %605 = arith.addf %603, %604 : vector<2x1x128xf32>
    %606 = vector.broadcast %602 : f32 to vector<2x1x128xf32>
    %607 = arith.mulf %606, %605 : vector<2x1x128xf32>
    %608 = vector.broadcast %4 : f32 to vector<2x1x128xf32>
    %609 = arith.mulf %607, %608 : vector<2x1x128xf32>
    %610 = arith.addf %609, %47 : vector<2x1x128xf32>
    %cst_143 = arith.constant dense<0xFF800000> : vector<2x1xf32>
    %611 = vector.multi_reduction <maximumf>, %610, %cst_143 [2] : vector<2x1x128xf32> to vector<2x1xf32>
    %612 = vector.shape_cast %611 : vector<2x1xf32> to vector<2x1x1xf32>
    %613 = vector.broadcast %612 : vector<2x1x1xf32> to vector<2x1x128xf32>
    %614 = arith.subf %610, %613 : vector<2x1x128xf32>
    %615 = math.exp %614 : vector<2x1x128xf32>
    %cst_144 = arith.constant dense<0.000000e+00> : vector<2x1x128xf32>
    %616 = tpu.matmul %615, %50, %cst_144 {dimension_numbers = #tpu.dot_dimension_numbers<[2], [2], [1], [1], [0, 0, 0, 1, 1, 1], [0], [0]>} : vector<2x1x128xf32>, vector<2x128x128xf32>, vector<2x1x128xf32> -> vector<2x1x128xf32>
    %cst_145 = arith.constant 0.000000e+00 : f32
    %617 = arith.subf %cst_145, %cst_31 : f32
    %618 = math.log %616 : vector<2x1x128xf32>
    %619 = vector.broadcast %612 : vector<2x1x1xf32> to vector<2x1x128xf32>
    %620 = arith.addf %618, %619 : vector<2x1x128xf32>
    %621 = vector.broadcast %617 : f32 to vector<2x1x128xf32>
    %622 = arith.mulf %621, %620 : vector<2x1x128xf32>
    %c19_i32 = arith.constant 19 : i32
    %623 = vector.broadcast %4 : f32 to vector<2x1x128xf32>
    %624 = arith.mulf %622, %623 : vector<2x1x128xf32>
    %625 = arith.addf %624, %44 : vector<2x1x128xf32>
    %cst_146 = arith.constant dense<0xFF800000> : vector<2x1xf32>
    %626 = vector.multi_reduction <maximumf>, %625, %cst_146 [2] : vector<2x1x128xf32> to vector<2x1xf32>
    %627 = vector.shape_cast %626 : vector<2x1xf32> to vector<2x1x1xf32>
    %628 = vector.broadcast %627 : vector<2x1x1xf32> to vector<2x1x128xf32>
    %629 = arith.subf %625, %628 : vector<2x1x128xf32>
    %630 = math.exp %629 : vector<2x1x128xf32>
    %cst_147 = arith.constant dense<0.000000e+00> : vector<2x1x128xf32>
    %631 = tpu.matmul %630, %50, %cst_147 {dimension_numbers = #tpu.dot_dimension_numbers<[2], [1], [1], [2], [0, 0, 0, 1, 1, 2], [0], [0]>} : vector<2x1x128xf32>, vector<2x128x128xf32>, vector<2x1x128xf32> -> vector<2x1x128xf32>
    %cst_148 = arith.constant 0.000000e+00 : f32
    %632 = arith.subf %cst_148, %cst_31 : f32
    %633 = math.log %631 : vector<2x1x128xf32>
    %634 = vector.broadcast %627 : vector<2x1x1xf32> to vector<2x1x128xf32>
    %635 = arith.addf %633, %634 : vector<2x1x128xf32>
    %636 = vector.broadcast %632 : f32 to vector<2x1x128xf32>
    %637 = arith.mulf %636, %635 : vector<2x1x128xf32>
    %638 = vector.broadcast %4 : f32 to vector<2x1x128xf32>
    %639 = arith.mulf %637, %638 : vector<2x1x128xf32>
    %640 = arith.addf %639, %47 : vector<2x1x128xf32>
    %cst_149 = arith.constant dense<0xFF800000> : vector<2x1xf32>
    %641 = vector.multi_reduction <maximumf>, %640, %cst_149 [2] : vector<2x1x128xf32> to vector<2x1xf32>
    %642 = vector.shape_cast %641 : vector<2x1xf32> to vector<2x1x1xf32>
    %643 = vector.broadcast %642 : vector<2x1x1xf32> to vector<2x1x128xf32>
    %644 = arith.subf %640, %643 : vector<2x1x128xf32>
    %645 = math.exp %644 : vector<2x1x128xf32>
    %cst_150 = arith.constant dense<0.000000e+00> : vector<2x1x128xf32>
    %646 = tpu.matmul %645, %50, %cst_150 {dimension_numbers = #tpu.dot_dimension_numbers<[2], [2], [1], [1], [0, 0, 0, 1, 1, 1], [0], [0]>} : vector<2x1x128xf32>, vector<2x128x128xf32>, vector<2x1x128xf32> -> vector<2x1x128xf32>
    %cst_151 = arith.constant 0.000000e+00 : f32
    %647 = arith.subf %cst_151, %cst_31 : f32
    %648 = math.log %646 : vector<2x1x128xf32>
    %649 = vector.broadcast %642 : vector<2x1x1xf32> to vector<2x1x128xf32>
    %650 = arith.addf %648, %649 : vector<2x1x128xf32>
    %651 = vector.broadcast %647 : f32 to vector<2x1x128xf32>
    %652 = arith.mulf %651, %650 : vector<2x1x128xf32>
    %653 = arith.mulf %2, %652 : vector<2x1x128xf32>
    %cst_152 = arith.constant dense<0.000000e+00> : vector<2x1xf32>
    %654 = vector.multi_reduction <add>, %653, %cst_152 [2] : vector<2x1x128xf32> to vector<2x1xf32>
    %655 = arith.mulf %3, %637 : vector<2x1x128xf32>
    %cst_153 = arith.constant dense<0.000000e+00> : vector<2x1xf32>
    %656 = vector.multi_reduction <add>, %655, %cst_153 [2] : vector<2x1x128xf32> to vector<2x1xf32>
    %657 = arith.addf %654, %656 : vector<2x1xf32>
    %658 = vector.shape_cast %657 : vector<2x1xf32> to vector<1x1x2xf32>
    %c0_154 = arith.constant 0 : index
    %c0_155 = arith.constant 0 : index
    %c0_156 = arith.constant 0 : index
    %659 = vector.load %arg5[%c0_154, %c0_155, %c0_156] : memref<1x1x2xf32, #tpu.memory_space<vmem>>, vector<1x1x2xf32>
    tpu.vector_store %arg5[%c0_154, %c0_155, %c0_156], %658 {strides = array<i32>} : memref<1x1x2xf32, #tpu.memory_space<vmem>>, vector<1x1x2xf32>,
    return
  }
  func.func @transform_0(%arg0: i32) -> (i32, i32, i32) {
    %c0_i32 = arith.constant 0 : i32
    %c0_i32_0 = arith.constant 0 : i32
    %c0_i32_1 = arith.constant 0 : i32
    return %arg0, %c0_i32, %c0_i32_0 : i32, i32, i32
  }
  func.func @transform_1(%arg0: i32) -> (i32, i32, i32) {
    %c0_i32 = arith.constant 0 : i32
    %c0_i32_0 = arith.constant 0 : i32
    %c0_i32_1 = arith.constant 0 : i32
    return %arg0, %c0_i32, %c0_i32_0 : i32, i32, i32
  }
  func.func @transform_2(%arg0: i32) -> (i32, i32, i32) {
    %c0_i32 = arith.constant 0 : i32
    %c0_i32_0 = arith.constant 0 : i32
    %c0_i32_1 = arith.constant 0 : i32
    return %arg0, %c0_i32, %c0_i32_0 : i32, i32, i32
  }
  func.func @transform_3(%arg0: i32) -> (i32, i32, i32) {
    %c0_i32 = arith.constant 0 : i32
    %c0_i32_0 = arith.constant 0 : i32
    %c0_i32_1 = arith.constant 0 : i32
    return %arg0, %c0_i32, %c0_i32_0 : i32, i32, i32
  }
  func.func @transform_4(%arg0: i32) -> (i32, i32, i32) {
    %c0_i32 = arith.constant 0 : i32
    %c0_i32_0 = arith.constant 0 : i32
    %c0_i32_1 = arith.constant 0 : i32
    return %arg0, %c0_i32, %c0_i32_0 : i32, i32, i32
  }
}

</mosaic_0001>

<llo_original>
// kernel: tpu_custom_call.1
$region0: #{tpu_custom_call.1}
  #allocation0 [shape = 'u32[]', space=smem, size = 0x4, offset = 0x4, fixed_abs, tag = 'smem constant byte address 0x4 - core index']
  #allocation1 [shape = 'u32[72,128]{1,0:T(1,128)}', space=vmem, size = 0x9000, scoped, tag = 'internal scratch']
  %s0 = inlined_call_operand.hbm [shape: f32[4,4,128], index: 0, kind: input, shape index: {}]
  %s1 = inlined_call_operand.hbm [shape: f32[4,4,128], index: 1, kind: input, shape index: {}]
  %s2 = inlined_call_operand.hbm [shape: f32[4,1,128], index: 2, kind: input, shape index: {}]
  %s3 = inlined_call_operand.hbm [shape: f32[4,1,128], index: 3, kind: input, shape index: {}]
  %s4 = inlined_call_operand.hbm [shape: f32[2,1,2], index: 4, kind: output, shape index: {}]
  %s5 = sld [smem:[#allocation0]]
  $region65: #{tpu_custom_call.1} parent=0
    _
  %s7 = ssub.s32 1, %s5
  %s8 = scalar_select 0, %s7, %s5
  $region1: #{tpu_custom_call.1} parent=0
    #allocation2 [shape = 'u8[8192]{0}', space=vmem, size = 0x2000, scoped, tag = 'input window, operand 0']
    #allocation3 [shape = 's32[2]{0}', space=sflag, size = 0x8, scoped, tag = 'scoped memory for tpu_custom_call.1']
    #allocation4 [shape = 's32[2]{0}', space=sflag, size = 0x8, scoped, tag = 'scoped memory for tpu_custom_call.1']
    #allocation5 [shape = 'u8[8192]{0}', space=vmem, size = 0x2000, scoped, tag = 'input window, operand 1']
    #allocation6 [shape = 's32[2]{0}', space=sflag, size = 0x8, scoped, tag = 'scoped memory for tpu_custom_call.1']
    #allocation7 [shape = 'u8[2048]{0}', space=vmem, size = 0x800, scoped, tag = 'input window, operand 2']
    #allocation8 [shape = 'u8[2048]{0}', space=vmem, size = 0x800, scoped, tag = 'input window, operand 3']
    #allocation9 [shape = 's32[2]{0}', space=sflag, size = 0x8, scoped, tag = 'scoped memory for tpu_custom_call.1']
    #allocation10 [shape = 'u8[1024]{0}', space=vmem, size = 0x400, scoped, tag = 'output window, operand 0']
    %9 = vsyncpa [#allocation3], 0
    %s10 = scalar_lea.sflag [#allocation3], 1
    %11 = vsyncpa %s10, 0
    %12 = vsyncpa [#allocation6], 0
    %s13 = scalar_lea.sflag [#allocation6], 1
    %14 = vsyncpa %s13, 0
    %15 = vsyncpa [#allocation9], 0
    %s16 = scalar_lea.sflag [#allocation9], 1
    %17 = vsyncpa %s16, 0
    %18 = vsyncpa [#allocation4], 0
    %s19 = scalar_lea.sflag [#allocation4], 1
    %20 = vsyncpa %s19, 0
    loop: start=0, step=1, limit=4
    $region2: #{tpu_custom_call.1} parent=1 // loop_pre_header
      _
    $region3: #{tpu_custom_call.1} parent=1 // loop_header
      %s22 = sphi 0, %s26
      %p23 = scmp.ge.s32.totalorder %s22, 4
      %s32 = sphi 0, %s34
      %s35 = sphi 0, %s32
      %s36 = sphi 0, %s35
      %s52 = sphi 0, %s36
      %s58 = sphi 0, %s60
      %s61 = sphi 0, %s58
      %s62 = sphi 0, %s61
      %s78 = sphi 0, %s62
      %s84 = sphi 0, %s86
      %s87 = sphi 0, %s84
      %s88 = sphi 0, %s87
      %s104 = sphi 0, %s88
      %s110 = sphi 0, %s112
      %s113 = sphi 0, %s110
      %s114 = sphi 0, %s113
      %s130 = sphi 0, %s114
      %s136 = sphi 0, %s138
      %s139 = sphi 0, %s136
      %s140 = sphi 0, %s139
      %s156 = sphi 0, %s140
    $region4: #{tpu_custom_call.1} parent=1 // loop_header_branch
      %25 = sbr.rel (%p23) target = $region8
    $region5: #{tpu_custom_call.1} parent=1 // loop_body
      %s27 = ssub.s32 %s22, 1
      %s28 = ssub.s32 %s22, 2
      %s29 = sadd.s32 %s22, 1
      %s30 = ssub.s32 %s22, %s29
      %p31 = scmp.eq.s32.totalorder %s30, 0
      %s33 = sadd.s32 %s32, 1
      %s34 = scalar_select %p31, %s32, %s33
      %p37 = pneg %p31
      %p38 = scmp.eq.s32.totalorder %s22, 1
      %p39 = por %p37, %p38
      %p40 = scmp.ne.s32.totalorder %s32, %s35
      %p41 = scmp.eq.s32.totalorder %s22, 0
      %p42 = por %p40, %p41
      %p43 = scmp.ne.s32.totalorder %s32, %s35
      %p44 = scmp.eq.s32.totalorder %s27, 1
      %p45 = por %p43, %p44
      %p46 = scmp.ne.s32.totalorder %s35, %s36
      %p47 = scmp.eq.s32.totalorder %s27, 0
      %p48 = por %p46, %p47
      %p49 = scmp.ne.s32.totalorder %s35, %s36
      %p50 = scmp.eq.s32.totalorder %s28, 1
      %p51 = por %p49, %p50
      %p53 = scmp.ne.s32.totalorder %s36, %s52
      %p54 = scmp.eq.s32.totalorder %s28, 0
      %p55 = por %p53, %p54
      %s56 = ssub.s32 %s22, %s29
      %p57 = scmp.eq.s32.totalorder %s56, 0
      %s59 = sadd.s32 %s58, 1
      %s60 = scalar_select %p57, %s58, %s59
      %p63 = pneg %p57
      %p64 = scmp.eq.s32.totalorder %s22, 1
      %p65 = por %p63, %p64
      %p66 = scmp.ne.s32.totalorder %s58, %s61
      %p67 = scmp.eq.s32.totalorder %s22, 0
      %p68 = por %p66, %p67
      %p69 = scmp.ne.s32.totalorder %s58, %s61
      %p70 = scmp.eq.s32.totalorder %s27, 1
      %p71 = por %p69, %p70
      %p72 = scmp.ne.s32.totalorder %s61, %s62
      %p73 = scmp.eq.s32.totalorder %s27, 0
      %p74 = por %p72, %p73
      %p75 = scmp.ne.s32.totalorder %s61, %s62
      %p76 = scmp.eq.s32.totalorder %s28, 1
      %p77 = por %p75, %p76
      %p79 = scmp.ne.s32.totalorder %s62, %s78
      %p80 = scmp.eq.s32.totalorder %s28, 0
      %p81 = por %p79, %p80
      %s82 = ssub.s32 %s22, %s29
      %p83 = scmp.eq.s32.totalorder %s82, 0
      %s85 = sadd.s32 %s84, 1
      %s86 = scalar_select %p83, %s84, %s85
      %p89 = pneg %p83
      %p90 = scmp.eq.s32.totalorder %s22, 1
      %p91 = por %p89, %p90
      %p92 = scmp.ne.s32.totalorder %s84, %s87
      %p93 = scmp.eq.s32.totalorder %s22, 0
      %p94 = por %p92, %p93
      %p95 = scmp.ne.s32.totalorder %s84, %s87
      %p96 = scmp.eq.s32.totalorder %s27, 1
      %p97 = por %p95, %p96
      %p98 = scmp.ne.s32.totalorder %s87, %s88
      %p99 = scmp.eq.s32.totalorder %s27, 0
      %p100 = por %p98, %p99
      %p101 = scmp.ne.s32.totalorder %s87, %s88
      %p102 = scmp.eq.s32.totalorder %s28, 1
      %p103 = por %p101, %p102
      %p105 = scmp.ne.s32.totalorder %s88, %s104
      %p106 = scmp.eq.s32.totalorder %s28, 0
      %p107 = por %p105, %p106
      %s108 = ssub.s32 %s22, %s29
      %p109 = scmp.eq.s32.totalorder %s108, 0
      %s111 = sadd.s32 %s110, 1
      %s112 = scalar_select %p109, %s110, %s111
      %p115 = pneg %p109
      %p116 = scmp.eq.s32.totalorder %s22, 1
      %p117 = por %p115, %p116
      %p118 = scmp.ne.s32.totalorder %s110, %s113
      %p119 = scmp.eq.s32.totalorder %s22, 0
      %p120 = por %p118, %p119
      %p121 = scmp.ne.s32.totalorder %s110, %s113
      %p122 = scmp.eq.s32.totalorder %s27, 1
      %p123 = por %p121, %p122
      %p124 = scmp.ne.s32.totalorder %s113, %s114
      %p125 = scmp.eq.s32.totalorder %s27, 0
      %p126 = por %p124, %p125
      %p127 = scmp.ne.s32.totalorder %s113, %s114
      %p128 = scmp.eq.s32.totalorder %s28, 1
      %p129 = por %p127, %p128
      %p131 = scmp.ne.s32.totalorder %s114, %s130
      %p132 = scmp.eq.s32.totalorder %s28, 0
      %p133 = por %p131, %p132
      %s134 = ssub.s32 %s22, %s29
      %p135 = scmp.eq.s32.totalorder %s134, 0
      %s137 = sadd.s32 %s136, 1
      %s138 = scalar_select %p135, %s136, %s137
      %p141 = pneg %p135
      %p142 = scmp.eq.s32.totalorder %s22, 1
      %p143 = por %p141, %p142
      %p144 = scmp.ne.s32.totalorder %s136, %s139
      %p145 = scmp.eq.s32.totalorder %s22, 0
      %p146 = por %p144, %p145
      %p147 = scmp.ne.s32.totalorder %s136, %s139
      %p148 = scmp.eq.s32.totalorder %s27, 1
      %p149 = por %p147, %p148
      %p150 = scmp.ne.s32.totalorder %s139, %s140
      %p151 = scmp.eq.s32.totalorder %s27, 0
      %p152 = por %p150, %p151
      %p153 = scmp.ne.s32.totalorder %s139, %s140
      %p154 = scmp.eq.s32.totalorder %s28, 1
      %p155 = por %p153, %p154
      %p157 = scmp.ne.s32.totalorder %s140, %s156
      %p158 = scmp.eq.s32.totalorder %s28, 0
      %p159 = por %p157, %p158
      %p160 = scmp.le.s32.totalorder 1, %s22
      %p161 = scmp.lt.s32.totalorder %s22, 3
      %p162 = pnand %p160, %p161
      %p163 = pneg %p162
      // Predicated region
      $region9: #{tpu_custom_call.1} parent=5 // pred_check
        _
      $region10: #{tpu_custom_call.1} parent=5 // pred_check_branch
        %165 = sbr.rel (%p162) target = $region12
      $region11: #{tpu_custom_call.1} parent=5 // pred_region
        %s166 = ssub.s32 %s22, 1
      $region12: #{tpu_custom_call.1} parent=5 // pred_fallthru
        _
      %p167 = scmp.lt.s32.totalorder %s22, 2
      // Predicated region
      $region13: #{tpu_custom_call.1} parent=5 // pred_check
        %p168 = pneg %p167
      $region14: #{tpu_custom_call.1} parent=5 // pred_check_branch
        %170 = sbr.rel (%p168) target = $region16
      $region15: #{tpu_custom_call.1} parent=5 // pred_region
        // Predicated region
        $region17: #{tpu_custom_call.1} parent=15 // pred_check
          %p171 = pneg %p42
        $region18: #{tpu_custom_call.1} parent=15 // pred_check_branch
          %173 = sbr.rel (%p171) target = $region20
        $region19: #{tpu_custom_call.1} parent=15 // pred_region
          %s174 = sand.u32 %s32, 1
          %s175 = scalar_lea.sflag [#allocation3], %s174
          %s176 = sand.u32 %s32, 1
          %s177 = smul.addr %s176, 8
          %s178 = scalar_lea.vmem [#allocation2], %s177
          %s179 = smul.u32 2, %s22
          %181 = vsyncadd %s175, 0
          %s182 = smul.addr %s179, 4
          %s183 = scalar_lea.hbm %s0, %s182
          %s184 = sshll.u32 %s183, 4
          %s185 = int_to_ptr.hbm [resolvable:$true] %s184
          %s186 = sshll.u32 %s178, 4
          %s187 = int_to_ptr.vmem [resolvable:$true] %s186
          %192 = dma.hbm_to_vmem [thread:$0]  %s185, 128, %s187, %s175, 64, 64, 4
        $region20: #{tpu_custom_call.1} parent=15 // pred_fallthru
          _
        // Predicated region
        $region21: #{tpu_custom_call.1} parent=15 // pred_check
          %p193 = pneg %p68
        $region22: #{tpu_custom_call.1} parent=15 // pred_check_branch
          %195 = sbr.rel (%p193) target = $region24
        $region23: #{tpu_custom_call.1} parent=15 // pred_region
          %s196 = sand.u32 %s22, 1
          %s197 = scalar_lea.sflag [#allocation6], %s196
          %s198 = sand.u32 %s58, 1
          %s199 = smul.addr %s198, 8
          %s200 = scalar_lea.vmem [#allocation5], %s199
          %s201 = smul.u32 2, %s22
          %203 = vsyncadd %s197, 0
          %s204 = smul.addr %s201, 4
          %s205 = scalar_lea.hbm %s1, %s204
          %s206 = sshll.u32 %s205, 4
          %s207 = int_to_ptr.hbm [resolvable:$true] %s206
          %s208 = sshll.u32 %s200, 4
          %s209 = int_to_ptr.vmem [resolvable:$true] %s208
          %214 = dma.hbm_to_vmem [thread:$0]  %s207, 128, %s209, %s197, 64, 64, 4
        $region24: #{tpu_custom_call.1} parent=15 // pred_fallthru
          _
        // Predicated region
        $region25: #{tpu_custom_call.1} parent=15 // pred_check
          %p215 = pneg %p94
        $region26: #{tpu_custom_call.1} parent=15 // pred_check_branch
          %217 = sbr.rel (%p215) target = $region28
        $region27: #{tpu_custom_call.1} parent=15 // pred_region
          %s218 = sand.u32 %s22, 1
          %s219 = scalar_lea.sflag [#allocation6], %s218
          %s220 = sand.u32 %s84, 1
          %s221 = smul.addr %s220, 2
          %s222 = scalar_lea.vmem [#allocation7], %s221
          %s223 = smul.u32 2, %s22
          %225 = vsyncadd %s219, 0
          %s226 = scalar_lea.hbm %s2, %s223
          %s227 = sshll.u32 %s226, 4
          %s228 = int_to_ptr.hbm [resolvable:$true] %s227
          %s229 = sshll.u32 %s222, 4
          %s230 = int_to_ptr.vmem [resolvable:$true] %s229
          %235 = dma.hbm_to_vmem [thread:$0]  %s228, 32, %s230, %s219, 16, 16, 1
        $region28: #{tpu_custom_call.1} parent=15 // pred_fallthru
          _
        // Predicated region
        $region29: #{tpu_custom_call.1} parent=15 // pred_check
          %p236 = pneg %p120
        $region30: #{tpu_custom_call.1} parent=15 // pred_check_branch
          %238 = sbr.rel (%p236) target = $region32
        $region31: #{tpu_custom_call.1} parent=15 // pred_region
          %s239 = sand.u32 %s110, 1
          %s240 = scalar_lea.sflag [#allocation9], %s239
          %s241 = sand.u32 %s110, 1
          %s242 = smul.addr %s241, 2
          %s243 = scalar_lea.vmem [#allocation8], %s242
          %s244 = smul.u32 2, %s22
          %246 = vsyncadd %s240, 0
          %s247 = scalar_lea.hbm %s3, %s244
          %s248 = sshll.u32 %s247, 4
          %s249 = int_to_ptr.hbm [resolvable:$true] %s248
          %s250 = sshll.u32 %s243, 4
          %s251 = int_to_ptr.vmem [resolvable:$true] %s250
          %256 = dma.hbm_to_vmem [thread:$0]  %s249, 32, %s251, %s240, 16, 16, 1
        $region32: #{tpu_custom_call.1} parent=15 // pred_fallthru
          _
      $region16: #{tpu_custom_call.1} parent=5 // pred_fallthru
        _
      %p257 = scmp.le.s32.totalorder 1, %s22
      %p258 = scmp.lt.s32.totalorder %s22, 3
      %p259 = pnand %p257, %p258
      %p260 = pneg %p259
      // Predicated region
      $region33: #{tpu_custom_call.1} parent=5 // pred_check
        _
      $region34: #{tpu_custom_call.1} parent=5 // pred_check_branch
        %262 = sbr.rel (%p259) target = $region36
      $region35: #{tpu_custom_call.1} parent=5 // pred_region
        %s263 = ssub.s32 %s22, 1
        %s264 = sand.u32 %s35, 1
        %s265 = scalar_lea.sflag [#allocation3], %s264
        %s266 = sand.u32 %s35, 1
        %s267 = smul.addr %s266, 8
        %s268 = scalar_lea.vmem [#allocation2], %s267
        // Predicated region
        $region37: #{tpu_custom_call.1} parent=35 // pred_check
          %p269 = pneg %p48
        $region38: #{tpu_custom_call.1} parent=35 // pred_check_branch
          %271 = sbr.rel (%p269) target = $region40
        $region39: #{tpu_custom_call.1} parent=35 // pred_region
          %273 = dma.done %s265, 128
        $region40: #{tpu_custom_call.1} parent=35 // pred_fallthru
          _
        %s274 = sand.u32 %s27, 1
        %s275 = scalar_lea.sflag [#allocation6], %s274
        %s276 = sand.u32 %s61, 1
        %s277 = smul.addr %s276, 8
        %s278 = scalar_lea.vmem [#allocation5], %s277
        // Predicated region
        $region41: #{tpu_custom_call.1} parent=35 // pred_check
          %p279 = pneg %p74
        $region42: #{tpu_custom_call.1} parent=35 // pred_check_branch
          %281 = sbr.rel (%p279) target = $region44
        $region43: #{tpu_custom_call.1} parent=35 // pred_region
          %283 = dma.done %s275, 128
        $region44: #{tpu_custom_call.1} parent=35 // pred_fallthru
          _
        %s284 = sand.u32 %s27, 1
        %s285 = scalar_lea.sflag [#allocation6], %s284
        %s286 = sand.u32 %s87, 1
        %s287 = smul.addr %s286, 2
        %s288 = scalar_lea.vmem [#allocation7], %s287
        // Predicated region
        $region45: #{tpu_custom_call.1} parent=35 // pred_check
          %p289 = pneg %p100
        $region46: #{tpu_custom_call.1} parent=35 // pred_check_branch
          %291 = sbr.rel (%p289) target = $region48
        $region47: #{tpu_custom_call.1} parent=35 // pred_region
          %293 = dma.done %s285, 32
        $region48: #{tpu_custom_call.1} parent=35 // pred_fallthru
          _
        %s294 = sand.u32 %s113, 1
        %s295 = scalar_lea.sflag [#allocation9], %s294
        %s296 = sand.u32 %s113, 1
        %s297 = smul.addr %s296, 2
        %s298 = scalar_lea.vmem [#allocation8], %s297
        // Predicated region
        $region49: #{tpu_custom_call.1} parent=35 // pred_check
          %p299 = pneg %p126
        $region50: #{tpu_custom_call.1} parent=35 // pred_check_branch
          %301 = sbr.rel (%p299) target = $region52
        $region51: #{tpu_custom_call.1} parent=35 // pred_region
          %303 = dma.done %s295, 32
        $region52: #{tpu_custom_call.1} parent=35 // pred_fallthru
          _
        %s304 = sand.u32 %s35, 1
        %s305 = scalar_lea.sflag [#allocation3], %s304
        %s306 = sand.u32 %s35, 1
        %s307 = smul.addr %s306, 8
        %s308 = scalar_lea.vmem [#allocation2], %s307
        %p309 = pneg %p48
        %p310 = pneg %p45
        %s311 = sand.u32 %s27, 1
        %s312 = scalar_lea.sflag [#allocation6], %s311
        %s313 = sand.u32 %s61, 1
        %s314 = smul.addr %s313, 8
        %s315 = scalar_lea.vmem [#allocation5], %s314
        %p316 = pneg %p74
        %p317 = pneg %p71
        %s318 = sand.u32 %s27, 1
        %s319 = scalar_lea.sflag [#allocation6], %s318
        %s320 = sand.u32 %s87, 1
        %s321 = smul.addr %s320, 2
        %s322 = scalar_lea.vmem [#allocation7], %s321
        %p323 = pneg %p100
        %p324 = pneg %p97
        %s325 = sand.u32 %s113, 1
        %s326 = scalar_lea.sflag [#allocation9], %s325
        %s327 = sand.u32 %s113, 1
        %s328 = smul.addr %s327, 2
        %s329 = scalar_lea.vmem [#allocation8], %s328
        %p330 = pneg %p126
        %p331 = pneg %p123
        %p332 = pneg %p152
        %p333 = pneg %p149
        %s334 = sand.u32 %s139, 1
        %s335 = scalar_lea.sflag [#allocation4], %s334
        %s336 = sand.u32 %s139, 1
        %s337 = scalar_lea.vmem [#allocation10], %s336
        %s338 = smul.u32 2, %s27
        %s339 = smul.u32 2, %s27
        %s340 = smul.u32 2, %s27
        %s341 = smul.u32 2, %s27
        %v342 = vld [vmem:[%s268] sm:$0xf]
        %v343 = vld [vmem:[%s268 + $0x4] sm:$0xf]
        %v344 = vld [vmem:[%s278] sm:$0xf]
        %v345 = vld [vmem:[%s278 + $0x4] sm:$0xf]
        %v346 = vld [vmem:[%s288] sm:$0x1]
        %v347 = vld [vmem:[%s288 + $0x1] sm:$0x1]
        %v348 = vld [vmem:[%s298] sm:$0x1]
        %v349 = vld [vmem:[%s298 + $0x1] sm:$0x1]
        %350 = vxpose.xlu0.b32.start [1/16] %v342, 128
        %351 = vxpose.xlu0.b32.cont [2/16] 0.0, 128
        %352 = vxpose.xlu0.b32.cont [3/16] 0.0, 128
        %353 = vxpose.xlu0.b32.cont [4/16] 0.0, 128
        %354 = vxpose.xlu0.b32.cont [5/16] 0.0, 128
        %355 = vxpose.xlu0.b32.cont [6/16] 0.0, 128
        %356 = vxpose.xlu0.b32.cont [7/16] 0.0, 128
        %357 = vxpose.xlu0.b32.cont [8/16] 0.0, 128
        %358 = vxpose.xlu0.b32.cont [9/16] 0.0, 128
        %359 = vxpose.xlu0.b32.cont [10/16] 0.0, 128
        %360 = vxpose.xlu0.b32.cont [11/16] 0.0, 128
        %361 = vxpose.xlu0.b32.cont [12/16] 0.0, 128
        %362 = vxpose.xlu0.b32.cont [13/16] 0.0, 128
        %363 = vxpose.xlu0.b32.cont [14/16] 0.0, 128
        %364 = vxpose.xlu0.b32.cont [15/16] 0.0, 128
        %365 = vxpose.xlu0.b32.end [16/16] 0.0, 128
        %v366 = vpop.trf.xlu0
        %v367 = vpop.trf.xlu0
        %v368 = vpop.trf.xlu0
        %v369 = vpop.trf.xlu0
        %v370 = vpop.trf.xlu0
        %v371 = vpop.trf.xlu0
        %v372 = vpop.trf.xlu0
        %v373 = vpop.trf.xlu0
        %v374 = vpop.trf.xlu0
        %v375 = vpop.trf.xlu0
        %v376 = vpop.trf.xlu0
        %v377 = vpop.trf.xlu0
        %v378 = vpop.trf.xlu0
        %v379 = vpop.trf.xlu0
        %v380 = vpop.trf.xlu0
        %v381 = vpop.trf.xlu0
        %vm382 = vcmask 31744
        %v384 = vsel %vm382, %v366, 0
        %v387 = vsel %vm382, %v367, 0
        %v390 = vsel %vm382, %v368, 0
        %v393 = vsel %vm382, %v369, 0
        %v396 = vsel %vm382, %v370, 0
        %v399 = vsel %vm382, %v371, 0
        %v402 = vsel %vm382, %v372, 0
        %v405 = vsel %vm382, %v373, 0
        %v408 = vsel %vm382, %v374, 0
        %v411 = vsel %vm382, %v375, 0
        %v414 = vsel %vm382, %v376, 0
        %v417 = vsel %vm382, %v377, 0
        %v420 = vsel %vm382, %v378, 0
        %v423 = vsel %vm382, %v379, 0
        %v426 = vsel %vm382, %v380, 0
        %v429 = vsel %vm382, %v381, 0
        %vm431 = vcmask 1043456
        %v433 = vsel %vm431, %v344, 0
        %435 = vmatpush.msra.mxu0 0.0
        %436 = vmatpush.msra.mxu0 0.0
        %437 = vmatpush.msra.mxu0 0.0
        %438 = vmatpush.msra.mxu0 0.0
        %439 = vmatpush.msra.mxu0 0.0
        %440 = vmatpush.msra.mxu0 0.0
        %441 = vmatpush.msra.mxu0 0.0
        %442 = vmatpush.msra.mxu0 0.0
        %443 = vmatpush.msra.mxu0 0.0
        %444 = vmatpush.msra.mxu0 0.0
        %445 = vmatpush.msra.mxu0 0.0
        %446 = vmatpush.msra.mxu0 0.0
        %447 = vmatpush.msra.mxu0 0.0
        %448 = vmatpush.msra.mxu0 0.0
        %449 = vmatpush.msra.mxu0 0.0
        %450 = vmatpush.msra.mxu0 %v433
        %451 = vmatmul.f32.gmra.mxu0 %v384
        %v452 = vpop.f32.mrf.mxu0
        %v453 = vadd.f32 0.0, %v452
        %454 = vmatmul.f32.gmra.mxu0 %v387
        %v455 = vpop.f32.mrf.mxu0
        %v456 = vadd.f32 0.0, %v455
        %457 = vmatmul.f32.gmra.mxu0 %v390
        %v458 = vpop.f32.mrf.mxu0
        %v459 = vadd.f32 0.0, %v458
        %460 = vmatmul.f32.gmra.mxu0 %v393
        %v461 = vpop.f32.mrf.mxu0
        %v462 = vadd.f32 0.0, %v461
        %463 = vmatmul.f32.gmra.mxu0 %v396
        %v464 = vpop.f32.mrf.mxu0
        %v465 = vadd.f32 0.0, %v464
        %466 = vmatmul.f32.gmra.mxu0 %v399
        %v467 = vpop.f32.mrf.mxu0
        %v468 = vadd.f32 0.0, %v467
        %469 = vmatmul.f32.gmra.mxu0 %v402
        %v470 = vpop.f32.mrf.mxu0
        %v471 = vadd.f32 0.0, %v470
        %472 = vmatmul.f32.gmra.mxu0 %v405
        %v473 = vpop.f32.mrf.mxu0
        %v474 = vadd.f32 0.0, %v473
        %475 = vmatmul.f32.gmra.mxu0 %v408
        %v476 = vpop.f32.mrf.mxu0
        %v477 = vadd.f32 0.0, %v476
        %478 = vmatmul.f32.gmra.mxu0 %v411
        %v479 = vpop.f32.mrf.mxu0
        %v480 = vadd.f32 0.0, %v479
        %481 = vmatmul.f32.gmra.mxu0 %v414
        %v482 = vpop.f32.mrf.mxu0
        %v483 = vadd.f32 0.0, %v482
        %484 = vmatmul.f32.gmra.mxu0 %v417
        %v485 = vpop.f32.mrf.mxu0
        %v486 = vadd.f32 0.0, %v485
        %487 = vmatmul.f32.gmra.mxu0 %v420
        %v488 = vpop.f32.mrf.mxu0
        %v489 = vadd.f32 0.0, %v488
        %490 = vmatmul.f32.gmra.mxu0 %v423
        %v491 = vpop.f32.mrf.mxu0
        %v492 = vadd.f32 0.0, %v491
        %493 = vmatmul.f32.gmra.mxu0 %v426
        %v494 = vpop.f32.mrf.mxu0
        %v495 = vadd.f32 0.0, %v494
        %496 = vmatmul.f32.gmra.mxu0 %v429
        %v497 = vpop.f32.mrf.mxu0
        %v498 = vadd.f32 0.0, %v497
        %499 = vdwg.mxu0
        %500 = vxpose.xlu0.b32.start [1/16] %v343, 128
        %501 = vxpose.xlu0.b32.cont [2/16] 0.0, 128
        %502 = vxpose.xlu0.b32.cont [3/16] 0.0, 128
        %503 = vxpose.xlu0.b32.cont [4/16] 0.0, 128
        %504 = vxpose.xlu0.b32.cont [5/16] 0.0, 128
        %505 = vxpose.xlu0.b32.cont [6/16] 0.0, 128
        %506 = vxpose.xlu0.b32.cont [7/16] 0.0, 128
        %507 = vxpose.xlu0.b32.cont [8/16] 0.0, 128
        %508 = vxpose.xlu0.b32.cont [9/16] 0.0, 128
        %509 = vxpose.xlu0.b32.cont [10/16] 0.0, 128
        %510 = vxpose.xlu0.b32.cont [11/16] 0.0, 128
        %511 = vxpose.xlu0.b32.cont [12/16] 0.0, 128
        %512 = vxpose.xlu0.b32.cont [13/16] 0.0, 128
        %513 = vxpose.xlu0.b32.cont [14/16] 0.0, 128
        %514 = vxpose.xlu0.b32.cont [15/16] 0.0, 128
        %515 = vxpose.xlu0.b32.end [16/16] 0.0, 128
        %v516 = vpop.trf.xlu0
        %v517 = vpop.trf.xlu0
        %v518 = vpop.trf.xlu0
        %v519 = vpop.trf.xlu0
        %v520 = vpop.trf.xlu0
        %v521 = vpop.trf.xlu0
        %v522 = vpop.trf.xlu0
        %v523 = vpop.trf.xlu0
        %v524 = vpop.trf.xlu0
        %v525 = vpop.trf.xlu0
        %v526 = vpop.trf.xlu0
        %v527 = vpop.trf.xlu0
        %v528 = vpop.trf.xlu0
        %v529 = vpop.trf.xlu0
        %v530 = vpop.trf.xlu0
        %v531 = vpop.trf.xlu0
        %v533 = vsel %vm382, %v516, 0
        %v536 = vsel %vm382, %v517, 0
        %v539 = vsel %vm382, %v518, 0
        %v542 = vsel %vm382, %v519, 0
        %v545 = vsel %vm382, %v520, 0
        %v548 = vsel %vm382, %v521, 0
        %v551 = vsel %vm382, %v522, 0
        %v554 = vsel %vm382, %v523, 0
        %v557 = vsel %vm382, %v524, 0
        %v560 = vsel %vm382, %v525, 0
        %v563 = vsel %vm382, %v526, 0
        %v566 = vsel %vm382, %v527, 0
        %v569 = vsel %vm382, %v528, 0
        %v572 = vsel %vm382, %v529, 0
        %v575 = vsel %vm382, %v530, 0
        %v578 = vsel %vm382, %v531, 0
        %v581 = vsel %vm431, %v345, 0
        %583 = vmatpush.msra.mxu0 0.0
        %584 = vmatpush.msra.mxu0 0.0
        %585 = vmatpush.msra.mxu0 0.0
        %586 = vmatpush.msra.mxu0 0.0
        %587 = vmatpush.msra.mxu0 0.0
        %588 = vmatpush.msra.mxu0 0.0
        %589 = vmatpush.msra.mxu0 0.0
        %590 = vmatpush.msra.mxu0 0.0
        %591 = vmatpush.msra.mxu0 0.0
        %592 = vmatpush.msra.mxu0 0.0
        %593 = vmatpush.msra.mxu0 0.0
        %594 = vmatpush.msra.mxu0 0.0
        %595 = vmatpush.msra.mxu0 0.0
        %596 = vmatpush.msra.mxu0 0.0
        %597 = vmatpush.msra.mxu0 0.0
        %598 = vmatpush.msra.mxu0 %v581
        %599 = vmatmul.f32.gmra.mxu0 %v533
        %v600 = vpop.f32.mrf.mxu0
        %v601 = vadd.f32 0.0, %v600
        %602 = vmatmul.f32.gmra.mxu0 %v536
        %v603 = vpop.f32.mrf.mxu0
        %v604 = vadd.f32 0.0, %v603
        %605 = vmatmul.f32.gmra.mxu0 %v539
        %v606 = vpop.f32.mrf.mxu0
        %v607 = vadd.f32 0.0, %v606
        %608 = vmatmul.f32.gmra.mxu0 %v542
        %v609 = vpop.f32.mrf.mxu0
        %v610 = vadd.f32 0.0, %v609
        %611 = vmatmul.f32.gmra.mxu0 %v545
        %v612 = vpop.f32.mrf.mxu0
        %v613 = vadd.f32 0.0, %v612
        %614 = vmatmul.f32.gmra.mxu0 %v548
        %v615 = vpop.f32.mrf.mxu0
        %v616 = vadd.f32 0.0, %v615
        %617 = vmatmul.f32.gmra.mxu0 %v551
        %v618 = vpop.f32.mrf.mxu0
        %v619 = vadd.f32 0.0, %v618
        %620 = vmatmul.f32.gmra.mxu0 %v554
        %v621 = vpop.f32.mrf.mxu0
        %v622 = vadd.f32 0.0, %v621
        %623 = vmatmul.f32.gmra.mxu0 %v557
        %v624 = vpop.f32.mrf.mxu0
        %v625 = vadd.f32 0.0, %v624
        %626 = vmatmul.f32.gmra.mxu0 %v560
        %v627 = vpop.f32.mrf.mxu0
        %v628 = vadd.f32 0.0, %v627
        %629 = vmatmul.f32.gmra.mxu0 %v563
        %v630 = vpop.f32.mrf.mxu0
        %v631 = vadd.f32 0.0, %v630
        %632 = vmatmul.f32.gmra.mxu0 %v566
        %v633 = vpop.f32.mrf.mxu0
        %v634 = vadd.f32 0.0, %v633
        %635 = vmatmul.f32.gmra.mxu0 %v569
        %v636 = vpop.f32.mrf.mxu0
        %v637 = vadd.f32 0.0, %v636
        %638 = vmatmul.f32.gmra.mxu0 %v572
        %v639 = vpop.f32.mrf.mxu0
        %v640 = vadd.f32 0.0, %v639
        %641 = vmatmul.f32.gmra.mxu0 %v575
        %v642 = vpop.f32.mrf.mxu0
        %v643 = vadd.f32 0.0, %v642
        %644 = vmatmul.f32.gmra.mxu0 %v578
        %v645 = vpop.f32.mrf.mxu0
        %v646 = vadd.f32 0.0, %v645
        %647 = vdwg.mxu0
        %v648 = vand.u32 2147483647, %v453
        %v649 = vand.u32 2147483647, %v456
        %v650 = vand.u32 2147483647, %v459
        %v651 = vand.u32 2147483647, %v462
        %v652 = vand.u32 2147483647, %v465
        %v653 = vand.u32 2147483647, %v468
        %v654 = vand.u32 2147483647, %v471
        %v655 = vand.u32 2147483647, %v474
        %v656 = vand.u32 2147483647, %v477
        %v657 = vand.u32 2147483647, %v480
        %v658 = vand.u32 2147483647, %v483
        %v659 = vand.u32 2147483647, %v486
        %v660 = vand.u32 2147483647, %v489
        %v661 = vand.u32 2147483647, %v492
        %v662 = vand.u32 2147483647, %v495
        %v663 = vand.u32 2147483647, %v498
        %v664 = vand.u32 2147483647, %v601
        %v665 = vand.u32 2147483647, %v604
        %v666 = vand.u32 2147483647, %v607
        %v667 = vand.u32 2147483647, %v610
        %v668 = vand.u32 2147483647, %v613
        %v669 = vand.u32 2147483647, %v616
        %v670 = vand.u32 2147483647, %v619
        %v671 = vand.u32 2147483647, %v622
        %v672 = vand.u32 2147483647, %v625
        %v673 = vand.u32 2147483647, %v628
        %v674 = vand.u32 2147483647, %v631
        %v675 = vand.u32 2147483647, %v634
        %v676 = vand.u32 2147483647, %v637
        %v677 = vand.u32 2147483647, %v640
        %v678 = vand.u32 2147483647, %v643
        %v679 = vand.u32 2147483647, %v646
        %v680 = vmax.f32 %v648, 0.0
        %v681 = vmax.f32 %v649, 0.0
        %v682 = vmax.f32 %v650, 0.0
        %v683 = vmax.f32 %v651, 0.0
        %v684 = vmax.f32 %v652, 0.0
        %v685 = vmax.f32 %v653, 0.0
        %v686 = vmax.f32 %v654, 0.0
        %v687 = vmax.f32 %v655, 0.0
        %v688 = vmax.f32 %v656, 0.0
        %v689 = vmax.f32 %v657, 0.0
        %v690 = vmax.f32 %v658, 0.0
        %v691 = vmax.f32 %v659, 0.0
        %v692 = vmax.f32 %v660, 0.0
        %v693 = vmax.f32 %v661, 0.0
        %v694 = vmax.f32 %v662, 0.0
        %v695 = vmax.f32 %v663, 0.0
        %v696 = vmax.f32 %v664, 0.0
        %v697 = vmax.f32 %v665, 0.0
        %v698 = vmax.f32 %v666, 0.0
        %v699 = vmax.f32 %v667, 0.0
        %v700 = vmax.f32 %v668, 0.0
        %v701 = vmax.f32 %v669, 0.0
        %v702 = vmax.f32 %v670, 0.0
        %v703 = vmax.f32 %v671, 0.0
        %v704 = vmax.f32 %v672, 0.0
        %v705 = vmax.f32 %v673, 0.0
        %v706 = vmax.f32 %v674, 0.0
        %v707 = vmax.f32 %v675, 0.0
        %v708 = vmax.f32 %v676, 0.0
        %v709 = vmax.f32 %v677, 0.0
        %v710 = vmax.f32 %v678, 0.0
        %v711 = vmax.f32 %v679, 0.0
        %v712 = vmin.f32 %v680, 0.9999999
        %v713 = vmin.f32 %v681, 0.9999999
        %v714 = vmin.f32 %v682, 0.9999999
        %v715 = vmin.f32 %v683, 0.9999999
        %v716 = vmin.f32 %v684, 0.9999999
        %v717 = vmin.f32 %v685, 0.9999999
        %v718 = vmin.f32 %v686, 0.9999999
        %v719 = vmin.f32 %v687, 0.9999999
        %v720 = vmin.f32 %v688, 0.9999999
        %v721 = vmin.f32 %v689, 0.9999999
        %v722 = vmin.f32 %v690, 0.9999999
        %v723 = vmin.f32 %v691, 0.9999999
        %v724 = vmin.f32 %v692, 0.9999999
        %v725 = vmin.f32 %v693, 0.9999999
        %v726 = vmin.f32 %v694, 0.9999999
        %v727 = vmin.f32 %v695, 0.9999999
        %v728 = vmin.f32 %v696, 0.9999999
        %v729 = vmin.f32 %v697, 0.9999999
        %v730 = vmin.f32 %v698, 0.9999999
        %v731 = vmin.f32 %v699, 0.9999999
        %v732 = vmin.f32 %v700, 0.9999999
        %v733 = vmin.f32 %v701, 0.9999999
        %v734 = vmin.f32 %v702, 0.9999999
        %v735 = vmin.f32 %v703, 0.9999999
        %v736 = vmin.f32 %v704, 0.9999999
        %v737 = vmin.f32 %v705, 0.9999999
        %v738 = vmin.f32 %v706, 0.9999999
        %v739 = vmin.f32 %v707, 0.9999999
        %v740 = vmin.f32 %v708, 0.9999999
        %v741 = vmin.f32 %v709, 0.9999999
        %v742 = vmin.f32 %v710, 0.9999999
        %v743 = vmin.f32 %v711, 0.9999999
        %v744 = vmul.f32 %v712, -0.0012624911
        %v745 = vmul.f32 %v713, -0.0012624911
        %v746 = vmul.f32 %v714, -0.0012624911
        %v747 = vmul.f32 %v715, -0.0012624911
        %v748 = vmul.f32 %v716, -0.0012624911
        %v749 = vmul.f32 %v717, -0.0012624911
        %v750 = vmul.f32 %v718, -0.0012624911
        %v751 = vmul.f32 %v719, -0.0012624911
        %v752 = vmul.f32 %v720, -0.0012624911
        %v753 = vmul.f32 %v721, -0.0012624911
        %v754 = vmul.f32 %v722, -0.0012624911
        %v755 = vmul.f32 %v723, -0.0012624911
        %v756 = vmul.f32 %v724, -0.0012624911
        %v757 = vmul.f32 %v725, -0.0012624911
        %v758 = vmul.f32 %v726, -0.0012624911
        %v759 = vmul.f32 %v727, -0.0012624911
        %v760 = vmul.f32 %v728, -0.0012624911
        %v761 = vmul.f32 %v729, -0.0012624911
        %v762 = vmul.f32 %v730, -0.0012624911
        %v763 = vmul.f32 %v731, -0.0012624911
        %v764 = vmul.f32 %v732, -0.0012624911
        %v765 = vmul.f32 %v733, -0.0012624911
        %v766 = vmul.f32 %v734, -0.0012624911
        %v767 = vmul.f32 %v735, -0.0012624911
        %v768 = vmul.f32 %v736, -0.0012624911
        %v769 = vmul.f32 %v737, -0.0012624911
        %v770 = vmul.f32 %v738, -0.0012624911
        %v771 = vmul.f32 %v739, -0.0012624911
        %v772 = vmul.f32 %v740, -0.0012624911
        %v773 = vmul.f32 %v741, -0.0012624911
        %v774 = vmul.f32 %v742, -0.0012624911
        %v775 = vmul.f32 %v743, -0.0012624911
        %v776 = vadd.f32 %v744, 0.00667009
        %v777 = vadd.f32 %v745, 0.00667009
        %v778 = vadd.f32 %v746, 0.00667009
        %v779 = vadd.f32 %v747, 0.00667009
        %v780 = vadd.f32 %v748, 0.00667009
        %v781 = vadd.f32 %v749, 0.00667009
        %v782 = vadd.f32 %v750, 0.00667009
        %v783 = vadd.f32 %v751, 0.00667009
        %v784 = vadd.f32 %v752, 0.00667009
        %v785 = vadd.f32 %v753, 0.00667009
        %v786 = vadd.f32 %v754, 0.00667009
        %v787 = vadd.f32 %v755, 0.00667009
        %v788 = vadd.f32 %v756, 0.00667009
        %v789 = vadd.f32 %v757, 0.00667009
        %v790 = vadd.f32 %v758, 0.00667009
        %v791 = vadd.f32 %v759, 0.00667009
        %v792 = vadd.f32 %v760, 0.00667009
        %v793 = vadd.f32 %v761, 0.00667009
        %v794 = vadd.f32 %v762, 0.00667009
        %v795 = vadd.f32 %v763, 0.00667009
        %v796 = vadd.f32 %v764, 0.00667009
        %v797 = vadd.f32 %v765, 0.00667009
        %v798 = vadd.f32 %v766, 0.00667009
        %v799 = vadd.f32 %v767, 0.00667009
        %v800 = vadd.f32 %v768, 0.00667009
        %v801 = vadd.f32 %v769, 0.00667009
        %v802 = vadd.f32 %v770, 0.00667009
        %v803 = vadd.f32 %v771, 0.00667009
        %v804 = vadd.f32 %v772, 0.00667009
        %v805 = vadd.f32 %v773, 0.00667009
        %v806 = vadd.f32 %v774, 0.00667009
        %v807 = vadd.f32 %v775, 0.00667009
        %v808 = vmul.f32 %v776, %v712
        %v809 = vmul.f32 %v777, %v713
        %v810 = vmul.f32 %v778, %v714
        %v811 = vmul.f32 %v779, %v715
        %v812 = vmul.f32 %v780, %v716
        %v813 = vmul.f32 %v781, %v717
        %v814 = vmul.f32 %v782, %v718
        %v815 = vmul.f32 %v783, %v719
        %v816 = vmul.f32 %v784, %v720
        %v817 = vmul.f32 %v785, %v721
        %v818 = vmul.f32 %v786, %v722
        %v819 = vmul.f32 %v787, %v723
        %v820 = vmul.f32 %v788, %v724
        %v821 = vmul.f32 %v789, %v725
        %v822 = vmul.f32 %v790, %v726
        %v823 = vmul.f32 %v791, %v727
        %v824 = vmul.f32 %v792, %v728
        %v825 = vmul.f32 %v793, %v729
        %v826 = vmul.f32 %v794, %v730
        %v827 = vmul.f32 %v795, %v731
        %v828 = vmul.f32 %v796, %v732
        %v829 = vmul.f32 %v797, %v733
        %v830 = vmul.f32 %v798, %v734
        %v831 = vmul.f32 %v799, %v735
        %v832 = vmul.f32 %v800, %v736
        %v833 = vmul.f32 %v801, %v737
        %v834 = vmul.f32 %v802, %v738
        %v835 = vmul.f32 %v803, %v739
        %v836 = vmul.f32 %v804, %v740
        %v837 = vmul.f32 %v805, %v741
        %v838 = vmul.f32 %v806, %v742
        %v839 = vmul.f32 %v807, %v743
        %v840 = vadd.f32 %v808, -0.017088126
        %v841 = vadd.f32 %v809, -0.017088126
        %v842 = vadd.f32 %v810, -0.017088126
        %v843 = vadd.f32 %v811, -0.017088126
        %v844 = vadd.f32 %v812, -0.017088126
        %v845 = vadd.f32 %v813, -0.017088126
        %v846 = vadd.f32 %v814, -0.017088126
        %v847 = vadd.f32 %v815, -0.017088126
        %v848 = vadd.f32 %v816, -0.017088126
        %v849 = vadd.f32 %v817, -0.017088126
        %v850 = vadd.f32 %v818, -0.017088126
        %v851 = vadd.f32 %v819, -0.017088126
        %v852 = vadd.f32 %v820, -0.017088126
        %v853 = vadd.f32 %v821, -0.017088126
        %v854 = vadd.f32 %v822, -0.017088126
        %v855 = vadd.f32 %v823, -0.017088126
        %v856 = vadd.f32 %v824, -0.017088126
        %v857 = vadd.f32 %v825, -0.017088126
        %v858 = vadd.f32 %v826, -0.017088126
        %v859 = vadd.f32 %v827, -0.017088126
        %v860 = vadd.f32 %v828, -0.017088126
        %v861 = vadd.f32 %v829, -0.017088126
        %v862 = vadd.f32 %v830, -0.017088126
        %v863 = vadd.f32 %v831, -0.017088126
        %v864 = vadd.f32 %v832, -0.017088126
        %v865 = vadd.f32 %v833, -0.017088126
        %v866 = vadd.f32 %v834, -0.017088126
        %v867 = vadd.f32 %v835, -0.017088126
        %v868 = vadd.f32 %v836, -0.017088126
        %v869 = vadd.f32 %v837, -0.017088126
        %v870 = vadd.f32 %v838, -0.017088126
        %v871 = vadd.f32 %v839, -0.017088126
        %v872 = vmul.f32 %v840, %v712
        %v873 = vmul.f32 %v841, %v713
        %v874 = vmul.f32 %v842, %v714
        %v875 = vmul.f32 %v843, %v715
        %v876 = vmul.f32 %v844, %v716
        %v877 = vmul.f32 %v845, %v717
        %v878 = vmul.f32 %v846, %v718
        %v879 = vmul.f32 %v847, %v719
        %v880 = vmul.f32 %v848, %v720
        %v881 = vmul.f32 %v849, %v721
        %v882 = vmul.f32 %v850, %v722
        %v883 = vmul.f32 %v851, %v723
        %v884 = vmul.f32 %v852, %v724
        %v885 = vmul.f32 %v853, %v725
        %v886 = vmul.f32 %v854, %v726
        %v887 = vmul.f32 %v855, %v727
        %v888 = vmul.f32 %v856, %v728
        %v889 = vmul.f32 %v857, %v729
        %v890 = vmul.f32 %v858, %v730
        %v891 = vmul.f32 %v859, %v731
        %v892 = vmul.f32 %v860, %v732
        %v893 = vmul.f32 %v861, %v733
        %v894 = vmul.f32 %v862, %v734
        %v895 = vmul.f32 %v863, %v735
        %v896 = vmul.f32 %v864, %v736
        %v897 = vmul.f32 %v865, %v737
        %v898 = vmul.f32 %v866, %v738
        %v899 = vmul.f32 %v867, %v739
        %v900 = vmul.f32 %v868, %v740
        %v901 = vmul.f32 %v869, %v741
        %v902 = vmul.f32 %v870, %v742
        %v903 = vmul.f32 %v871, %v743
        %v904 = vadd.f32 %v872, 0.03089188
        %v905 = vadd.f32 %v873, 0.03089188
        %v906 = vadd.f32 %v874, 0.03089188
        %v907 = vadd.f32 %v875, 0.03089188
        %v908 = vadd.f32 %v876, 0.03089188
        %v909 = vadd.f32 %v877, 0.03089188
        %v910 = vadd.f32 %v878, 0.03089188
        %v911 = vadd.f32 %v879, 0.03089188
        %v912 = vadd.f32 %v880, 0.03089188
        %v913 = vadd.f32 %v881, 0.03089188
        %v914 = vadd.f32 %v882, 0.03089188
        %v915 = vadd.f32 %v883, 0.03089188
        %v916 = vadd.f32 %v884, 0.03089188
        %v917 = vadd.f32 %v885, 0.03089188
        %v918 = vadd.f32 %v886, 0.03089188
        %v919 = vadd.f32 %v887, 0.03089188
        %v920 = vadd.f32 %v888, 0.03089188
        %v921 = vadd.f32 %v889, 0.03089188
        %v922 = vadd.f32 %v890, 0.03089188
        %v923 = vadd.f32 %v891, 0.03089188
        %v924 = vadd.f32 %v892, 0.03089188
        %v925 = vadd.f32 %v893, 0.03089188
        %v926 = vadd.f32 %v894, 0.03089188
        %v927 = vadd.f32 %v895, 0.03089188
        %v928 = vadd.f32 %v896, 0.03089188
        %v929 = vadd.f32 %v897, 0.03089188
        %v930 = vadd.f32 %v898, 0.03089188
        %v931 = vadd.f32 %v899, 0.03089188
        %v932 = vadd.f32 %v900, 0.03089188
        %v933 = vadd.f32 %v901, 0.03089188
        %v934 = vadd.f32 %v902, 0.03089188
        %v935 = vadd.f32 %v903, 0.03089188
        %v936 = vmul.f32 %v904, %v712
        %v937 = vmul.f32 %v905, %v713
        %v938 = vmul.f32 %v906, %v714
        %v939 = vmul.f32 %v907, %v715
        %v940 = vmul.f32 %v908, %v716
        %v941 = vmul.f32 %v909, %v717
        %v942 = vmul.f32 %v910, %v718
        %v943 = vmul.f32 %v911, %v719
        %v944 = vmul.f32 %v912, %v720
        %v945 = vmul.f32 %v913, %v721
        %v946 = vmul.f32 %v914, %v722
        %v947 = vmul.f32 %v915, %v723
        %v948 = vmul.f32 %v916, %v724
        %v949 = vmul.f32 %v917, %v725
        %v950 = vmul.f32 %v918, %v726
        %v951 = vmul.f32 %v919, %v727
        %v952 = vmul.f32 %v920, %v728
        %v953 = vmul.f32 %v921, %v729
        %v954 = vmul.f32 %v922, %v730
        %v955 = vmul.f32 %v923, %v731
        %v956 = vmul.f32 %v924, %v732
        %v957 = vmul.f32 %v925, %v733
        %v958 = vmul.f32 %v926, %v734
        %v959 = vmul.f32 %v927, %v735
        %v960 = vmul.f32 %v928, %v736
        %v961 = vmul.f32 %v929, %v737
        %v962 = vmul.f32 %v930, %v738
        %v963 = vmul.f32 %v931, %v739
        %v964 = vmul.f32 %v932, %v740
        %v965 = vmul.f32 %v933, %v741
        %v966 = vmul.f32 %v934, %v742
        %v967 = vmul.f32 %v935, %v743
        %v968 = vadd.f32 %v936, -0.050174303
        %v969 = vadd.f32 %v937, -0.050174303
        %v970 = vadd.f32 %v938, -0.050174303
        %v971 = vadd.f32 %v939, -0.050174303
        %v972 = vadd.f32 %v940, -0.050174303
        %v973 = vadd.f32 %v941, -0.050174303
        %v974 = vadd.f32 %v942, -0.050174303
        %v975 = vadd.f32 %v943, -0.050174303
        %v976 = vadd.f32 %v944, -0.050174303
        %v977 = vadd.f32 %v945, -0.050174303
        %v978 = vadd.f32 %v946, -0.050174303
        %v979 = vadd.f32 %v947, -0.050174303
        %v980 = vadd.f32 %v948, -0.050174303
        %v981 = vadd.f32 %v949, -0.050174303
        %v982 = vadd.f32 %v950, -0.050174303
        %v983 = vadd.f32 %v951, -0.050174303
        %v984 = vadd.f32 %v952, -0.050174303
        %v985 = vadd.f32 %v953, -0.050174303
        %v986 = vadd.f32 %v954, -0.050174303
        %v987 = vadd.f32 %v955, -0.050174303
        %v988 = vadd.f32 %v956, -0.050174303
        %v989 = vadd.f32 %v957, -0.050174303
        %v990 = vadd.f32 %v958, -0.050174303
        %v991 = vadd.f32 %v959, -0.050174303
        %v992 = vadd.f32 %v960, -0.050174303
        %v993 = vadd.f32 %v961, -0.050174303
        %v994 = vadd.f32 %v962, -0.050174303
        %v995 = vadd.f32 %v963, -0.050174303
        %v996 = vadd.f32 %v964, -0.050174303
        %v997 = vadd.f32 %v965, -0.050174303
        %v998 = vadd.f32 %v966, -0.050174303
        %v999 = vadd.f32 %v967, -0.050174303
        %v1000 = vmul.f32 %v968, %v712
        %v1001 = vmul.f32 %v969, %v713
        %v1002 = vmul.f32 %v970, %v714
        %v1003 = vmul.f32 %v971, %v715
        %v1004 = vmul.f32 %v972, %v716
        %v1005 = vmul.f32 %v973, %v717
        %v1006 = vmul.f32 %v974, %v718
        %v1007 = vmul.f32 %v975, %v719
        %v1008 = vmul.f32 %v976, %v720
        %v1009 = vmul.f32 %v977, %v721
        %v1010 = vmul.f32 %v978, %v722
        %v1011 = vmul.f32 %v979, %v723
        %v1012 = vmul.f32 %v980, %v724
        %v1013 = vmul.f32 %v981, %v725
        %v1014 = vmul.f32 %v982, %v726
        %v1015 = vmul.f32 %v983, %v727
        %v1016 = vmul.f32 %v984, %v728
        %v1017 = vmul.f32 %v985, %v729
        %v1018 = vmul.f32 %v986, %v730
        %v1019 = vmul.f32 %v987, %v731
        %v1020 = vmul.f32 %v988, %v732
        %v1021 = vmul.f32 %v989, %v733
        %v1022 = vmul.f32 %v990, %v734
        %v1023 = vmul.f32 %v991, %v735
        %v1024 = vmul.f32 %v992, %v736
        %v1025 = vmul.f32 %v993, %v737
        %v1026 = vmul.f32 %v994, %v738
        %v1027 = vmul.f32 %v995, %v739
        %v1028 = vmul.f32 %v996, %v740
        %v1029 = vmul.f32 %v997, %v741
        %v1030 = vmul.f32 %v998, %v742
        %v1031 = vmul.f32 %v999, %v743
        %v1032 = vadd.f32 %v1000, 0.08897899
        %v1033 = vadd.f32 %v1001, 0.08897899
        %v1034 = vadd.f32 %v1002, 0.08897899
        %v1035 = vadd.f32 %v1003, 0.08897899
        %v1036 = vadd.f32 %v1004, 0.08897899
        %v1037 = vadd.f32 %v1005, 0.08897899
        %v1038 = vadd.f32 %v1006, 0.08897899
        %v1039 = vadd.f32 %v1007, 0.08897899
        %v1040 = vadd.f32 %v1008, 0.08897899
        %v1041 = vadd.f32 %v1009, 0.08897899
        %v1042 = vadd.f32 %v1010, 0.08897899
        %v1043 = vadd.f32 %v1011, 0.08897899
        %v1044 = vadd.f32 %v1012, 0.08897899
        %v1045 = vadd.f32 %v1013, 0.08897899
        %v1046 = vadd.f32 %v1014, 0.08897899
        %v1047 = vadd.f32 %v1015, 0.08897899
        %v1048 = vadd.f32 %v1016, 0.08897899
        %v1049 = vadd.f32 %v1017, 0.08897899
        %v1050 = vadd.f32 %v1018, 0.08897899
        %v1051 = vadd.f32 %v1019, 0.08897899
        %v1052 = vadd.f32 %v1020, 0.08897899
        %v1053 = vadd.f32 %v1021, 0.08897899
        %v1054 = vadd.f32 %v1022, 0.08897899
        %v1055 = vadd.f32 %v1023, 0.08897899
        %v1056 = vadd.f32 %v1024, 0.08897899
        %v1057 = vadd.f32 %v1025, 0.08897899
        %v1058 = vadd.f32 %v1026, 0.08897899
        %v1059 = vadd.f32 %v1027, 0.08897899
        %v1060 = vadd.f32 %v1028, 0.08897899
        %v1061 = vadd.f32 %v1029, 0.08897899
        %v1062 = vadd.f32 %v1030, 0.08897899
        %v1063 = vadd.f32 %v1031, 0.08897899
        %v1064 = vmul.f32 %v1032, %v712
        %v1065 = vmul.f32 %v1033, %v713
        %v1066 = vmul.f32 %v1034, %v714
        %v1067 = vmul.f32 %v1035, %v715
        %v1068 = vmul.f32 %v1036, %v716
        %v1069 = vmul.f32 %v1037, %v717
        %v1070 = vmul.f32 %v1038, %v718
        %v1071 = vmul.f32 %v1039, %v719
        %v1072 = vmul.f32 %v1040, %v720
        %v1073 = vmul.f32 %v1041, %v721
        %v1074 = vmul.f32 %v1042, %v722
        %v1075 = vmul.f32 %v1043, %v723
        %v1076 = vmul.f32 %v1044, %v724
        %v1077 = vmul.f32 %v1045, %v725
        %v1078 = vmul.f32 %v1046, %v726
        %v1079 = vmul.f32 %v1047, %v727
        %v1080 = vmul.f32 %v1048, %v728
        %v1081 = vmul.f32 %v1049, %v729
        %v1082 = vmul.f32 %v1050, %v730
        %v1083 = vmul.f32 %v1051, %v731
        %v1084 = vmul.f32 %v1052, %v732
        %v1085 = vmul.f32 %v1053, %v733
        %v1086 = vmul.f32 %v1054, %v734
        %v1087 = vmul.f32 %v1055, %v735
        %v1088 = vmul.f32 %v1056, %v736
        %v1089 = vmul.f32 %v1057, %v737
        %v1090 = vmul.f32 %v1058, %v738
        %v1091 = vmul.f32 %v1059, %v739
        %v1092 = vmul.f32 %v1060, %v740
        %v1093 = vmul.f32 %v1061, %v741
        %v1094 = vmul.f32 %v1062, %v742
        %v1095 = vmul.f32 %v1063, %v743
        %v1096 = vadd.f32 %v1064, -0.2145988
        %v1097 = vadd.f32 %v1065, -0.2145988
        %v1098 = vadd.f32 %v1066, -0.2145988
        %v1099 = vadd.f32 %v1067, -0.2145988
        %v1100 = vadd.f32 %v1068, -0.2145988
        %v1101 = vadd.f32 %v1069, -0.2145988
        %v1102 = vadd.f32 %v1070, -0.2145988
        %v1103 = vadd.f32 %v1071, -0.2145988
        %v1104 = vadd.f32 %v1072, -0.2145988
        %v1105 = vadd.f32 %v1073, -0.2145988
        %v1106 = vadd.f32 %v1074, -0.2145988
        %v1107 = vadd.f32 %v1075, -0.2145988
        %v1108 = vadd.f32 %v1076, -0.2145988
        %v1109 = vadd.f32 %v1077, -0.2145988
        %v1110 = vadd.f32 %v1078, -0.2145988
        %v1111 = vadd.f32 %v1079, -0.2145988
        %v1112 = vadd.f32 %v1080, -0.2145988
        %v1113 = vadd.f32 %v1081, -0.2145988
        %v1114 = vadd.f32 %v1082, -0.2145988
        %v1115 = vadd.f32 %v1083, -0.2145988
        %v1116 = vadd.f32 %v1084, -0.2145988
        %v1117 = vadd.f32 %v1085, -0.2145988
        %v1118 = vadd.f32 %v1086, -0.2145988
        %v1119 = vadd.f32 %v1087, -0.2145988
        %v1120 = vadd.f32 %v1088, -0.2145988
        %v1121 = vadd.f32 %v1089, -0.2145988
        %v1122 = vadd.f32 %v1090, -0.2145988
        %v1123 = vadd.f32 %v1091, -0.2145988
        %v1124 = vadd.f32 %v1092, -0.2145988
        %v1125 = vadd.f32 %v1093, -0.2145988
        %v1126 = vadd.f32 %v1094, -0.2145988
        %v1127 = vadd.f32 %v1095, -0.2145988
        %v1128 = vmul.f32 %v1096, %v712
        %v1129 = vmul.f32 %v1097, %v713
        %v1130 = vmul.f32 %v1098, %v714
        %v1131 = vmul.f32 %v1099, %v715
        %v1132 = vmul.f32 %v1100, %v716
        %v1133 = vmul.f32 %v1101, %v717
        %v1134 = vmul.f32 %v1102, %v718
        %v1135 = vmul.f32 %v1103, %v719
        %v1136 = vmul.f32 %v1104, %v720
        %v1137 = vmul.f32 %v1105, %v721
        %v1138 = vmul.f32 %v1106, %v722
        %v1139 = vmul.f32 %v1107, %v723
        %v1140 = vmul.f32 %v1108, %v724
        %v1141 = vmul.f32 %v1109, %v725
        %v1142 = vmul.f32 %v1110, %v726
        %v1143 = vmul.f32 %v1111, %v727
        %v1144 = vmul.f32 %v1112, %v728
        %v1145 = vmul.f32 %v1113, %v729
        %v1146 = vmul.f32 %v1114, %v730
        %v1147 = vmul.f32 %v1115, %v731
        %v1148 = vmul.f32 %v1116, %v732
        %v1149 = vmul.f32 %v1117, %v733
        %v1150 = vmul.f32 %v1118, %v734
        %v1151 = vmul.f32 %v1119, %v735
        %v1152 = vmul.f32 %v1120, %v736
        %v1153 = vmul.f32 %v1121, %v737
        %v1154 = vmul.f32 %v1122, %v738
        %v1155 = vmul.f32 %v1123, %v739
        %v1156 = vmul.f32 %v1124, %v740
        %v1157 = vmul.f32 %v1125, %v741
        %v1158 = vmul.f32 %v1126, %v742
        %v1159 = vmul.f32 %v1127, %v743
        %v1160 = vadd.f32 %v1128, 1.5707963
        %v1161 = vadd.f32 %v1129, 1.5707963
        %v1162 = vadd.f32 %v1130, 1.5707963
        %v1163 = vadd.f32 %v1131, 1.5707963
        %v1164 = vadd.f32 %v1132, 1.5707963
        %v1165 = vadd.f32 %v1133, 1.5707963
        %v1166 = vadd.f32 %v1134, 1.5707963
        %v1167 = vadd.f32 %v1135, 1.5707963
        %v1168 = vadd.f32 %v1136, 1.5707963
        %v1169 = vadd.f32 %v1137, 1.5707963
        %v1170 = vadd.f32 %v1138, 1.5707963
        %v1171 = vadd.f32 %v1139, 1.5707963
        %v1172 = vadd.f32 %v1140, 1.5707963
        %v1173 = vadd.f32 %v1141, 1.5707963
        %v1174 = vadd.f32 %v1142, 1.5707963
        %v1175 = vadd.f32 %v1143, 1.5707963
        %v1176 = vadd.f32 %v1144, 1.5707963
        %v1177 = vadd.f32 %v1145, 1.5707963
        %v1178 = vadd.f32 %v1146, 1.5707963
        %v1179 = vadd.f32 %v1147, 1.5707963
        %v1180 = vadd.f32 %v1148, 1.5707963
        %v1181 = vadd.f32 %v1149, 1.5707963
        %v1182 = vadd.f32 %v1150, 1.5707963
        %v1183 = vadd.f32 %v1151, 1.5707963
        %v1184 = vadd.f32 %v1152, 1.5707963
        %v1185 = vadd.f32 %v1153, 1.5707963
        %v1186 = vadd.f32 %v1154, 1.5707963
        %v1187 = vadd.f32 %v1155, 1.5707963
        %v1188 = vadd.f32 %v1156, 1.5707963
        %v1189 = vadd.f32 %v1157, 1.5707963
        %v1190 = vadd.f32 %v1158, 1.5707963
        %v1191 = vadd.f32 %v1159, 1.5707963
        %v1192 = vsub.f32 1.0, %v712
        %v1193 = vsub.f32 1.0, %v713
        %v1194 = vsub.f32 1.0, %v714
        %v1195 = vsub.f32 1.0, %v715
        %v1196 = vsub.f32 1.0, %v716
        %v1197 = vsub.f32 1.0, %v717
        %v1198 = vsub.f32 1.0, %v718
        %v1199 = vsub.f32 1.0, %v719
        %v1200 = vsub.f32 1.0, %v720
        %v1201 = vsub.f32 1.0, %v721
        %v1202 = vsub.f32 1.0, %v722
        %v1203 = vsub.f32 1.0, %v723
        %v1204 = vsub.f32 1.0, %v724
        %v1205 = vsub.f32 1.0, %v725
        %v1206 = vsub.f32 1.0, %v726
        %v1207 = vsub.f32 1.0, %v727
        %v1208 = vsub.f32 1.0, %v728
        %v1209 = vsub.f32 1.0, %v729
        %v1210 = vsub.f32 1.0, %v730
        %v1211 = vsub.f32 1.0, %v731
        %v1212 = vsub.f32 1.0, %v732
        %v1213 = vsub.f32 1.0, %v733
        %v1214 = vsub.f32 1.0, %v734
        %v1215 = vsub.f32 1.0, %v735
        %v1216 = vsub.f32 1.0, %v736
        %v1217 = vsub.f32 1.0, %v737
        %v1218 = vsub.f32 1.0, %v738
        %v1219 = vsub.f32 1.0, %v739
        %v1220 = vsub.f32 1.0, %v740
        %v1221 = vsub.f32 1.0, %v741
        %v1222 = vsub.f32 1.0, %v742
        %v1223 = vsub.f32 1.0, %v743
        %v1224 = vmax.f32 %v1192, 0.0
        %v1225 = vmax.f32 %v1193, 0.0
        %v1226 = vmax.f32 %v1194, 0.0
        %v1227 = vmax.f32 %v1195, 0.0
        %v1228 = vmax.f32 %v1196, 0.0
        %v1229 = vmax.f32 %v1197, 0.0
        %v1230 = vmax.f32 %v1198, 0.0
        %v1231 = vmax.f32 %v1199, 0.0
        %v1232 = vmax.f32 %v1200, 0.0
        %v1233 = vmax.f32 %v1201, 0.0
        %v1234 = vmax.f32 %v1202, 0.0
        %v1235 = vmax.f32 %v1203, 0.0
        %v1236 = vmax.f32 %v1204, 0.0
        %v1237 = vmax.f32 %v1205, 0.0
        %v1238 = vmax.f32 %v1206, 0.0
        %v1239 = vmax.f32 %v1207, 0.0
        %v1240 = vmax.f32 %v1208, 0.0
        %v1241 = vmax.f32 %v1209, 0.0
        %v1242 = vmax.f32 %v1210, 0.0
        %v1243 = vmax.f32 %v1211, 0.0
        %v1244 = vmax.f32 %v1212, 0.0
        %v1245 = vmax.f32 %v1213, 0.0
        %v1246 = vmax.f32 %v1214, 0.0
        %v1247 = vmax.f32 %v1215, 0.0
        %v1248 = vmax.f32 %v1216, 0.0
        %v1249 = vmax.f32 %v1217, 0.0
        %v1250 = vmax.f32 %v1218, 0.0
        %v1251 = vmax.f32 %v1219, 0.0
        %v1252 = vmax.f32 %v1220, 0.0
        %v1253 = vmax.f32 %v1221, 0.0
        %v1254 = vmax.f32 %v1222, 0.0
        %v1255 = vmax.f32 %v1223, 0.0
        %v1256 = vrsqrt.pop %v1224
        %v1257 = vmul.f32 %v1256, %v1224
        %v1258 = vmul.f32 %v1257, %v1256
        %v1259 = vmul.f32 0.5, %v1258
        %v1260 = vsub.f32 1.5, %v1259
        %v1261 = vmul.f32 %v1256, %v1260
        %v1262 = vmul.f32 %v1224, %v1261
        %vm1263 = vcmp.eq.f32.partialorder %v1224, inf
        %v1264 = vsel %vm1263, %v1224, %v1262
        %vm1265 = vcmp.eq.f32.partialorder %v1224, 0.0
        %v1266 = vand.u32 %v1224, 2147483648
        %v1267 = vsel %vm1265, %v1266, %v1264
        %v1268 = vrsqrt.pop %v1225
        %v1269 = vmul.f32 %v1268, %v1225
        %v1270 = vmul.f32 %v1269, %v1268
        %v1271 = vmul.f32 0.5, %v1270
        %v1272 = vsub.f32 1.5, %v1271
        %v1273 = vmul.f32 %v1268, %v1272
        %v1274 = vmul.f32 %v1225, %v1273
        %vm1275 = vcmp.eq.f32.partialorder %v1225, inf
        %v1276 = vsel %vm1275, %v1225, %v1274
        %vm1277 = vcmp.eq.f32.partialorder %v1225, 0.0
        %v1278 = vand.u32 %v1225, 2147483648
        %v1279 = vsel %vm1277, %v1278, %v1276
        %v1280 = vrsqrt.pop %v1226
        %v1281 = vmul.f32 %v1280, %v1226
        %v1282 = vmul.f32 %v1281, %v1280
        %v1283 = vmul.f32 0.5, %v1282
        %v1284 = vsub.f32 1.5, %v1283
        %v1285 = vmul.f32 %v1280, %v1284
        %v1286 = vmul.f32 %v1226, %v1285
        %vm1287 = vcmp.eq.f32.partialorder %v1226, inf
        %v1288 = vsel %vm1287, %v1226, %v1286
        %vm1289 = vcmp.eq.f32.partialorder %v1226, 0.0
        %v1290 = vand.u32 %v1226, 2147483648
        %v1291 = vsel %vm1289, %v1290, %v1288
        %v1292 = vrsqrt.pop %v1227
        %v1293 = vmul.f32 %v1292, %v1227
        %v1294 = vmul.f32 %v1293, %v1292
        %v1295 = vmul.f32 0.5, %v1294
        %v1296 = vsub.f32 1.5, %v1295
        %v1297 = vmul.f32 %v1292, %v1296
        %v1298 = vmul.f32 %v1227, %v1297
        %vm1299 = vcmp.eq.f32.partialorder %v1227, inf
        %v1300 = vsel %vm1299, %v1227, %v1298
        %vm1301 = vcmp.eq.f32.partialorder %v1227, 0.0
        %v1302 = vand.u32 %v1227, 2147483648
        %v1303 = vsel %vm1301, %v1302, %v1300
        %v1304 = vrsqrt.pop %v1228
        %v1305 = vmul.f32 %v1304, %v1228
        %v1306 = vmul.f32 %v1305, %v1304
        %v1307 = vmul.f32 0.5, %v1306
        %v1308 = vsub.f32 1.5, %v1307
        %v1309 = vmul.f32 %v1304, %v1308
        %v1310 = vmul.f32 %v1228, %v1309
        %vm1311 = vcmp.eq.f32.partialorder %v1228, inf
        %v1312 = vsel %vm1311, %v1228, %v1310
        %vm1313 = vcmp.eq.f32.partialorder %v1228, 0.0
        %v1314 = vand.u32 %v1228, 2147483648
        %v1315 = vsel %vm1313, %v1314, %v1312
        %v1316 = vrsqrt.pop %v1229
        %v1317 = vmul.f32 %v1316, %v1229
        %v1318 = vmul.f32 %v1317, %v1316
        %v1319 = vmul.f32 0.5, %v1318
        %v1320 = vsub.f32 1.5, %v1319
        %v1321 = vmul.f32 %v1316, %v1320
        %v1322 = vmul.f32 %v1229, %v1321
        %vm1323 = vcmp.eq.f32.partialorder %v1229, inf
        %v1324 = vsel %vm1323, %v1229, %v1322
        %vm1325 = vcmp.eq.f32.partialorder %v1229, 0.0
        %v1326 = vand.u32 %v1229, 2147483648
        %v1327 = vsel %vm1325, %v1326, %v1324
        %v1328 = vrsqrt.pop %v1230
        %v1329 = vmul.f32 %v1328, %v1230
        %v1330 = vmul.f32 %v1329, %v1328
        %v1331 = vmul.f32 0.5, %v1330
        %v1332 = vsub.f32 1.5, %v1331
        %v1333 = vmul.f32 %v1328, %v1332
        %v1334 = vmul.f32 %v1230, %v1333
        %vm1335 = vcmp.eq.f32.partialorder %v1230, inf
        %v1336 = vsel %vm1335, %v1230, %v1334
        %vm1337 = vcmp.eq.f32.partialorder %v1230, 0.0
        %v1338 = vand.u32 %v1230, 2147483648
        %v1339 = vsel %vm1337, %v1338, %v1336
        %v1340 = vrsqrt.pop %v1231
        %v1341 = vmul.f32 %v1340, %v1231
        %v1342 = vmul.f32 %v1341, %v1340
        %v1343 = vmul.f32 0.5, %v1342
        %v1344 = vsub.f32 1.5, %v1343
        %v1345 = vmul.f32 %v1340, %v1344
        %v1346 = vmul.f32 %v1231, %v1345
        %vm1347 = vcmp.eq.f32.partialorder %v1231, inf
        %v1348 = vsel %vm1347, %v1231, %v1346
        %vm1349 = vcmp.eq.f32.partialorder %v1231, 0.0
        %v1350 = vand.u32 %v1231, 2147483648
        %v1351 = vsel %vm1349, %v1350, %v1348
        %v1352 = vrsqrt.pop %v1232
        %v1353 = vmul.f32 %v1352, %v1232
        %v1354 = vmul.f32 %v1353, %v1352
        %v1355 = vmul.f32 0.5, %v1354
        %v1356 = vsub.f32 1.5, %v1355
        %v1357 = vmul.f32 %v1352, %v1356
        %v1358 = vmul.f32 %v1232, %v1357
        %vm1359 = vcmp.eq.f32.partialorder %v1232, inf
        %v1360 = vsel %vm1359, %v1232, %v1358
        %vm1361 = vcmp.eq.f32.partialorder %v1232, 0.0
        %v1362 = vand.u32 %v1232, 2147483648
        %v1363 = vsel %vm1361, %v1362, %v1360
        %v1364 = vrsqrt.pop %v1233
        %v1365 = vmul.f32 %v1364, %v1233
        %v1366 = vmul.f32 %v1365, %v1364
        %v1367 = vmul.f32 0.5, %v1366
        %v1368 = vsub.f32 1.5, %v1367
        %v1369 = vmul.f32 %v1364, %v1368
        %v1370 = vmul.f32 %v1233, %v1369
        %vm1371 = vcmp.eq.f32.partialorder %v1233, inf
        %v1372 = vsel %vm1371, %v1233, %v1370
        %vm1373 = vcmp.eq.f32.partialorder %v1233, 0.0
        %v1374 = vand.u32 %v1233, 2147483648
        %v1375 = vsel %vm1373, %v1374, %v1372
        %v1376 = vrsqrt.pop %v1234
        %v1377 = vmul.f32 %v1376, %v1234
        %v1378 = vmul.f32 %v1377, %v1376
        %v1379 = vmul.f32 0.5, %v1378
        %v1380 = vsub.f32 1.5, %v1379
        %v1381 = vmul.f32 %v1376, %v1380
        %v1382 = vmul.f32 %v1234, %v1381
        %vm1383 = vcmp.eq.f32.partialorder %v1234, inf
        %v1384 = vsel %vm1383, %v1234, %v1382
        %vm1385 = vcmp.eq.f32.partialorder %v1234, 0.0
        %v1386 = vand.u32 %v1234, 2147483648
        %v1387 = vsel %vm1385, %v1386, %v1384
        %v1388 = vrsqrt.pop %v1235
        %v1389 = vmul.f32 %v1388, %v1235
        %v1390 = vmul.f32 %v1389, %v1388
        %v1391 = vmul.f32 0.5, %v1390
        %v1392 = vsub.f32 1.5, %v1391
        %v1393 = vmul.f32 %v1388, %v1392
        %v1394 = vmul.f32 %v1235, %v1393
        %vm1395 = vcmp.eq.f32.partialorder %v1235, inf
        %v1396 = vsel %vm1395, %v1235, %v1394
        %vm1397 = vcmp.eq.f32.partialorder %v1235, 0.0
        %v1398 = vand.u32 %v1235, 2147483648
        %v1399 = vsel %vm1397, %v1398, %v1396
        %v1400 = vrsqrt.pop %v1236
        %v1401 = vmul.f32 %v1400, %v1236
        %v1402 = vmul.f32 %v1401, %v1400
        %v1403 = vmul.f32 0.5, %v1402
        %v1404 = vsub.f32 1.5, %v1403
        %v1405 = vmul.f32 %v1400, %v1404
        %v1406 = vmul.f32 %v1236, %v1405
        %vm1407 = vcmp.eq.f32.partialorder %v1236, inf
        %v1408 = vsel %vm1407, %v1236, %v1406
        %vm1409 = vcmp.eq.f32.partialorder %v1236, 0.0
        %v1410 = vand.u32 %v1236, 2147483648
        %v1411 = vsel %vm1409, %v1410, %v1408
        %v1412 = vrsqrt.pop %v1237
        %v1413 = vmul.f32 %v1412, %v1237
        %v1414 = vmul.f32 %v1413, %v1412
        %v1415 = vmul.f32 0.5, %v1414
        %v1416 = vsub.f32 1.5, %v1415
        %v1417 = vmul.f32 %v1412, %v1416
        %v1418 = vmul.f32 %v1237, %v1417
        %vm1419 = vcmp.eq.f32.partialorder %v1237, inf
        %v1420 = vsel %vm1419, %v1237, %v1418
        %vm1421 = vcmp.eq.f32.partialorder %v1237, 0.0
        %v1422 = vand.u32 %v1237, 2147483648
        %v1423 = vsel %vm1421, %v1422, %v1420
        %v1424 = vrsqrt.pop %v1238
        %v1425 = vmul.f32 %v1424, %v1238
        %v1426 = vmul.f32 %v1425, %v1424
        %v1427 = vmul.f32 0.5, %v1426
        %v1428 = vsub.f32 1.5, %v1427
        %v1429 = vmul.f32 %v1424, %v1428
        %v1430 = vmul.f32 %v1238, %v1429
        %vm1431 = vcmp.eq.f32.partialorder %v1238, inf
        %v1432 = vsel %vm1431, %v1238, %v1430
        %vm1433 = vcmp.eq.f32.partialorder %v1238, 0.0
        %v1434 = vand.u32 %v1238, 2147483648
        %v1435 = vsel %vm1433, %v1434, %v1432
        %v1436 = vrsqrt.pop %v1239
        %v1437 = vmul.f32 %v1436, %v1239
        %v1438 = vmul.f32 %v1437, %v1436
        %v1439 = vmul.f32 0.5, %v1438
        %v1440 = vsub.f32 1.5, %v1439
        %v1441 = vmul.f32 %v1436, %v1440
        %v1442 = vmul.f32 %v1239, %v1441
        %vm1443 = vcmp.eq.f32.partialorder %v1239, inf
        %v1444 = vsel %vm1443, %v1239, %v1442
        %vm1445 = vcmp.eq.f32.partialorder %v1239, 0.0
        %v1446 = vand.u32 %v1239, 2147483648
        %v1447 = vsel %vm1445, %v1446, %v1444
        %v1448 = vrsqrt.pop %v1240
        %v1449 = vmul.f32 %v1448, %v1240
        %v1450 = vmul.f32 %v1449, %v1448
        %v1451 = vmul.f32 0.5, %v1450
        %v1452 = vsub.f32 1.5, %v1451
        %v1453 = vmul.f32 %v1448, %v1452
        %v1454 = vmul.f32 %v1240, %v1453
        %vm1455 = vcmp.eq.f32.partialorder %v1240, inf
        %v1456 = vsel %vm1455, %v1240, %v1454
        %vm1457 = vcmp.eq.f32.partialorder %v1240, 0.0
        %v1458 = vand.u32 %v1240, 2147483648
        %v1459 = vsel %vm1457, %v1458, %v1456
        %v1460 = vrsqrt.pop %v1241
        %v1461 = vmul.f32 %v1460, %v1241
        %v1462 = vmul.f32 %v1461, %v1460
        %v1463 = vmul.f32 0.5, %v1462
        %v1464 = vsub.f32 1.5, %v1463
        %v1465 = vmul.f32 %v1460, %v1464
        %v1466 = vmul.f32 %v1241, %v1465
        %vm1467 = vcmp.eq.f32.partialorder %v1241, inf
        %v1468 = vsel %vm1467, %v1241, %v1466
        %vm1469 = vcmp.eq.f32.partialorder %v1241, 0.0
        %v1470 = vand.u32 %v1241, 2147483648
        %v1471 = vsel %vm1469, %v1470, %v1468
        %v1472 = vrsqrt.pop %v1242
        %v1473 = vmul.f32 %v1472, %v1242
        %v1474 = vmul.f32 %v1473, %v1472
        %v1475 = vmul.f32 0.5, %v1474
        %v1476 = vsub.f32 1.5, %v1475
        %v1477 = vmul.f32 %v1472, %v1476
        %v1478 = vmul.f32 %v1242, %v1477
        %vm1479 = vcmp.eq.f32.partialorder %v1242, inf
        %v1480 = vsel %vm1479, %v1242, %v1478
        %vm1481 = vcmp.eq.f32.partialorder %v1242, 0.0
        %v1482 = vand.u32 %v1242, 2147483648
        %v1483 = vsel %vm1481, %v1482, %v1480
        %v1484 = vrsqrt.pop %v1243
        %v1485 = vmul.f32 %v1484, %v1243
        %v1486 = vmul.f32 %v1485, %v1484
        %v1487 = vmul.f32 0.5, %v1486
        %v1488 = vsub.f32 1.5, %v1487
        %v1489 = vmul.f32 %v1484, %v1488
        %v1490 = vmul.f32 %v1243, %v1489
        %vm1491 = vcmp.eq.f32.partialorder %v1243, inf
        %v1492 = vsel %vm1491, %v1243, %v1490
        %vm1493 = vcmp.eq.f32.partialorder %v1243, 0.0
        %v1494 = vand.u32 %v1243, 2147483648
        %v1495 = vsel %vm1493, %v1494, %v1492
        %v1496 = vrsqrt.pop %v1244
        %v1497 = vmul.f32 %v1496, %v1244
        %v1498 = vmul.f32 %v1497, %v1496
        %v1499 = vmul.f32 0.5, %v1498
        %v1500 = vsub.f32 1.5, %v1499
        %v1501 = vmul.f32 %v1496, %v1500
        %v1502 = vmul.f32 %v1244, %v1501
        %vm1503 = vcmp.eq.f32.partialorder %v1244, inf
        %v1504 = vsel %vm1503, %v1244, %v1502
        %vm1505 = vcmp.eq.f32.partialorder %v1244, 0.0
        %v1506 = vand.u32 %v1244, 2147483648
        %v1507 = vsel %vm1505, %v1506, %v1504
        %v1508 = vrsqrt.pop %v1245
        %v1509 = vmul.f32 %v1508, %v1245
        %v1510 = vmul.f32 %v1509, %v1508
        %v1511 = vmul.f32 0.5, %v1510
        %v1512 = vsub.f32 1.5, %v1511
        %v1513 = vmul.f32 %v1508, %v1512
        %v1514 = vmul.f32 %v1245, %v1513
        %vm1515 = vcmp.eq.f32.partialorder %v1245, inf
        %v1516 = vsel %vm1515, %v1245, %v1514
        %vm1517 = vcmp.eq.f32.partialorder %v1245, 0.0
        %v1518 = vand.u32 %v1245, 2147483648
        %v1519 = vsel %vm1517, %v1518, %v1516
        %v1520 = vrsqrt.pop %v1246
        %v1521 = vmul.f32 %v1520, %v1246
        %v1522 = vmul.f32 %v1521, %v1520
        %v1523 = vmul.f32 0.5, %v1522
        %v1524 = vsub.f32 1.5, %v1523
        %v1525 = vmul.f32 %v1520, %v1524
        %v1526 = vmul.f32 %v1246, %v1525
        %vm1527 = vcmp.eq.f32.partialorder %v1246, inf
        %v1528 = vsel %vm1527, %v1246, %v1526
        %vm1529 = vcmp.eq.f32.partialorder %v1246, 0.0
        %v1530 = vand.u32 %v1246, 2147483648
        %v1531 = vsel %vm1529, %v1530, %v1528
        %v1532 = vrsqrt.pop %v1247
        %v1533 = vmul.f32 %v1532, %v1247
        %v1534 = vmul.f32 %v1533, %v1532
        %v1535 = vmul.f32 0.5, %v1534
        %v1536 = vsub.f32 1.5, %v1535
        %v1537 = vmul.f32 %v1532, %v1536
        %v1538 = vmul.f32 %v1247, %v1537
        %vm1539 = vcmp.eq.f32.partialorder %v1247, inf
        %v1540 = vsel %vm1539, %v1247, %v1538
        %vm1541 = vcmp.eq.f32.partialorder %v1247, 0.0
        %v1542 = vand.u32 %v1247, 2147483648
        %v1543 = vsel %vm1541, %v1542, %v1540
        %v1544 = vrsqrt.pop %v1248
        %v1545 = vmul.f32 %v1544, %v1248
        %v1546 = vmul.f32 %v1545, %v1544
        %v1547 = vmul.f32 0.5, %v1546
        %v1548 = vsub.f32 1.5, %v1547
        %v1549 = vmul.f32 %v1544, %v1548
        %v1550 = vmul.f32 %v1248, %v1549
        %vm1551 = vcmp.eq.f32.partialorder %v1248, inf
        %v1552 = vsel %vm1551, %v1248, %v1550
        %vm1553 = vcmp.eq.f32.partialorder %v1248, 0.0
        %v1554 = vand.u32 %v1248, 2147483648
        %v1555 = vsel %vm1553, %v1554, %v1552
        %v1556 = vrsqrt.pop %v1249
        %v1557 = vmul.f32 %v1556, %v1249
        %v1558 = vmul.f32 %v1557, %v1556
        %v1559 = vmul.f32 0.5, %v1558
        %v1560 = vsub.f32 1.5, %v1559
        %v1561 = vmul.f32 %v1556, %v1560
        %v1562 = vmul.f32 %v1249, %v1561
        %vm1563 = vcmp.eq.f32.partialorder %v1249, inf
        %v1564 = vsel %vm1563, %v1249, %v1562
        %vm1565 = vcmp.eq.f32.partialorder %v1249, 0.0
        %v1566 = vand.u32 %v1249, 2147483648
        %v1567 = vsel %vm1565, %v1566, %v1564
        %v1568 = vrsqrt.pop %v1250
        %v1569 = vmul.f32 %v1568, %v1250
        %v1570 = vmul.f32 %v1569, %v1568
        %v1571 = vmul.f32 0.5, %v1570
        %v1572 = vsub.f32 1.5, %v1571
        %v1573 = vmul.f32 %v1568, %v1572
        %v1574 = vmul.f32 %v1250, %v1573
        %vm1575 = vcmp.eq.f32.partialorder %v1250, inf
        %v1576 = vsel %vm1575, %v1250, %v1574
        %vm1577 = vcmp.eq.f32.partialorder %v1250, 0.0
        %v1578 = vand.u32 %v1250, 2147483648
        %v1579 = vsel %vm1577, %v1578, %v1576
        %v1580 = vrsqrt.pop %v1251
        %v1581 = vmul.f32 %v1580, %v1251
        %v1582 = vmul.f32 %v1581, %v1580
        %v1583 = vmul.f32 0.5, %v1582
        %v1584 = vsub.f32 1.5, %v1583
        %v1585 = vmul.f32 %v1580, %v1584
        %v1586 = vmul.f32 %v1251, %v1585
        %vm1587 = vcmp.eq.f32.partialorder %v1251, inf
        %v1588 = vsel %vm1587, %v1251, %v1586
        %vm1589 = vcmp.eq.f32.partialorder %v1251, 0.0
        %v1590 = vand.u32 %v1251, 2147483648
        %v1591 = vsel %vm1589, %v1590, %v1588
        %v1592 = vrsqrt.pop %v1252
        %v1593 = vmul.f32 %v1592, %v1252
        %v1594 = vmul.f32 %v1593, %v1592
        %v1595 = vmul.f32 0.5, %v1594
        %v1596 = vsub.f32 1.5, %v1595
        %v1597 = vmul.f32 %v1592, %v1596
        %v1598 = vmul.f32 %v1252, %v1597
        %vm1599 = vcmp.eq.f32.partialorder %v1252, inf
        %v1600 = vsel %vm1599, %v1252, %v1598
        %vm1601 = vcmp.eq.f32.partialorder %v1252, 0.0
        %v1602 = vand.u32 %v1252, 2147483648
        %v1603 = vsel %vm1601, %v1602, %v1600
        %v1604 = vrsqrt.pop %v1253
        %v1605 = vmul.f32 %v1604, %v1253
        %v1606 = vmul.f32 %v1605, %v1604
        %v1607 = vmul.f32 0.5, %v1606
        %v1608 = vsub.f32 1.5, %v1607
        %v1609 = vmul.f32 %v1604, %v1608
        %v1610 = vmul.f32 %v1253, %v1609
        %vm1611 = vcmp.eq.f32.partialorder %v1253, inf
        %v1612 = vsel %vm1611, %v1253, %v1610
        %vm1613 = vcmp.eq.f32.partialorder %v1253, 0.0
        %v1614 = vand.u32 %v1253, 2147483648
        %v1615 = vsel %vm1613, %v1614, %v1612
        %v1616 = vrsqrt.pop %v1254
        %v1617 = vmul.f32 %v1616, %v1254
        %v1618 = vmul.f32 %v1617, %v1616
        %v1619 = vmul.f32 0.5, %v1618
        %v1620 = vsub.f32 1.5, %v1619
        %v1621 = vmul.f32 %v1616, %v1620
        %v1622 = vmul.f32 %v1254, %v1621
        %vm1623 = vcmp.eq.f32.partialorder %v1254, inf
        %v1624 = vsel %vm1623, %v1254, %v1622
        %vm1625 = vcmp.eq.f32.partialorder %v1254, 0.0
        %v1626 = vand.u32 %v1254, 2147483648
        %v1627 = vsel %vm1625, %v1626, %v1624
        %v1628 = vrsqrt.pop %v1255
        %v1629 = vmul.f32 %v1628, %v1255
        %v1630 = vmul.f32 %v1629, %v1628
        %v1631 = vmul.f32 0.5, %v1630
        %v1632 = vsub.f32 1.5, %v1631
        %v1633 = vmul.f32 %v1628, %v1632
        %v1634 = vmul.f32 %v1255, %v1633
        %vm1635 = vcmp.eq.f32.partialorder %v1255, inf
        %v1636 = vsel %vm1635, %v1255, %v1634
        %vm1637 = vcmp.eq.f32.partialorder %v1255, 0.0
        %v1638 = vand.u32 %v1255, 2147483648
        %v1639 = vsel %vm1637, %v1638, %v1636
        %v1640 = vmul.f32 %v1267, %v1160
        %v1641 = vmul.f32 %v1279, %v1161
        %v1642 = vmul.f32 %v1291, %v1162
        %v1643 = vmul.f32 %v1303, %v1163
        %v1644 = vmul.f32 %v1315, %v1164
        %v1645 = vmul.f32 %v1327, %v1165
        %v1646 = vmul.f32 %v1339, %v1166
        %v1647 = vmul.f32 %v1351, %v1167
        %v1648 = vmul.f32 %v1363, %v1168
        %v1649 = vmul.f32 %v1375, %v1169
        %v1650 = vmul.f32 %v1387, %v1170
        %v1651 = vmul.f32 %v1399, %v1171
        %v1652 = vmul.f32 %v1411, %v1172
        %v1653 = vmul.f32 %v1423, %v1173
        %v1654 = vmul.f32 %v1435, %v1174
        %v1655 = vmul.f32 %v1447, %v1175
        %v1656 = vmul.f32 %v1459, %v1176
        %v1657 = vmul.f32 %v1471, %v1177
        %v1658 = vmul.f32 %v1483, %v1178
        %v1659 = vmul.f32 %v1495, %v1179
        %v1660 = vmul.f32 %v1507, %v1180
        %v1661 = vmul.f32 %v1519, %v1181
        %v1662 = vmul.f32 %v1531, %v1182
        %v1663 = vmul.f32 %v1543, %v1183
        %v1664 = vmul.f32 %v1555, %v1184
        %v1665 = vmul.f32 %v1567, %v1185
        %v1666 = vmul.f32 %v1579, %v1186
        %v1667 = vmul.f32 %v1591, %v1187
        %v1668 = vmul.f32 %v1603, %v1188
        %v1669 = vmul.f32 %v1615, %v1189
        %v1670 = vmul.f32 %v1627, %v1190
        %v1671 = vmul.f32 %v1639, %v1191
        %v1672 = vmul.f32 %v1640, 20.0
        %v1673 = vmul.f32 %v1641, 20.0
        %v1674 = vmul.f32 %v1642, 20.0
        %v1675 = vmul.f32 %v1643, 20.0
        %v1676 = vmul.f32 %v1644, 20.0
        %v1677 = vmul.f32 %v1645, 20.0
        %v1678 = vmul.f32 %v1646, 20.0
        %v1679 = vmul.f32 %v1647, 20.0
        %v1680 = vmul.f32 %v1648, 20.0
        %v1681 = vmul.f32 %v1649, 20.0
        %v1682 = vmul.f32 %v1650, 20.0
        %v1683 = vmul.f32 %v1651, 20.0
        %v1684 = vmul.f32 %v1652, 20.0
        %v1685 = vmul.f32 %v1653, 20.0
        %v1686 = vmul.f32 %v1654, 20.0
        %v1687 = vmul.f32 %v1655, 20.0
        %v1688 = vmul.f32 %v1656, 20.0
        %v1689 = vmul.f32 %v1657, 20.0
        %v1690 = vmul.f32 %v1658, 20.0
        %v1691 = vmul.f32 %v1659, 20.0
        %v1692 = vmul.f32 %v1660, 20.0
        %v1693 = vmul.f32 %v1661, 20.0
        %v1694 = vmul.f32 %v1662, 20.0
        %v1695 = vmul.f32 %v1663, 20.0
        %v1696 = vmul.f32 %v1664, 20.0
        %v1697 = vmul.f32 %v1665, 20.0
        %v1698 = vmul.f32 %v1666, 20.0
        %v1699 = vmul.f32 %v1667, 20.0
        %v1700 = vmul.f32 %v1668, 20.0
        %v1701 = vmul.f32 %v1669, 20.0
        %v1702 = vmul.f32 %v1670, 20.0
        %v1703 = vmul.f32 %v1671, 20.0
        %v1704 = vmax.f32 %v346, 1e-30
        %v1705 = vmax.f32 %v347, 1e-30
        %v1706 = vlog2.pop %v1704
        %v1707 = vmul.f32 %v1706, 0.6931472
        %v1708 = vlog2.pop %v1705
        %v1709 = vmul.f32 %v1708, 0.6931472
        %v1710 = vmax.f32 %v348, 1e-30
        %v1711 = vmax.f32 %v349, 1e-30
        %v1712 = vlog2.pop %v1710
        %v1713 = vmul.f32 %v1712, 0.6931472
        %v1714 = vlog2.pop %v1711
        %v1715 = vmul.f32 %v1714, 0.6931472
        %v1716 = vsub.f32 0.0, %v1672
        %v1717 = vsub.f32 0.0, %v1673
        %v1718 = vsub.f32 0.0, %v1674
        %v1719 = vsub.f32 0.0, %v1675
        %v1720 = vsub.f32 0.0, %v1676
        %v1721 = vsub.f32 0.0, %v1677
        %v1722 = vsub.f32 0.0, %v1678
        %v1723 = vsub.f32 0.0, %v1679
        %v1724 = vsub.f32 0.0, %v1680
        %v1725 = vsub.f32 0.0, %v1681
        %v1726 = vsub.f32 0.0, %v1682
        %v1727 = vsub.f32 0.0, %v1683
        %v1728 = vsub.f32 0.0, %v1684
        %v1729 = vsub.f32 0.0, %v1685
        %v1730 = vsub.f32 0.0, %v1686
        %v1731 = vsub.f32 0.0, %v1687
        %v1732 = vsub.f32 0.0, %v1688
        %v1733 = vsub.f32 0.0, %v1689
        %v1734 = vsub.f32 0.0, %v1690
        %v1735 = vsub.f32 0.0, %v1691
        %v1736 = vsub.f32 0.0, %v1692
        %v1737 = vsub.f32 0.0, %v1693
        %v1738 = vsub.f32 0.0, %v1694
        %v1739 = vsub.f32 0.0, %v1695
        %v1740 = vsub.f32 0.0, %v1696
        %v1741 = vsub.f32 0.0, %v1697
        %v1742 = vsub.f32 0.0, %v1698
        %v1743 = vsub.f32 0.0, %v1699
        %v1744 = vsub.f32 0.0, %v1700
        %v1745 = vsub.f32 0.0, %v1701
        %v1746 = vsub.f32 0.0, %v1702
        %v1747 = vsub.f32 0.0, %v1703
        %v1748 = vmul.f32 %v1716, 1.442695
        %v1749 = vpow.pop %v1748
        %v1750 = vmul.f32 %v1717, 1.442695
        %v1751 = vpow.pop %v1750
        %v1752 = vmul.f32 %v1718, 1.442695
        %v1753 = vpow.pop %v1752
        %v1754 = vmul.f32 %v1719, 1.442695
        %v1755 = vpow.pop %v1754
        %v1756 = vmul.f32 %v1720, 1.442695
        %v1757 = vpow.pop %v1756
        %v1758 = vmul.f32 %v1721, 1.442695
        %v1759 = vpow.pop %v1758
        %v1760 = vmul.f32 %v1722, 1.442695
        %v1761 = vpow.pop %v1760
        %v1762 = vmul.f32 %v1723, 1.442695
        %v1763 = vpow.pop %v1762
        %v1764 = vmul.f32 %v1724, 1.442695
        %v1765 = vpow.pop %v1764
        %v1766 = vmul.f32 %v1725, 1.442695
        %v1767 = vpow.pop %v1766
        %v1768 = vmul.f32 %v1726, 1.442695
        %v1769 = vpow.pop %v1768
        %v1770 = vmul.f32 %v1727, 1.442695
        %v1771 = vpow.pop %v1770
        %v1772 = vmul.f32 %v1728, 1.442695
        %v1773 = vpow.pop %v1772
        %v1774 = vmul.f32 %v1729, 1.442695
        %v1775 = vpow.pop %v1774
        %v1776 = vmul.f32 %v1730, 1.442695
        %v1777 = vpow.pop %v1776
        %v1778 = vmul.f32 %v1731, 1.442695
        %v1779 = vpow.pop %v1778
        %v1780 = vmul.f32 %v1732, 1.442695
        %v1781 = vpow.pop %v1780
        %v1782 = vmul.f32 %v1733, 1.442695
        %v1783 = vpow.pop %v1782
        %v1784 = vmul.f32 %v1734, 1.442695
        %v1785 = vpow.pop %v1784
        %v1786 = vmul.f32 %v1735, 1.442695
        %v1787 = vpow.pop %v1786
        %v1788 = vmul.f32 %v1736, 1.442695
        %v1789 = vpow.pop %v1788
        %v1790 = vmul.f32 %v1737, 1.442695
        %v1791 = vpow.pop %v1790
        %v1792 = vmul.f32 %v1738, 1.442695
        %v1793 = vpow.pop %v1792
        %v1794 = vmul.f32 %v1739, 1.442695
        %v1795 = vpow.pop %v1794
        %v1796 = vmul.f32 %v1740, 1.442695
        %v1797 = vpow.pop %v1796
        %v1798 = vmul.f32 %v1741, 1.442695
        %v1799 = vpow.pop %v1798
        %v1800 = vmul.f32 %v1742, 1.442695
        %v1801 = vpow.pop %v1800
        %v1802 = vmul.f32 %v1743, 1.442695
        %v1803 = vpow.pop %v1802
        %v1804 = vmul.f32 %v1744, 1.442695
        %v1805 = vpow.pop %v1804
        %v1806 = vmul.f32 %v1745, 1.442695
        %v1807 = vpow.pop %v1806
        %v1808 = vmul.f32 %v1746, 1.442695
        %v1809 = vpow.pop %v1808
        %v1810 = vmul.f32 %v1747, 1.442695
        %v1811 = vpow.pop %v1810
        %v1812 = vadd.f32 %v1707, 0.0
        %v1813 = vadd.f32 %v1709, 0.0
        %vm1814 = vcmask 1040384
        %v1815 = vsel %vm1814, %v1812, -inf
        %1816 = vmax.xlane.f32.xlu0 %v1815
        %v1817 = vpop.xlane.xlu0 %1816
        %v1818 = vsel %vm1814, %v1813, -inf
        %1819 = vmax.xlane.f32.xlu0 %v1818
        %v1820 = vpop.xlane.xlu0 %1819
        %v1821 = vsub.f32 %v1812, %v1817
        %v1822 = vsub.f32 %v1813, %v1820
        %v1823 = vmul.f32 %v1821, 1.442695
        %v1824 = vpow.pop %v1823
        %v1825 = vmul.f32 %v1822, 1.442695
        %v1826 = vpow.pop %v1825
        %1827 = vmatpush.msra.mxu0 %v1779
        %1828 = vmatpush.msra.mxu0 %v1777
        %1829 = vmatpush.msra.mxu0 %v1775
        %1830 = vmatpush.msra.mxu0 %v1773
        %1831 = vmatpush.msra.mxu0 %v1771
        %1832 = vmatpush.msra.mxu0 %v1769
        %1833 = vmatpush.msra.mxu0 %v1767
        %1834 = vmatpush.msra.mxu0 %v1765
        %1835 = vmatpush.msra.mxu0 %v1763
        %1836 = vmatpush.msra.mxu0 %v1761
        %1837 = vmatpush.msra.mxu0 %v1759
        %1838 = vmatpush.msra.mxu0 %v1757
        %1839 = vmatpush.msra.mxu0 %v1755
        %1840 = vmatpush.msra.mxu0 %v1753
        %1841 = vmatpush.msra.mxu0 %v1751
        %1842 = vmatpush.msra.mxu0 %v1749
        %1843 = vmatmul.f32.gmra.mxu0 %v1824
        %v1844 = vpop.f32.mrf.mxu0
        %v1845 = vadd.f32 0.0, %v1844
        %1846 = vdwg.mxu0
        %1847 = vmatpush.msra.mxu0 %v1811
        %1848 = vmatpush.msra.mxu0 %v1809
        %1849 = vmatpush.msra.mxu0 %v1807
        %1850 = vmatpush.msra.mxu0 %v1805
        %1851 = vmatpush.msra.mxu0 %v1803
        %1852 = vmatpush.msra.mxu0 %v1801
        %1853 = vmatpush.msra.mxu0 %v1799
        %1854 = vmatpush.msra.mxu0 %v1797
        %1855 = vmatpush.msra.mxu0 %v1795
        %1856 = vmatpush.msra.mxu0 %v1793
        %1857 = vmatpush.msra.mxu0 %v1791
        %1858 = vmatpush.msra.mxu0 %v1789
        %1859 = vmatpush.msra.mxu0 %v1787
        %1860 = vmatpush.msra.mxu0 %v1785
        %1861 = vmatpush.msra.mxu0 %v1783
        %1862 = vmatpush.msra.mxu0 %v1781
        %1863 = vmatmul.f32.gmra.mxu0 %v1826
        %v1864 = vpop.f32.mrf.mxu0
        %v1865 = vadd.f32 0.0, %v1864
        %1866 = vdwg.mxu0
        %v1867 = vlog2.pop %v1845
        %v1868 = vmul.f32 %v1867, 0.6931472
        %v1869 = vlog2.pop %v1865
        %v1870 = vmul.f32 %v1869, 0.6931472
        %v1871 = vadd.f32 %v1868, %v1817
        %v1872 = vadd.f32 %v1870, %v1820
        %v1873 = vmul.f32 %v1871, -0.1
        %v1874 = vmul.f32 %v1872, -0.1
        %v1875 = vmul.f32 %v1873, 10.0
        %v1876 = vmul.f32 %v1874, 10.0
        %v1877 = vadd.f32 %v1875, %v1713
        %v1878 = vadd.f32 %v1876, %v1715
        %v1879 = vsel %vm1814, %v1877, -inf
        %1880 = vmax.xlane.f32.xlu0 %v1879
        %v1881 = vpop.xlane.xlu0 %1880
        %v1882 = vsel %vm1814, %v1878, -inf
        %1883 = vmax.xlane.f32.xlu0 %v1882
        %v1884 = vpop.xlane.xlu0 %1883
        %v1885 = vsub.f32 %v1877, %v1881
        %v1886 = vsub.f32 %v1878, %v1884
        %v1887 = vmul.f32 %v1885, 1.442695
        %v1888 = vpow.pop %v1887
        %v1889 = vmul.f32 %v1886, 1.442695
        %v1890 = vpow.pop %v1889
        %1891 = vmatpush.xpose.msra.mxu0 %v1779
        %1892 = vmatpush.xpose.msra.mxu0 %v1777
        %1893 = vmatpush.xpose.msra.mxu0 %v1775
        %1894 = vmatpush.xpose.msra.mxu0 %v1773
        %1895 = vmatpush.xpose.msra.mxu0 %v1771
        %1896 = vmatpush.xpose.msra.mxu0 %v1769
        %1897 = vmatpush.xpose.msra.mxu0 %v1767
        %1898 = vmatpush.xpose.msra.mxu0 %v1765
        %1899 = vmatpush.xpose.msra.mxu0 %v1763
        %1900 = vmatpush.xpose.msra.mxu0 %v1761
        %1901 = vmatpush.xpose.msra.mxu0 %v1759
        %1902 = vmatpush.xpose.msra.mxu0 %v1757
        %1903 = vmatpush.xpose.msra.mxu0 %v1755
        %1904 = vmatpush.xpose.msra.mxu0 %v1753
        %1905 = vmatpush.xpose.msra.mxu0 %v1751
        %1906 = vmatpush.xpose.msra.mxu0 %v1749
        %1907 = vmatmul.f32.gmra.mxu0 %v1888
        %v1908 = vpop.f32.mrf.mxu0
        %v1909 = vadd.f32 0.0, %v1908
        %1910 = vdwg.mxu0
        %1911 = vmatpush.xpose.msra.mxu0 %v1811
        %1912 = vmatpush.xpose.msra.mxu0 %v1809
        %1913 = vmatpush.xpose.msra.mxu0 %v1807
        %1914 = vmatpush.xpose.msra.mxu0 %v1805
        %1915 = vmatpush.xpose.msra.mxu0 %v1803
        %1916 = vmatpush.xpose.msra.mxu0 %v1801
        %1917 = vmatpush.xpose.msra.mxu0 %v1799
        %1918 = vmatpush.xpose.msra.mxu0 %v1797
        %1919 = vmatpush.xpose.msra.mxu0 %v1795
        %1920 = vmatpush.xpose.msra.mxu0 %v1793
        %1921 = vmatpush.xpose.msra.mxu0 %v1791
        %1922 = vmatpush.xpose.msra.mxu0 %v1789
        %1923 = vmatpush.xpose.msra.mxu0 %v1787
        %1924 = vmatpush.xpose.msra.mxu0 %v1785
        %1925 = vmatpush.xpose.msra.mxu0 %v1783
        %1926 = vmatpush.xpose.msra.mxu0 %v1781
        %1927 = vmatmul.f32.gmra.mxu0 %v1890
        %v1928 = vpop.f32.mrf.mxu0
        %v1929 = vadd.f32 0.0, %v1928
        %1930 = vdwg.mxu0
        %v1931 = vlog2.pop %v1909
        %v1932 = vmul.f32 %v1931, 0.6931472
        %v1933 = vlog2.pop %v1929
        %v1934 = vmul.f32 %v1933, 0.6931472
        %v1935 = vadd.f32 %v1932, %v1881
        %v1936 = vadd.f32 %v1934, %v1884
        %v1937 = vmul.f32 %v1935, -0.1
        %v1938 = vmul.f32 %v1936, -0.1
        %v1939 = vmul.f32 %v1937, 10.0
        %v1940 = vmul.f32 %v1938, 10.0
        %v1941 = vadd.f32 %v1939, %v1707
        %v1942 = vadd.f32 %v1940, %v1709
        %v1943 = vsel %vm1814, %v1941, -inf
        %1944 = vmax.xlane.f32.xlu0 %v1943
        %v1945 = vpop.xlane.xlu0 %1944
        %v1946 = vsel %vm1814, %v1942, -inf
        %1947 = vmax.xlane.f32.xlu0 %v1946
        %v1948 = vpop.xlane.xlu0 %1947
        %v1949 = vsub.f32 %v1941, %v1945
        %v1950 = vsub.f32 %v1942, %v1948
        %v1951 = vmul.f32 %v1949, 1.442695
        %v1952 = vpow.pop %v1951
        %v1953 = vmul.f32 %v1950, 1.442695
        %v1954 = vpow.pop %v1953
        %1955 = vmatpush.msra.mxu0 %v1779
        %1956 = vmatpush.msra.mxu0 %v1777
        %1957 = vmatpush.msra.mxu0 %v1775
        %1958 = vmatpush.msra.mxu0 %v1773
        %1959 = vmatpush.msra.mxu0 %v1771
        %1960 = vmatpush.msra.mxu0 %v1769
        %1961 = vmatpush.msra.mxu0 %v1767
        %1962 = vmatpush.msra.mxu0 %v1765
        %1963 = vmatpush.msra.mxu0 %v1763
        %1964 = vmatpush.msra.mxu0 %v1761
        %1965 = vmatpush.msra.mxu0 %v1759
        %1966 = vmatpush.msra.mxu0 %v1757
        %1967 = vmatpush.msra.mxu0 %v1755
        %1968 = vmatpush.msra.mxu0 %v1753
        %1969 = vmatpush.msra.mxu0 %v1751
        %1970 = vmatpush.msra.mxu0 %v1749
        %1971 = vmatmul.f32.gmra.mxu0 %v1952
        %v1972 = vpop.f32.mrf.mxu0
        %v1973 = vadd.f32 0.0, %v1972
        %1974 = vdwg.mxu0
        %1975 = vmatpush.msra.mxu0 %v1811
        %1976 = vmatpush.msra.mxu0 %v1809
        %1977 = vmatpush.msra.mxu0 %v1807
        %1978 = vmatpush.msra.mxu0 %v1805
        %1979 = vmatpush.msra.mxu0 %v1803
        %1980 = vmatpush.msra.mxu0 %v1801
        %1981 = vmatpush.msra.mxu0 %v1799
        %1982 = vmatpush.msra.mxu0 %v1797
        %1983 = vmatpush.msra.mxu0 %v1795
        %1984 = vmatpush.msra.mxu0 %v1793
        %1985 = vmatpush.msra.mxu0 %v1791
        %1986 = vmatpush.msra.mxu0 %v1789
        %1987 = vmatpush.msra.mxu0 %v1787
        %1988 = vmatpush.msra.mxu0 %v1785
        %1989 = vmatpush.msra.mxu0 %v1783
        %1990 = vmatpush.msra.mxu0 %v1781
        %1991 = vmatmul.f32.gmra.mxu0 %v1954
        %v1992 = vpop.f32.mrf.mxu0
        %v1993 = vadd.f32 0.0, %v1992
        %1994 = vdwg.mxu0
        %v1995 = vlog2.pop %v1973
        %v1996 = vmul.f32 %v1995, 0.6931472
        %v1997 = vlog2.pop %v1993
        %v1998 = vmul.f32 %v1997, 0.6931472
        %v1999 = vadd.f32 %v1996, %v1945
        %v2000 = vadd.f32 %v1998, %v1948
        %v2001 = vmul.f32 %v1999, -0.1
        %v2002 = vmul.f32 %v2000, -0.1
        %v2003 = vmul.f32 %v2001, 10.0
        %v2004 = vmul.f32 %v2002, 10.0
        %v2005 = vadd.f32 %v2003, %v1713
        %v2006 = vadd.f32 %v2004, %v1715
        %v2007 = vsel %vm1814, %v2005, -inf
        %2008 = vmax.xlane.f32.xlu0 %v2007
        %v2009 = vpop.xlane.xlu0 %2008
        %v2010 = vsel %vm1814, %v2006, -inf
        %2011 = vmax.xlane.f32.xlu0 %v2010
        %v2012 = vpop.xlane.xlu0 %2011
        %v2013 = vsub.f32 %v2005, %v2009
        %v2014 = vsub.f32 %v2006, %v2012
        %v2015 = vmul.f32 %v2013, 1.442695
        %v2016 = vpow.pop %v2015
        %v2017 = vmul.f32 %v2014, 1.442695
        %v2018 = vpow.pop %v2017
        %2019 = vmatpush.xpose.msra.mxu0 %v1779
        %2020 = vmatpush.xpose.msra.mxu0 %v1777
        %2021 = vmatpush.xpose.msra.mxu0 %v1775
        %2022 = vmatpush.xpose.msra.mxu0 %v1773
        %2023 = vmatpush.xpose.msra.mxu0 %v1771
        %2024 = vmatpush.xpose.msra.mxu0 %v1769
        %2025 = vmatpush.xpose.msra.mxu0 %v1767
        %2026 = vmatpush.xpose.msra.mxu0 %v1765
        %2027 = vmatpush.xpose.msra.mxu0 %v1763
        %2028 = vmatpush.xpose.msra.mxu0 %v1761
        %2029 = vmatpush.xpose.msra.mxu0 %v1759
        %2030 = vmatpush.xpose.msra.mxu0 %v1757
        %2031 = vmatpush.xpose.msra.mxu0 %v1755
        %2032 = vmatpush.xpose.msra.mxu0 %v1753
        %2033 = vmatpush.xpose.msra.mxu0 %v1751
        %2034 = vmatpush.xpose.msra.mxu0 %v1749
        %2035 = vmatmul.f32.gmra.mxu0 %v2016
        %v2036 = vpop.f32.mrf.mxu0
        %v2037 = vadd.f32 0.0, %v2036
        %2038 = vdwg.mxu0
        %2039 = vmatpush.xpose.msra.mxu0 %v1811
        %2040 = vmatpush.xpose.msra.mxu0 %v1809
        %2041 = vmatpush.xpose.msra.mxu0 %v1807
        %2042 = vmatpush.xpose.msra.mxu0 %v1805
        %2043 = vmatpush.xpose.msra.mxu0 %v1803
        %2044 = vmatpush.xpose.msra.mxu0 %v1801
        %2045 = vmatpush.xpose.msra.mxu0 %v1799
        %2046 = vmatpush.xpose.msra.mxu0 %v1797
        %2047 = vmatpush.xpose.msra.mxu0 %v1795
        %2048 = vmatpush.xpose.msra.mxu0 %v1793
        %2049 = vmatpush.xpose.msra.mxu0 %v1791
        %2050 = vmatpush.xpose.msra.mxu0 %v1789
        %2051 = vmatpush.xpose.msra.mxu0 %v1787
        %2052 = vmatpush.xpose.msra.mxu0 %v1785
        %2053 = vmatpush.xpose.msra.mxu0 %v1783
        %2054 = vmatpush.xpose.msra.mxu0 %v1781
        %2055 = vmatmul.f32.gmra.mxu0 %v2018
        %v2056 = vpop.f32.mrf.mxu0
        %v2057 = vadd.f32 0.0, %v2056
        %2058 = vdwg.mxu0
        %v2059 = vlog2.pop %v2037
        %v2060 = vmul.f32 %v2059, 0.6931472
        %v2061 = vlog2.pop %v2057
        %v2062 = vmul.f32 %v2061, 0.6931472
        %v2063 = vadd.f32 %v2060, %v2009
        %v2064 = vadd.f32 %v2062, %v2012
        %v2065 = vmul.f32 %v2063, -0.1
        %v2066 = vmul.f32 %v2064, -0.1
        %v2067 = vmul.f32 %v2065, 10.0
        %v2068 = vmul.f32 %v2066, 10.0
        %v2069 = vadd.f32 %v2067, %v1707
        %v2070 = vadd.f32 %v2068, %v1709
        %v2071 = vsel %vm1814, %v2069, -inf
        %2072 = vmax.xlane.f32.xlu0 %v2071
        %v2073 = vpop.xlane.xlu0 %2072
        %v2074 = vsel %vm1814, %v2070, -inf
        %2075 = vmax.xlane.f32.xlu0 %v2074
        %v2076 = vpop.xlane.xlu0 %2075
        %v2077 = vsub.f32 %v2069, %v2073
        %v2078 = vsub.f32 %v2070, %v2076
        %v2079 = vmul.f32 %v2077, 1.442695
        %v2080 = vpow.pop %v2079
        %v2081 = vmul.f32 %v2078, 1.442695
        %v2082 = vpow.pop %v2081
        %2083 = vmatpush.msra.mxu0 %v1779
        %2084 = vmatpush.msra.mxu0 %v1777
        %2085 = vmatpush.msra.mxu0 %v1775
        %2086 = vmatpush.msra.mxu0 %v1773
        %2087 = vmatpush.msra.mxu0 %v1771
        %2088 = vmatpush.msra.mxu0 %v1769
        %2089 = vmatpush.msra.mxu0 %v1767
        %2090 = vmatpush.msra.mxu0 %v1765
        %2091 = vmatpush.msra.mxu0 %v1763
        %2092 = vmatpush.msra.mxu0 %v1761
        %2093 = vmatpush.msra.mxu0 %v1759
        %2094 = vmatpush.msra.mxu0 %v1757
        %2095 = vmatpush.msra.mxu0 %v1755
        %2096 = vmatpush.msra.mxu0 %v1753
        %2097 = vmatpush.msra.mxu0 %v1751
        %2098 = vmatpush.msra.mxu0 %v1749
        %2099 = vmatmul.f32.gmra.mxu0 %v2080
        %v2100 = vpop.f32.mrf.mxu0
        %v2101 = vadd.f32 0.0, %v2100
        %2102 = vdwg.mxu0
        %2103 = vmatpush.msra.mxu0 %v1811
        %2104 = vmatpush.msra.mxu0 %v1809
        %2105 = vmatpush.msra.mxu0 %v1807
        %2106 = vmatpush.msra.mxu0 %v1805
        %2107 = vmatpush.msra.mxu0 %v1803
        %2108 = vmatpush.msra.mxu0 %v1801
        %2109 = vmatpush.msra.mxu0 %v1799
        %2110 = vmatpush.msra.mxu0 %v1797
        %2111 = vmatpush.msra.mxu0 %v1795
        %2112 = vmatpush.msra.mxu0 %v1793
        %2113 = vmatpush.msra.mxu0 %v1791
        %2114 = vmatpush.msra.mxu0 %v1789
        %2115 = vmatpush.msra.mxu0 %v1787
        %2116 = vmatpush.msra.mxu0 %v1785
        %2117 = vmatpush.msra.mxu0 %v1783
        %2118 = vmatpush.msra.mxu0 %v1781
        %2119 = vmatmul.f32.gmra.mxu0 %v2082
        %v2120 = vpop.f32.mrf.mxu0
        %v2121 = vadd.f32 0.0, %v2120
        %2122 = vdwg.mxu0
        %v2123 = vlog2.pop %v2101
        %v2124 = vmul.f32 %v2123, 0.6931472
        %v2125 = vlog2.pop %v2121
        %v2126 = vmul.f32 %v2125, 0.6931472
        %v2127 = vadd.f32 %v2124, %v2073
        %v2128 = vadd.f32 %v2126, %v2076
        %v2129 = vmul.f32 %v2127, -0.1
        %v2130 = vmul.f32 %v2128, -0.1
        %v2131 = vmul.f32 %v2129, 10.0
        %v2132 = vmul.f32 %v2130, 10.0
        %v2133 = vadd.f32 %v2131, %v1713
        %v2134 = vadd.f32 %v2132, %v1715
        %v2135 = vsel %vm1814, %v2133, -inf
        %2136 = vmax.xlane.f32.xlu0 %v2135
        %v2137 = vpop.xlane.xlu0 %2136
        %v2138 = vsel %vm1814, %v2134, -inf
        %2139 = vmax.xlane.f32.xlu0 %v2138
        %v2140 = vpop.xlane.xlu0 %2139
        %v2141 = vsub.f32 %v2133, %v2137
        %v2142 = vsub.f32 %v2134, %v2140
        %v2143 = vmul.f32 %v2141, 1.442695
        %v2144 = vpow.pop %v2143
        %v2145 = vmul.f32 %v2142, 1.442695
        %v2146 = vpow.pop %v2145
        %2147 = vmatpush.xpose.msra.mxu0 %v1779
        %2148 = vmatpush.xpose.msra.mxu0 %v1777
        %2149 = vmatpush.xpose.msra.mxu0 %v1775
        %2150 = vmatpush.xpose.msra.mxu0 %v1773
        %2151 = vmatpush.xpose.msra.mxu0 %v1771
        %2152 = vmatpush.xpose.msra.mxu0 %v1769
        %2153 = vmatpush.xpose.msra.mxu0 %v1767
        %2154 = vmatpush.xpose.msra.mxu0 %v1765
        %2155 = vmatpush.xpose.msra.mxu0 %v1763
        %2156 = vmatpush.xpose.msra.mxu0 %v1761
        %2157 = vmatpush.xpose.msra.mxu0 %v1759
        %2158 = vmatpush.xpose.msra.mxu0 %v1757
        %2159 = vmatpush.xpose.msra.mxu0 %v1755
        %2160 = vmatpush.xpose.msra.mxu0 %v1753
        %2161 = vmatpush.xpose.msra.mxu0 %v1751
        %2162 = vmatpush.xpose.msra.mxu0 %v1749
        %2163 = vmatmul.f32.gmra.mxu0 %v2144
        %v2164 = vpop.f32.mrf.mxu0
        %v2165 = vadd.f32 0.0, %v2164
        %2166 = vdwg.mxu0
        %2167 = vmatpush.xpose.msra.mxu0 %v1811
        %2168 = vmatpush.xpose.msra.mxu0 %v1809
        %2169 = vmatpush.xpose.msra.mxu0 %v1807
        %2170 = vmatpush.xpose.msra.mxu0 %v1805
        %2171 = vmatpush.xpose.msra.mxu0 %v1803
        %2172 = vmatpush.xpose.msra.mxu0 %v1801
        %2173 = vmatpush.xpose.msra.mxu0 %v1799
        %2174 = vmatpush.xpose.msra.mxu0 %v1797
        %2175 = vmatpush.xpose.msra.mxu0 %v1795
        %2176 = vmatpush.xpose.msra.mxu0 %v1793
        %2177 = vmatpush.xpose.msra.mxu0 %v1791
        %2178 = vmatpush.xpose.msra.mxu0 %v1789
        %2179 = vmatpush.xpose.msra.mxu0 %v1787
        %2180 = vmatpush.xpose.msra.mxu0 %v1785
        %2181 = vmatpush.xpose.msra.mxu0 %v1783
        %2182 = vmatpush.xpose.msra.mxu0 %v1781
        %2183 = vmatmul.f32.gmra.mxu0 %v2146
        %v2184 = vpop.f32.mrf.mxu0
        %v2185 = vadd.f32 0.0, %v2184
        %2186 = vdwg.mxu0
        %v2187 = vlog2.pop %v2165
        %v2188 = vmul.f32 %v2187, 0.6931472
        %v2189 = vlog2.pop %v2185
        %v2190 = vmul.f32 %v2189, 0.6931472
        %v2191 = vadd.f32 %v2188, %v2137
        %v2192 = vadd.f32 %v2190, %v2140
        %v2193 = vmul.f32 %v2191, -0.1
        %v2194 = vmul.f32 %v2192, -0.1
        %v2195 = vmul.f32 %v2193, 10.0
        %v2196 = vmul.f32 %v2194, 10.0
        %v2197 = vadd.f32 %v2195, %v1707
        %v2198 = vadd.f32 %v2196, %v1709
        %v2199 = vsel %vm1814, %v2197, -inf
        %2200 = vmax.xlane.f32.xlu0 %v2199
        %v2201 = vpop.xlane.xlu0 %2200
        %v2202 = vsel %vm1814, %v2198, -inf
        %2203 = vmax.xlane.f32.xlu0 %v2202
        %v2204 = vpop.xlane.xlu0 %2203
        %v2205 = vsub.f32 %v2197, %v2201
        %v2206 = vsub.f32 %v2198, %v2204
        %v2207 = vmul.f32 %v2205, 1.442695
        %v2208 = vpow.pop %v2207
        %v2209 = vmul.f32 %v2206, 1.442695
        %v2210 = vpow.pop %v2209
        %2211 = vmatpush.msra.mxu0 %v1779
        %2212 = vmatpush.msra.mxu0 %v1777
        %2213 = vmatpush.msra.mxu0 %v1775
        %2214 = vmatpush.msra.mxu0 %v1773
        %2215 = vmatpush.msra.mxu0 %v1771
        %2216 = vmatpush.msra.mxu0 %v1769
        %2217 = vmatpush.msra.mxu0 %v1767
        %2218 = vmatpush.msra.mxu0 %v1765
        %2219 = vmatpush.msra.mxu0 %v1763
        %2220 = vmatpush.msra.mxu0 %v1761
        %2221 = vmatpush.msra.mxu0 %v1759
        %2222 = vmatpush.msra.mxu0 %v1757
        %2223 = vmatpush.msra.mxu0 %v1755
        %2224 = vmatpush.msra.mxu0 %v1753
        %2225 = vmatpush.msra.mxu0 %v1751
        %2226 = vmatpush.msra.mxu0 %v1749
        %2227 = vmatmul.f32.gmra.mxu0 %v2208
        %v2228 = vpop.f32.mrf.mxu0
        %v2229 = vadd.f32 0.0, %v2228
        %2230 = vdwg.mxu0
        %2231 = vmatpush.msra.mxu0 %v1811
        %2232 = vmatpush.msra.mxu0 %v1809
        %2233 = vmatpush.msra.mxu0 %v1807
        %2234 = vmatpush.msra.mxu0 %v1805
        %2235 = vmatpush.msra.mxu0 %v1803
        %2236 = vmatpush.msra.mxu0 %v1801
        %2237 = vmatpush.msra.mxu0 %v1799
        %2238 = vmatpush.msra.mxu0 %v1797
        %2239 = vmatpush.msra.mxu0 %v1795
        %2240 = vmatpush.msra.mxu0 %v1793
        %2241 = vmatpush.msra.mxu0 %v1791
        %2242 = vmatpush.msra.mxu0 %v1789
        %2243 = vmatpush.msra.mxu0 %v1787
        %2244 = vmatpush.msra.mxu0 %v1785
        %2245 = vmatpush.msra.mxu0 %v1783
        %2246 = vmatpush.msra.mxu0 %v1781
        %2247 = vmatmul.f32.gmra.mxu0 %v2210
        %v2248 = vpop.f32.mrf.mxu0
        %v2249 = vadd.f32 0.0, %v2248
        %2250 = vdwg.mxu0
        %v2251 = vlog2.pop %v2229
        %v2252 = vmul.f32 %v2251, 0.6931472
        %v2253 = vlog2.pop %v2249
        %v2254 = vmul.f32 %v2253, 0.6931472
        %v2255 = vadd.f32 %v2252, %v2201
        %v2256 = vadd.f32 %v2254, %v2204
        %v2257 = vmul.f32 %v2255, -0.1
        %v2258 = vmul.f32 %v2256, -0.1
        %v2259 = vmul.f32 %v2257, 10.0
        %v2260 = vmul.f32 %v2258, 10.0
        %v2261 = vadd.f32 %v2259, %v1713
        %v2262 = vadd.f32 %v2260, %v1715
        %v2263 = vsel %vm1814, %v2261, -inf
        %2264 = vmax.xlane.f32.xlu0 %v2263
        %v2265 = vpop.xlane.xlu0 %2264
        %v2266 = vsel %vm1814, %v2262, -inf
        %2267 = vmax.xlane.f32.xlu0 %v2266
        %v2268 = vpop.xlane.xlu0 %2267
        %v2269 = vsub.f32 %v2261, %v2265
        %v2270 = vsub.f32 %v2262, %v2268
        %v2271 = vmul.f32 %v2269, 1.442695
        %v2272 = vpow.pop %v2271
        %v2273 = vmul.f32 %v2270, 1.442695
        %v2274 = vpow.pop %v2273
        %2275 = vmatpush.xpose.msra.mxu0 %v1779
        %2276 = vmatpush.xpose.msra.mxu0 %v1777
        %2277 = vmatpush.xpose.msra.mxu0 %v1775
        %2278 = vmatpush.xpose.msra.mxu0 %v1773
        %2279 = vmatpush.xpose.msra.mxu0 %v1771
        %2280 = vmatpush.xpose.msra.mxu0 %v1769
        %2281 = vmatpush.xpose.msra.mxu0 %v1767
        %2282 = vmatpush.xpose.msra.mxu0 %v1765
        %2283 = vmatpush.xpose.msra.mxu0 %v1763
        %2284 = vmatpush.xpose.msra.mxu0 %v1761
        %2285 = vmatpush.xpose.msra.mxu0 %v1759
        %2286 = vmatpush.xpose.msra.mxu0 %v1757
        %2287 = vmatpush.xpose.msra.mxu0 %v1755
        %2288 = vmatpush.xpose.msra.mxu0 %v1753
        %2289 = vmatpush.xpose.msra.mxu0 %v1751
        %2290 = vmatpush.xpose.msra.mxu0 %v1749
        %2291 = vmatmul.f32.gmra.mxu0 %v2272
        %v2292 = vpop.f32.mrf.mxu0
        %v2293 = vadd.f32 0.0, %v2292
        %2294 = vdwg.mxu0
        %2295 = vmatpush.xpose.msra.mxu0 %v1811
        %2296 = vmatpush.xpose.msra.mxu0 %v1809
        %2297 = vmatpush.xpose.msra.mxu0 %v1807
        %2298 = vmatpush.xpose.msra.mxu0 %v1805
        %2299 = vmatpush.xpose.msra.mxu0 %v1803
        %2300 = vmatpush.xpose.msra.mxu0 %v1801
        %2301 = vmatpush.xpose.msra.mxu0 %v1799
        %2302 = vmatpush.xpose.msra.mxu0 %v1797
        %2303 = vmatpush.xpose.msra.mxu0 %v1795
        %2304 = vmatpush.xpose.msra.mxu0 %v1793
        %2305 = vmatpush.xpose.msra.mxu0 %v1791
        %2306 = vmatpush.xpose.msra.mxu0 %v1789
        %2307 = vmatpush.xpose.msra.mxu0 %v1787
        %2308 = vmatpush.xpose.msra.mxu0 %v1785
        %2309 = vmatpush.xpose.msra.mxu0 %v1783
        %2310 = vmatpush.xpose.msra.mxu0 %v1781
        %2311 = vmatmul.f32.gmra.mxu0 %v2274
        %v2312 = vpop.f32.mrf.mxu0
        %v2313 = vadd.f32 0.0, %v2312
        %2314 = vdwg.mxu0
        %v2315 = vlog2.pop %v2293
        %v2316 = vmul.f32 %v2315, 0.6931472
        %v2317 = vlog2.pop %v2313
        %v2318 = vmul.f32 %v2317, 0.6931472
        %v2319 = vadd.f32 %v2316, %v2265
        %v2320 = vadd.f32 %v2318, %v2268
        %v2321 = vmul.f32 %v2319, -0.1
        %v2322 = vmul.f32 %v2320, -0.1
        %v2323 = vmul.f32 %v2321, 10.0
        %v2324 = vmul.f32 %v2322, 10.0
        %v2325 = vadd.f32 %v2323, %v1707
        %v2326 = vadd.f32 %v2324, %v1709
        %v2327 = vsel %vm1814, %v2325, -inf
        %2328 = vmax.xlane.f32.xlu0 %v2327
        %v2329 = vpop.xlane.xlu0 %2328
        %v2330 = vsel %vm1814, %v2326, -inf
        %2331 = vmax.xlane.f32.xlu0 %v2330
        %v2332 = vpop.xlane.xlu0 %2331
        %v2333 = vsub.f32 %v2325, %v2329
        %v2334 = vsub.f32 %v2326, %v2332
        %v2335 = vmul.f32 %v2333, 1.442695
        %v2336 = vpow.pop %v2335
        %v2337 = vmul.f32 %v2334, 1.442695
        %v2338 = vpow.pop %v2337
        %2339 = vmatpush.msra.mxu0 %v1779
        %2340 = vmatpush.msra.mxu0 %v1777
        %2341 = vmatpush.msra.mxu0 %v1775
        %2342 = vmatpush.msra.mxu0 %v1773
        %2343 = vmatpush.msra.mxu0 %v1771
        %2344 = vmatpush.msra.mxu0 %v1769
        %2345 = vmatpush.msra.mxu0 %v1767
        %2346 = vmatpush.msra.mxu0 %v1765
        %2347 = vmatpush.msra.mxu0 %v1763
        %2348 = vmatpush.msra.mxu0 %v1761
        %2349 = vmatpush.msra.mxu0 %v1759
        %2350 = vmatpush.msra.mxu0 %v1757
        %2351 = vmatpush.msra.mxu0 %v1755
        %2352 = vmatpush.msra.mxu0 %v1753
        %2353 = vmatpush.msra.mxu0 %v1751
        %2354 = vmatpush.msra.mxu0 %v1749
        %2355 = vmatmul.f32.gmra.mxu0 %v2336
        %v2356 = vpop.f32.mrf.mxu0
        %v2357 = vadd.f32 0.0, %v2356
        %2358 = vdwg.mxu0
        %2359 = vmatpush.msra.mxu0 %v1811
        %2360 = vmatpush.msra.mxu0 %v1809
        %2361 = vmatpush.msra.mxu0 %v1807
        %2362 = vmatpush.msra.mxu0 %v1805
        %2363 = vmatpush.msra.mxu0 %v1803
        %2364 = vmatpush.msra.mxu0 %v1801
        %2365 = vmatpush.msra.mxu0 %v1799
        %2366 = vmatpush.msra.mxu0 %v1797
        %2367 = vmatpush.msra.mxu0 %v1795
        %2368 = vmatpush.msra.mxu0 %v1793
        %2369 = vmatpush.msra.mxu0 %v1791
        %2370 = vmatpush.msra.mxu0 %v1789
        %2371 = vmatpush.msra.mxu0 %v1787
        %2372 = vmatpush.msra.mxu0 %v1785
        %2373 = vmatpush.msra.mxu0 %v1783
        %2374 = vmatpush.msra.mxu0 %v1781
        %2375 = vmatmul.f32.gmra.mxu0 %v2338
        %v2376 = vpop.f32.mrf.mxu0
        %v2377 = vadd.f32 0.0, %v2376
        %2378 = vdwg.mxu0
        %v2379 = vlog2.pop %v2357
        %v2380 = vmul.f32 %v2379, 0.6931472
        %v2381 = vlog2.pop %v2377
        %v2382 = vmul.f32 %v2381, 0.6931472
        %v2383 = vadd.f32 %v2380, %v2329
        %v2384 = vadd.f32 %v2382, %v2332
        %v2385 = vmul.f32 %v2383, -0.1
        %v2386 = vmul.f32 %v2384, -0.1
        %v2387 = vmul.f32 %v2385, 10.0
        %v2388 = vmul.f32 %v2386, 10.0
        %v2389 = vadd.f32 %v2387, %v1713
        %v2390 = vadd.f32 %v2388, %v1715
        %v2391 = vsel %vm1814, %v2389, -inf
        %2392 = vmax.xlane.f32.xlu0 %v2391
        %v2393 = vpop.xlane.xlu0 %2392
        %v2394 = vsel %vm1814, %v2390, -inf
        %2395 = vmax.xlane.f32.xlu0 %v2394
        %v2396 = vpop.xlane.xlu0 %2395
        %v2397 = vsub.f32 %v2389, %v2393
        %v2398 = vsub.f32 %v2390, %v2396
        %v2399 = vmul.f32 %v2397, 1.442695
        %v2400 = vpow.pop %v2399
        %v2401 = vmul.f32 %v2398, 1.442695
        %v2402 = vpow.pop %v2401
        %2403 = vmatpush.xpose.msra.mxu0 %v1779
        %2404 = vmatpush.xpose.msra.mxu0 %v1777
        %2405 = vmatpush.xpose.msra.mxu0 %v1775
        %2406 = vmatpush.xpose.msra.mxu0 %v1773
        %2407 = vmatpush.xpose.msra.mxu0 %v1771
        %2408 = vmatpush.xpose.msra.mxu0 %v1769
        %2409 = vmatpush.xpose.msra.mxu0 %v1767
        %2410 = vmatpush.xpose.msra.mxu0 %v1765
        %2411 = vmatpush.xpose.msra.mxu0 %v1763
        %2412 = vmatpush.xpose.msra.mxu0 %v1761
        %2413 = vmatpush.xpose.msra.mxu0 %v1759
        %2414 = vmatpush.xpose.msra.mxu0 %v1757
        %2415 = vmatpush.xpose.msra.mxu0 %v1755
        %2416 = vmatpush.xpose.msra.mxu0 %v1753
        %2417 = vmatpush.xpose.msra.mxu0 %v1751
        %2418 = vmatpush.xpose.msra.mxu0 %v1749
        %2419 = vmatmul.f32.gmra.mxu0 %v2400
        %v2420 = vpop.f32.mrf.mxu0
        %v2421 = vadd.f32 0.0, %v2420
        %2422 = vdwg.mxu0
        %2423 = vmatpush.xpose.msra.mxu0 %v1811
        %2424 = vmatpush.xpose.msra.mxu0 %v1809
        %2425 = vmatpush.xpose.msra.mxu0 %v1807
        %2426 = vmatpush.xpose.msra.mxu0 %v1805
        %2427 = vmatpush.xpose.msra.mxu0 %v1803
        %2428 = vmatpush.xpose.msra.mxu0 %v1801
        %2429 = vmatpush.xpose.msra.mxu0 %v1799
        %2430 = vmatpush.xpose.msra.mxu0 %v1797
        %2431 = vmatpush.xpose.msra.mxu0 %v1795
        %2432 = vmatpush.xpose.msra.mxu0 %v1793
        %2433 = vmatpush.xpose.msra.mxu0 %v1791
        %2434 = vmatpush.xpose.msra.mxu0 %v1789
        %2435 = vmatpush.xpose.msra.mxu0 %v1787
        %2436 = vmatpush.xpose.msra.mxu0 %v1785
        %2437 = vmatpush.xpose.msra.mxu0 %v1783
        %2438 = vmatpush.xpose.msra.mxu0 %v1781
        %2439 = vmatmul.f32.gmra.mxu0 %v2402
        %v2440 = vpop.f32.mrf.mxu0
        %v2441 = vadd.f32 0.0, %v2440
        %2442 = vdwg.mxu0
        %v2443 = vlog2.pop %v2421
        %v2444 = vmul.f32 %v2443, 0.6931472
        %v2445 = vlog2.pop %v2441
        %v2446 = vmul.f32 %v2445, 0.6931472
        %v2447 = vadd.f32 %v2444, %v2393
        %v2448 = vadd.f32 %v2446, %v2396
        %v2449 = vmul.f32 %v2447, -0.1
        %v2450 = vmul.f32 %v2448, -0.1
        %v2451 = vmul.f32 %v2449, 10.0
        %v2452 = vmul.f32 %v2450, 10.0
        %v2453 = vadd.f32 %v2451, %v1707
        %v2454 = vadd.f32 %v2452, %v1709
        %v2455 = vsel %vm1814, %v2453, -inf
        %2456 = vmax.xlane.f32.xlu0 %v2455
        %v2457 = vpop.xlane.xlu0 %2456
        %v2458 = vsel %vm1814, %v2454, -inf
        %2459 = vmax.xlane.f32.xlu0 %v2458
        %v2460 = vpop.xlane.xlu0 %2459
        %v2461 = vsub.f32 %v2453, %v2457
        %v2462 = vsub.f32 %v2454, %v2460
        %v2463 = vmul.f32 %v2461, 1.442695
        %v2464 = vpow.pop %v2463
        %v2465 = vmul.f32 %v2462, 1.442695
        %v2466 = vpow.pop %v2465
        %2467 = vmatpush.msra.mxu0 %v1779
        %2468 = vmatpush.msra.mxu0 %v1777
        %2469 = vmatpush.msra.mxu0 %v1775
        %2470 = vmatpush.msra.mxu0 %v1773
        %2471 = vmatpush.msra.mxu0 %v1771
        %2472 = vmatpush.msra.mxu0 %v1769
        %2473 = vmatpush.msra.mxu0 %v1767
        %2474 = vmatpush.msra.mxu0 %v1765
        %2475 = vmatpush.msra.mxu0 %v1763
        %2476 = vmatpush.msra.mxu0 %v1761
        %2477 = vmatpush.msra.mxu0 %v1759
        %2478 = vmatpush.msra.mxu0 %v1757
        %2479 = vmatpush.msra.mxu0 %v1755
        %2480 = vmatpush.msra.mxu0 %v1753
        %2481 = vmatpush.msra.mxu0 %v1751
        %2482 = vmatpush.msra.mxu0 %v1749
        %2483 = vmatmul.f32.gmra.mxu0 %v2464
        %v2484 = vpop.f32.mrf.mxu0
        %v2485 = vadd.f32 0.0, %v2484
        %2486 = vdwg.mxu0
        %2487 = vmatpush.msra.mxu0 %v1811
        %2488 = vmatpush.msra.mxu0 %v1809
        %2489 = vmatpush.msra.mxu0 %v1807
        %2490 = vmatpush.msra.mxu0 %v1805
        %2491 = vmatpush.msra.mxu0 %v1803
        %2492 = vmatpush.msra.mxu0 %v1801
        %2493 = vmatpush.msra.mxu0 %v1799
        %2494 = vmatpush.msra.mxu0 %v1797
        %2495 = vmatpush.msra.mxu0 %v1795
        %2496 = vmatpush.msra.mxu0 %v1793
        %2497 = vmatpush.msra.mxu0 %v1791
        %2498 = vmatpush.msra.mxu0 %v1789
        %2499 = vmatpush.msra.mxu0 %v1787
        %2500 = vmatpush.msra.mxu0 %v1785
        %2501 = vmatpush.msra.mxu0 %v1783
        %2502 = vmatpush.msra.mxu0 %v1781
        %2503 = vmatmul.f32.gmra.mxu0 %v2466
        %v2504 = vpop.f32.mrf.mxu0
        %v2505 = vadd.f32 0.0, %v2504
        %2506 = vdwg.mxu0
        %v2507 = vlog2.pop %v2485
        %v2508 = vmul.f32 %v2507, 0.6931472
        %v2509 = vlog2.pop %v2505
        %v2510 = vmul.f32 %v2509, 0.6931472
        %v2511 = vadd.f32 %v2508, %v2457
        %v2512 = vadd.f32 %v2510, %v2460
        %v2513 = vmul.f32 %v2511, -0.1
        %v2514 = vmul.f32 %v2512, -0.1
        %v2515 = vmul.f32 %v2513, 10.0
        %v2516 = vmul.f32 %v2514, 10.0
        %v2517 = vadd.f32 %v2515, %v1713
        %v2518 = vadd.f32 %v2516, %v1715
        %v2519 = vsel %vm1814, %v2517, -inf
        %2520 = vmax.xlane.f32.xlu0 %v2519
        %v2521 = vpop.xlane.xlu0 %2520
        %v2522 = vsel %vm1814, %v2518, -inf
        %2523 = vmax.xlane.f32.xlu0 %v2522
        %v2524 = vpop.xlane.xlu0 %2523
        %v2525 = vsub.f32 %v2517, %v2521
        %v2526 = vsub.f32 %v2518, %v2524
        %v2527 = vmul.f32 %v2525, 1.442695
        %v2528 = vpow.pop %v2527
        %v2529 = vmul.f32 %v2526, 1.442695
        %v2530 = vpow.pop %v2529
        %2531 = vmatpush.xpose.msra.mxu0 %v1779
        %2532 = vmatpush.xpose.msra.mxu0 %v1777
        %2533 = vmatpush.xpose.msra.mxu0 %v1775
        %2534 = vmatpush.xpose.msra.mxu0 %v1773
        %2535 = vmatpush.xpose.msra.mxu0 %v1771
        %2536 = vmatpush.xpose.msra.mxu0 %v1769
        %2537 = vmatpush.xpose.msra.mxu0 %v1767
        %2538 = vmatpush.xpose.msra.mxu0 %v1765
        %2539 = vmatpush.xpose.msra.mxu0 %v1763
        %2540 = vmatpush.xpose.msra.mxu0 %v1761
        %2541 = vmatpush.xpose.msra.mxu0 %v1759
        %2542 = vmatpush.xpose.msra.mxu0 %v1757
        %2543 = vmatpush.xpose.msra.mxu0 %v1755
        %2544 = vmatpush.xpose.msra.mxu0 %v1753
        %2545 = vmatpush.xpose.msra.mxu0 %v1751
        %2546 = vmatpush.xpose.msra.mxu0 %v1749
        %2547 = vmatmul.f32.gmra.mxu0 %v2528
        %v2548 = vpop.f32.mrf.mxu0
        %v2549 = vadd.f32 0.0, %v2548
        %2550 = vdwg.mxu0
        %2551 = vmatpush.xpose.msra.mxu0 %v1811
        %2552 = vmatpush.xpose.msra.mxu0 %v1809
        %2553 = vmatpush.xpose.msra.mxu0 %v1807
        %2554 = vmatpush.xpose.msra.mxu0 %v1805
        %2555 = vmatpush.xpose.msra.mxu0 %v1803
        %2556 = vmatpush.xpose.msra.mxu0 %v1801
        %2557 = vmatpush.xpose.msra.mxu0 %v1799
        %2558 = vmatpush.xpose.msra.mxu0 %v1797
        %2559 = vmatpush.xpose.msra.mxu0 %v1795
        %2560 = vmatpush.xpose.msra.mxu0 %v1793
        %2561 = vmatpush.xpose.msra.mxu0 %v1791
        %2562 = vmatpush.xpose.msra.mxu0 %v1789
        %2563 = vmatpush.xpose.msra.mxu0 %v1787
        %2564 = vmatpush.xpose.msra.mxu0 %v1785
        %2565 = vmatpush.xpose.msra.mxu0 %v1783
        %2566 = vmatpush.xpose.msra.mxu0 %v1781
        %2567 = vmatmul.f32.gmra.mxu0 %v2530
        %v2568 = vpop.f32.mrf.mxu0
        %v2569 = vadd.f32 0.0, %v2568
        %2570 = vdwg.mxu0
        %v2571 = vlog2.pop %v2549
        %v2572 = vmul.f32 %v2571, 0.6931472
        %v2573 = vlog2.pop %v2569
        %v2574 = vmul.f32 %v2573, 0.6931472
        %v2575 = vadd.f32 %v2572, %v2521
        %v2576 = vadd.f32 %v2574, %v2524
        %v2577 = vmul.f32 %v2575, -0.1
        %v2578 = vmul.f32 %v2576, -0.1
        %v2579 = vmul.f32 %v2577, 10.0
        %v2580 = vmul.f32 %v2578, 10.0
        %v2581 = vadd.f32 %v2579, %v1707
        %v2582 = vadd.f32 %v2580, %v1709
        %v2583 = vsel %vm1814, %v2581, -inf
        %2584 = vmax.xlane.f32.xlu0 %v2583
        %v2585 = vpop.xlane.xlu0 %2584
        %v2586 = vsel %vm1814, %v2582, -inf
        %2587 = vmax.xlane.f32.xlu0 %v2586
        %v2588 = vpop.xlane.xlu0 %2587
        %v2589 = vsub.f32 %v2581, %v2585
        %v2590 = vsub.f32 %v2582, %v2588
        %v2591 = vmul.f32 %v2589, 1.442695
        %v2592 = vpow.pop %v2591
        %v2593 = vmul.f32 %v2590, 1.442695
        %v2594 = vpow.pop %v2593
        %2595 = vmatpush.msra.mxu0 %v1779
        %2596 = vmatpush.msra.mxu0 %v1777
        %2597 = vmatpush.msra.mxu0 %v1775
        %2598 = vmatpush.msra.mxu0 %v1773
        %2599 = vmatpush.msra.mxu0 %v1771
        %2600 = vmatpush.msra.mxu0 %v1769
        %2601 = vmatpush.msra.mxu0 %v1767
        %2602 = vmatpush.msra.mxu0 %v1765
        %2603 = vmatpush.msra.mxu0 %v1763
        %2604 = vmatpush.msra.mxu0 %v1761
        %2605 = vmatpush.msra.mxu0 %v1759
        %2606 = vmatpush.msra.mxu0 %v1757
        %2607 = vmatpush.msra.mxu0 %v1755
        %2608 = vmatpush.msra.mxu0 %v1753
        %2609 = vmatpush.msra.mxu0 %v1751
        %2610 = vmatpush.msra.mxu0 %v1749
        %2611 = vmatmul.f32.gmra.mxu0 %v2592
        %v2612 = vpop.f32.mrf.mxu0
        %v2613 = vadd.f32 0.0, %v2612
        %2614 = vdwg.mxu0
        %2615 = vmatpush.msra.mxu0 %v1811
        %2616 = vmatpush.msra.mxu0 %v1809
        %2617 = vmatpush.msra.mxu0 %v1807
        %2618 = vmatpush.msra.mxu0 %v1805
        %2619 = vmatpush.msra.mxu0 %v1803
        %2620 = vmatpush.msra.mxu0 %v1801
        %2621 = vmatpush.msra.mxu0 %v1799
        %2622 = vmatpush.msra.mxu0 %v1797
        %2623 = vmatpush.msra.mxu0 %v1795
        %2624 = vmatpush.msra.mxu0 %v1793
        %2625 = vmatpush.msra.mxu0 %v1791
        %2626 = vmatpush.msra.mxu0 %v1789
        %2627 = vmatpush.msra.mxu0 %v1787
        %2628 = vmatpush.msra.mxu0 %v1785
        %2629 = vmatpush.msra.mxu0 %v1783
        %2630 = vmatpush.msra.mxu0 %v1781
        %2631 = vmatmul.f32.gmra.mxu0 %v2594
        %v2632 = vpop.f32.mrf.mxu0
        %v2633 = vadd.f32 0.0, %v2632
        %2634 = vdwg.mxu0
        %v2635 = vlog2.pop %v2613
        %v2636 = vmul.f32 %v2635, 0.6931472
        %v2637 = vlog2.pop %v2633
        %v2638 = vmul.f32 %v2637, 0.6931472
        %v2639 = vadd.f32 %v2636, %v2585
        %v2640 = vadd.f32 %v2638, %v2588
        %v2641 = vmul.f32 %v2639, -0.1
        %v2642 = vmul.f32 %v2640, -0.1
        %v2643 = vmul.f32 %v2641, 10.0
        %v2644 = vmul.f32 %v2642, 10.0
        %v2645 = vadd.f32 %v2643, %v1713
        %v2646 = vadd.f32 %v2644, %v1715
        %v2647 = vsel %vm1814, %v2645, -inf
        %2648 = vmax.xlane.f32.xlu0 %v2647
        %v2649 = vpop.xlane.xlu0 %2648
        %v2650 = vsel %vm1814, %v2646, -inf
        %2651 = vmax.xlane.f32.xlu0 %v2650
        %v2652 = vpop.xlane.xlu0 %2651
        %v2653 = vsub.f32 %v2645, %v2649
        %v2654 = vsub.f32 %v2646, %v2652
        %v2655 = vmul.f32 %v2653, 1.442695
        %v2656 = vpow.pop %v2655
        %v2657 = vmul.f32 %v2654, 1.442695
        %v2658 = vpow.pop %v2657
        %2659 = vmatpush.xpose.msra.mxu0 %v1779
        %2660 = vmatpush.xpose.msra.mxu0 %v1777
        %2661 = vmatpush.xpose.msra.mxu0 %v1775
        %2662 = vmatpush.xpose.msra.mxu0 %v1773
        %2663 = vmatpush.xpose.msra.mxu0 %v1771
        %2664 = vmatpush.xpose.msra.mxu0 %v1769
        %2665 = vmatpush.xpose.msra.mxu0 %v1767
        %2666 = vmatpush.xpose.msra.mxu0 %v1765
        %2667 = vmatpush.xpose.msra.mxu0 %v1763
        %2668 = vmatpush.xpose.msra.mxu0 %v1761
        %2669 = vmatpush.xpose.msra.mxu0 %v1759
        %2670 = vmatpush.xpose.msra.mxu0 %v1757
        %2671 = vmatpush.xpose.msra.mxu0 %v1755
        %2672 = vmatpush.xpose.msra.mxu0 %v1753
        %2673 = vmatpush.xpose.msra.mxu0 %v1751
        %2674 = vmatpush.xpose.msra.mxu0 %v1749
        %2675 = vmatmul.f32.gmra.mxu0 %v2656
        %v2676 = vpop.f32.mrf.mxu0
        %v2677 = vadd.f32 0.0, %v2676
        %2678 = vdwg.mxu0
        %2679 = vmatpush.xpose.msra.mxu0 %v1811
        %2680 = vmatpush.xpose.msra.mxu0 %v1809
        %2681 = vmatpush.xpose.msra.mxu0 %v1807
        %2682 = vmatpush.xpose.msra.mxu0 %v1805
        %2683 = vmatpush.xpose.msra.mxu0 %v1803
        %2684 = vmatpush.xpose.msra.mxu0 %v1801
        %2685 = vmatpush.xpose.msra.mxu0 %v1799
        %2686 = vmatpush.xpose.msra.mxu0 %v1797
        %2687 = vmatpush.xpose.msra.mxu0 %v1795
        %2688 = vmatpush.xpose.msra.mxu0 %v1793
        %2689 = vmatpush.xpose.msra.mxu0 %v1791
        %2690 = vmatpush.xpose.msra.mxu0 %v1789
        %2691 = vmatpush.xpose.msra.mxu0 %v1787
        %2692 = vmatpush.xpose.msra.mxu0 %v1785
        %2693 = vmatpush.xpose.msra.mxu0 %v1783
        %2694 = vmatpush.xpose.msra.mxu0 %v1781
        %2695 = vmatmul.f32.gmra.mxu0 %v2658
        %v2696 = vpop.f32.mrf.mxu0
        %v2697 = vadd.f32 0.0, %v2696
        %2698 = vdwg.mxu0
        %v2699 = vlog2.pop %v2677
        %v2700 = vmul.f32 %v2699, 0.6931472
        %v2701 = vlog2.pop %v2697
        %v2702 = vmul.f32 %v2701, 0.6931472
        %v2703 = vadd.f32 %v2700, %v2649
        %v2704 = vadd.f32 %v2702, %v2652
        %v2705 = vmul.f32 %v2703, -0.1
        %v2706 = vmul.f32 %v2704, -0.1
        %v2707 = vmul.f32 %v2705, 10.0
        %v2708 = vmul.f32 %v2706, 10.0
        %v2709 = vadd.f32 %v2707, %v1707
        %v2710 = vadd.f32 %v2708, %v1709
        %v2711 = vsel %vm1814, %v2709, -inf
        %2712 = vmax.xlane.f32.xlu0 %v2711
        %v2713 = vpop.xlane.xlu0 %2712
        %v2714 = vsel %vm1814, %v2710, -inf
        %2715 = vmax.xlane.f32.xlu0 %v2714
        %v2716 = vpop.xlane.xlu0 %2715
        %v2717 = vsub.f32 %v2709, %v2713
        %v2718 = vsub.f32 %v2710, %v2716
        %v2719 = vmul.f32 %v2717, 1.442695
        %v2720 = vpow.pop %v2719
        %v2721 = vmul.f32 %v2718, 1.442695
        %v2722 = vpow.pop %v2721
        %2723 = vmatpush.msra.mxu0 %v1779
        %2724 = vmatpush.msra.mxu0 %v1777
        %2725 = vmatpush.msra.mxu0 %v1775
        %2726 = vmatpush.msra.mxu0 %v1773
        %2727 = vmatpush.msra.mxu0 %v1771
        %2728 = vmatpush.msra.mxu0 %v1769
        %2729 = vmatpush.msra.mxu0 %v1767
        %2730 = vmatpush.msra.mxu0 %v1765
        %2731 = vmatpush.msra.mxu0 %v1763
        %2732 = vmatpush.msra.mxu0 %v1761
        %2733 = vmatpush.msra.mxu0 %v1759
        %2734 = vmatpush.msra.mxu0 %v1757
        %2735 = vmatpush.msra.mxu0 %v1755
        %2736 = vmatpush.msra.mxu0 %v1753
        %2737 = vmatpush.msra.mxu0 %v1751
        %2738 = vmatpush.msra.mxu0 %v1749
        %2739 = vmatmul.f32.gmra.mxu0 %v2720
        %v2740 = vpop.f32.mrf.mxu0
        %v2741 = vadd.f32 0.0, %v2740
        %2742 = vdwg.mxu0
        %2743 = vmatpush.msra.mxu0 %v1811
        %2744 = vmatpush.msra.mxu0 %v1809
        %2745 = vmatpush.msra.mxu0 %v1807
        %2746 = vmatpush.msra.mxu0 %v1805
        %2747 = vmatpush.msra.mxu0 %v1803
        %2748 = vmatpush.msra.mxu0 %v1801
        %2749 = vmatpush.msra.mxu0 %v1799
        %2750 = vmatpush.msra.mxu0 %v1797
        %2751 = vmatpush.msra.mxu0 %v1795
        %2752 = vmatpush.msra.mxu0 %v1793
        %2753 = vmatpush.msra.mxu0 %v1791
        %2754 = vmatpush.msra.mxu0 %v1789
        %2755 = vmatpush.msra.mxu0 %v1787
        %2756 = vmatpush.msra.mxu0 %v1785
        %2757 = vmatpush.msra.mxu0 %v1783
        %2758 = vmatpush.msra.mxu0 %v1781
        %2759 = vmatmul.f32.gmra.mxu0 %v2722
        %v2760 = vpop.f32.mrf.mxu0
        %v2761 = vadd.f32 0.0, %v2760
        %2762 = vdwg.mxu0
        %v2763 = vlog2.pop %v2741
        %v2764 = vmul.f32 %v2763, 0.6931472
        %v2765 = vlog2.pop %v2761
        %v2766 = vmul.f32 %v2765, 0.6931472
        %v2767 = vadd.f32 %v2764, %v2713
        %v2768 = vadd.f32 %v2766, %v2716
        %v2769 = vmul.f32 %v2767, -0.1
        %v2770 = vmul.f32 %v2768, -0.1
        %v2771 = vmul.f32 %v2769, 10.0
        %v2772 = vmul.f32 %v2770, 10.0
        %v2773 = vadd.f32 %v2771, %v1713
        %v2774 = vadd.f32 %v2772, %v1715
        %v2775 = vsel %vm1814, %v2773, -inf
        %2776 = vmax.xlane.f32.xlu0 %v2775
        %v2777 = vpop.xlane.xlu0 %2776
        %v2778 = vsel %vm1814, %v2774, -inf
        %2779 = vmax.xlane.f32.xlu0 %v2778
        %v2780 = vpop.xlane.xlu0 %2779
        %v2781 = vsub.f32 %v2773, %v2777
        %v2782 = vsub.f32 %v2774, %v2780
        %v2783 = vmul.f32 %v2781, 1.442695
        %v2784 = vpow.pop %v2783
        %v2785 = vmul.f32 %v2782, 1.442695
        %v2786 = vpow.pop %v2785
        %2787 = vmatpush.xpose.msra.mxu0 %v1779
        %2788 = vmatpush.xpose.msra.mxu0 %v1777
        %2789 = vmatpush.xpose.msra.mxu0 %v1775
        %2790 = vmatpush.xpose.msra.mxu0 %v1773
        %2791 = vmatpush.xpose.msra.mxu0 %v1771
        %2792 = vmatpush.xpose.msra.mxu0 %v1769
        %2793 = vmatpush.xpose.msra.mxu0 %v1767
        %2794 = vmatpush.xpose.msra.mxu0 %v1765
        %2795 = vmatpush.xpose.msra.mxu0 %v1763
        %2796 = vmatpush.xpose.msra.mxu0 %v1761
        %2797 = vmatpush.xpose.msra.mxu0 %v1759
        %2798 = vmatpush.xpose.msra.mxu0 %v1757
        %2799 = vmatpush.xpose.msra.mxu0 %v1755
        %2800 = vmatpush.xpose.msra.mxu0 %v1753
        %2801 = vmatpush.xpose.msra.mxu0 %v1751
        %2802 = vmatpush.xpose.msra.mxu0 %v1749
        %2803 = vmatmul.f32.gmra.mxu0 %v2784
        %v2804 = vpop.f32.mrf.mxu0
        %v2805 = vadd.f32 0.0, %v2804
        %2806 = vdwg.mxu0
        %2807 = vmatpush.xpose.msra.mxu0 %v1811
        %2808 = vmatpush.xpose.msra.mxu0 %v1809
        %2809 = vmatpush.xpose.msra.mxu0 %v1807
        %2810 = vmatpush.xpose.msra.mxu0 %v1805
        %2811 = vmatpush.xpose.msra.mxu0 %v1803
        %2812 = vmatpush.xpose.msra.mxu0 %v1801
        %2813 = vmatpush.xpose.msra.mxu0 %v1799
        %2814 = vmatpush.xpose.msra.mxu0 %v1797
        %2815 = vmatpush.xpose.msra.mxu0 %v1795
        %2816 = vmatpush.xpose.msra.mxu0 %v1793
        %2817 = vmatpush.xpose.msra.mxu0 %v1791
        %2818 = vmatpush.xpose.msra.mxu0 %v1789
        %2819 = vmatpush.xpose.msra.mxu0 %v1787
        %2820 = vmatpush.xpose.msra.mxu0 %v1785
        %2821 = vmatpush.xpose.msra.mxu0 %v1783
        %2822 = vmatpush.xpose.msra.mxu0 %v1781
        %2823 = vmatmul.f32.gmra.mxu0 %v2786
        %v2824 = vpop.f32.mrf.mxu0
        %v2825 = vadd.f32 0.0, %v2824
        %2826 = vdwg.mxu0
        %v2827 = vlog2.pop %v2805
        %v2828 = vmul.f32 %v2827, 0.6931472
        %v2829 = vlog2.pop %v2825
        %v2830 = vmul.f32 %v2829, 0.6931472
        %v2831 = vadd.f32 %v2828, %v2777
        %v2832 = vadd.f32 %v2830, %v2780
        %v2833 = vmul.f32 %v2831, -0.1
        %v2834 = vmul.f32 %v2832, -0.1
        %v2835 = vmul.f32 %v2833, 10.0
        %v2836 = vmul.f32 %v2834, 10.0
        %v2837 = vadd.f32 %v2835, %v1707
        %v2838 = vadd.f32 %v2836, %v1709
        %v2839 = vsel %vm1814, %v2837, -inf
        %2840 = vmax.xlane.f32.xlu0 %v2839
        %v2841 = vpop.xlane.xlu0 %2840
        %v2842 = vsel %vm1814, %v2838, -inf
        %2843 = vmax.xlane.f32.xlu0 %v2842
        %v2844 = vpop.xlane.xlu0 %2843
        %v2845 = vsub.f32 %v2837, %v2841
        %v2846 = vsub.f32 %v2838, %v2844
        %v2847 = vmul.f32 %v2845, 1.442695
        %v2848 = vpow.pop %v2847
        %v2849 = vmul.f32 %v2846, 1.442695
        %v2850 = vpow.pop %v2849
        %2851 = vmatpush.msra.mxu0 %v1779
        %2852 = vmatpush.msra.mxu0 %v1777
        %2853 = vmatpush.msra.mxu0 %v1775
        %2854 = vmatpush.msra.mxu0 %v1773
        %2855 = vmatpush.msra.mxu0 %v1771
        %2856 = vmatpush.msra.mxu0 %v1769
        %2857 = vmatpush.msra.mxu0 %v1767
        %2858 = vmatpush.msra.mxu0 %v1765
        %2859 = vmatpush.msra.mxu0 %v1763
        %2860 = vmatpush.msra.mxu0 %v1761
        %2861 = vmatpush.msra.mxu0 %v1759
        %2862 = vmatpush.msra.mxu0 %v1757
        %2863 = vmatpush.msra.mxu0 %v1755
        %2864 = vmatpush.msra.mxu0 %v1753
        %2865 = vmatpush.msra.mxu0 %v1751
        %2866 = vmatpush.msra.mxu0 %v1749
        %2867 = vmatmul.f32.gmra.mxu0 %v2848
        %v2868 = vpop.f32.mrf.mxu0
        %v2869 = vadd.f32 0.0, %v2868
        %2870 = vdwg.mxu0
        %2871 = vmatpush.msra.mxu0 %v1811
        %2872 = vmatpush.msra.mxu0 %v1809
        %2873 = vmatpush.msra.mxu0 %v1807
        %2874 = vmatpush.msra.mxu0 %v1805
        %2875 = vmatpush.msra.mxu0 %v1803
        %2876 = vmatpush.msra.mxu0 %v1801
        %2877 = vmatpush.msra.mxu0 %v1799
        %2878 = vmatpush.msra.mxu0 %v1797
        %2879 = vmatpush.msra.mxu0 %v1795
        %2880 = vmatpush.msra.mxu0 %v1793
        %2881 = vmatpush.msra.mxu0 %v1791
        %2882 = vmatpush.msra.mxu0 %v1789
        %2883 = vmatpush.msra.mxu0 %v1787
        %2884 = vmatpush.msra.mxu0 %v1785
        %2885 = vmatpush.msra.mxu0 %v1783
        %2886 = vmatpush.msra.mxu0 %v1781
        %2887 = vmatmul.f32.gmra.mxu0 %v2850
        %v2888 = vpop.f32.mrf.mxu0
        %v2889 = vadd.f32 0.0, %v2888
        %2890 = vdwg.mxu0
        %v2891 = vlog2.pop %v2869
        %v2892 = vmul.f32 %v2891, 0.6931472
        %v2893 = vlog2.pop %v2889
        %v2894 = vmul.f32 %v2893, 0.6931472
        %v2895 = vadd.f32 %v2892, %v2841
        %v2896 = vadd.f32 %v2894, %v2844
        %v2897 = vmul.f32 %v2895, -0.1
        %v2898 = vmul.f32 %v2896, -0.1
        %v2899 = vmul.f32 %v2897, 10.0
        %v2900 = vmul.f32 %v2898, 10.0
        %v2901 = vadd.f32 %v2899, %v1713
        %v2902 = vadd.f32 %v2900, %v1715
        %v2903 = vsel %vm1814, %v2901, -inf
        %2904 = vmax.xlane.f32.xlu0 %v2903
        %v2905 = vpop.xlane.xlu0 %2904
        %v2906 = vsel %vm1814, %v2902, -inf
        %2907 = vmax.xlane.f32.xlu0 %v2906
        %v2908 = vpop.xlane.xlu0 %2907
        %v2909 = vsub.f32 %v2901, %v2905
        %v2910 = vsub.f32 %v2902, %v2908
        %v2911 = vmul.f32 %v2909, 1.442695
        %v2912 = vpow.pop %v2911
        %v2913 = vmul.f32 %v2910, 1.442695
        %v2914 = vpow.pop %v2913
        %2915 = vmatpush.xpose.msra.mxu0 %v1779
        %2916 = vmatpush.xpose.msra.mxu0 %v1777
        %2917 = vmatpush.xpose.msra.mxu0 %v1775
        %2918 = vmatpush.xpose.msra.mxu0 %v1773
        %2919 = vmatpush.xpose.msra.mxu0 %v1771
        %2920 = vmatpush.xpose.msra.mxu0 %v1769
        %2921 = vmatpush.xpose.msra.mxu0 %v1767
        %2922 = vmatpush.xpose.msra.mxu0 %v1765
        %2923 = vmatpush.xpose.msra.mxu0 %v1763
        %2924 = vmatpush.xpose.msra.mxu0 %v1761
        %2925 = vmatpush.xpose.msra.mxu0 %v1759
        %2926 = vmatpush.xpose.msra.mxu0 %v1757
        %2927 = vmatpush.xpose.msra.mxu0 %v1755
        %2928 = vmatpush.xpose.msra.mxu0 %v1753
        %2929 = vmatpush.xpose.msra.mxu0 %v1751
        %2930 = vmatpush.xpose.msra.mxu0 %v1749
        %2931 = vmatmul.f32.gmra.mxu0 %v2912
        %v2932 = vpop.f32.mrf.mxu0
        %v2933 = vadd.f32 0.0, %v2932
        %2934 = vdwg.mxu0
        %2935 = vmatpush.xpose.msra.mxu0 %v1811
        %2936 = vmatpush.xpose.msra.mxu0 %v1809
        %2937 = vmatpush.xpose.msra.mxu0 %v1807
        %2938 = vmatpush.xpose.msra.mxu0 %v1805
        %2939 = vmatpush.xpose.msra.mxu0 %v1803
        %2940 = vmatpush.xpose.msra.mxu0 %v1801
        %2941 = vmatpush.xpose.msra.mxu0 %v1799
        %2942 = vmatpush.xpose.msra.mxu0 %v1797
        %2943 = vmatpush.xpose.msra.mxu0 %v1795
        %2944 = vmatpush.xpose.msra.mxu0 %v1793
        %2945 = vmatpush.xpose.msra.mxu0 %v1791
        %2946 = vmatpush.xpose.msra.mxu0 %v1789
        %2947 = vmatpush.xpose.msra.mxu0 %v1787
        %2948 = vmatpush.xpose.msra.mxu0 %v1785
        %2949 = vmatpush.xpose.msra.mxu0 %v1783
        %2950 = vmatpush.xpose.msra.mxu0 %v1781
        %2951 = vmatmul.f32.gmra.mxu0 %v2914
        %v2952 = vpop.f32.mrf.mxu0
        %v2953 = vadd.f32 0.0, %v2952
        %2954 = vdwg.mxu0
        %v2955 = vlog2.pop %v2933
        %v2956 = vmul.f32 %v2955, 0.6931472
        %v2957 = vlog2.pop %v2953
        %v2958 = vmul.f32 %v2957, 0.6931472
        %v2959 = vadd.f32 %v2956, %v2905
        %v2960 = vadd.f32 %v2958, %v2908
        %v2961 = vmul.f32 %v2959, -0.1
        %v2962 = vmul.f32 %v2960, -0.1
        %v2963 = vmul.f32 %v2961, 10.0
        %v2964 = vmul.f32 %v2962, 10.0
        %v2965 = vadd.f32 %v2963, %v1707
        %v2966 = vadd.f32 %v2964, %v1709
        %v2967 = vsel %vm1814, %v2965, -inf
        %2968 = vmax.xlane.f32.xlu0 %v2967
        %v2969 = vpop.xlane.xlu0 %2968
        %v2970 = vsel %vm1814, %v2966, -inf
        %2971 = vmax.xlane.f32.xlu0 %v2970
        %v2972 = vpop.xlane.xlu0 %2971
        %v2973 = vsub.f32 %v2965, %v2969
        %v2974 = vsub.f32 %v2966, %v2972
        %v2975 = vmul.f32 %v2973, 1.442695
        %v2976 = vpow.pop %v2975
        %v2977 = vmul.f32 %v2974, 1.442695
        %v2978 = vpow.pop %v2977
        %2979 = vmatpush.msra.mxu0 %v1779
        %2980 = vmatpush.msra.mxu0 %v1777
        %2981 = vmatpush.msra.mxu0 %v1775
        %2982 = vmatpush.msra.mxu0 %v1773
        %2983 = vmatpush.msra.mxu0 %v1771
        %2984 = vmatpush.msra.mxu0 %v1769
        %2985 = vmatpush.msra.mxu0 %v1767
        %2986 = vmatpush.msra.mxu0 %v1765
        %2987 = vmatpush.msra.mxu0 %v1763
        %2988 = vmatpush.msra.mxu0 %v1761
        %2989 = vmatpush.msra.mxu0 %v1759
        %2990 = vmatpush.msra.mxu0 %v1757
        %2991 = vmatpush.msra.mxu0 %v1755
        %2992 = vmatpush.msra.mxu0 %v1753
        %2993 = vmatpush.msra.mxu0 %v1751
        %2994 = vmatpush.msra.mxu0 %v1749
        %2995 = vmatmul.f32.gmra.mxu0 %v2976
        %v2996 = vpop.f32.mrf.mxu0
        %v2997 = vadd.f32 0.0, %v2996
        %2998 = vdwg.mxu0
        %2999 = vmatpush.msra.mxu0 %v1811
        %3000 = vmatpush.msra.mxu0 %v1809
        %3001 = vmatpush.msra.mxu0 %v1807
        %3002 = vmatpush.msra.mxu0 %v1805
        %3003 = vmatpush.msra.mxu0 %v1803
        %3004 = vmatpush.msra.mxu0 %v1801
        %3005 = vmatpush.msra.mxu0 %v1799
        %3006 = vmatpush.msra.mxu0 %v1797
        %3007 = vmatpush.msra.mxu0 %v1795
        %3008 = vmatpush.msra.mxu0 %v1793
        %3009 = vmatpush.msra.mxu0 %v1791
        %3010 = vmatpush.msra.mxu0 %v1789
        %3011 = vmatpush.msra.mxu0 %v1787
        %3012 = vmatpush.msra.mxu0 %v1785
        %3013 = vmatpush.msra.mxu0 %v1783
        %3014 = vmatpush.msra.mxu0 %v1781
        %3015 = vmatmul.f32.gmra.mxu0 %v2978
        %v3016 = vpop.f32.mrf.mxu0
        %v3017 = vadd.f32 0.0, %v3016
        %3018 = vdwg.mxu0
        %v3019 = vlog2.pop %v2997
        %v3020 = vmul.f32 %v3019, 0.6931472
        %v3021 = vlog2.pop %v3017
        %v3022 = vmul.f32 %v3021, 0.6931472
        %v3023 = vadd.f32 %v3020, %v2969
        %v3024 = vadd.f32 %v3022, %v2972
        %v3025 = vmul.f32 %v3023, -0.1
        %v3026 = vmul.f32 %v3024, -0.1
        %v3027 = vmul.f32 %v3025, 10.0
        %v3028 = vmul.f32 %v3026, 10.0
        %v3029 = vadd.f32 %v3027, %v1713
        %v3030 = vadd.f32 %v3028, %v1715
        %v3031 = vsel %vm1814, %v3029, -inf
        %3032 = vmax.xlane.f32.xlu0 %v3031
        %v3033 = vpop.xlane.xlu0 %3032
        %v3034 = vsel %vm1814, %v3030, -inf
        %3035 = vmax.xlane.f32.xlu0 %v3034
        %v3036 = vpop.xlane.xlu0 %3035
        %v3037 = vsub.f32 %v3029, %v3033
        %v3038 = vsub.f32 %v3030, %v3036
        %v3039 = vmul.f32 %v3037, 1.442695
        %v3040 = vpow.pop %v3039
        %v3041 = vmul.f32 %v3038, 1.442695
        %v3042 = vpow.pop %v3041
        %3043 = vmatpush.xpose.msra.mxu0 %v1779
        %3044 = vmatpush.xpose.msra.mxu0 %v1777
        %3045 = vmatpush.xpose.msra.mxu0 %v1775
        %3046 = vmatpush.xpose.msra.mxu0 %v1773
        %3047 = vmatpush.xpose.msra.mxu0 %v1771
        %3048 = vmatpush.xpose.msra.mxu0 %v1769
        %3049 = vmatpush.xpose.msra.mxu0 %v1767
        %3050 = vmatpush.xpose.msra.mxu0 %v1765
        %3051 = vmatpush.xpose.msra.mxu0 %v1763
        %3052 = vmatpush.xpose.msra.mxu0 %v1761
        %3053 = vmatpush.xpose.msra.mxu0 %v1759
        %3054 = vmatpush.xpose.msra.mxu0 %v1757
        %3055 = vmatpush.xpose.msra.mxu0 %v1755
        %3056 = vmatpush.xpose.msra.mxu0 %v1753
        %3057 = vmatpush.xpose.msra.mxu0 %v1751
        %3058 = vmatpush.xpose.msra.mxu0 %v1749
        %3059 = vmatmul.f32.gmra.mxu0 %v3040
        %v3060 = vpop.f32.mrf.mxu0
        %v3061 = vadd.f32 0.0, %v3060
        %3062 = vdwg.mxu0
        %3063 = vmatpush.xpose.msra.mxu0 %v1811
        %3064 = vmatpush.xpose.msra.mxu0 %v1809
        %3065 = vmatpush.xpose.msra.mxu0 %v1807
        %3066 = vmatpush.xpose.msra.mxu0 %v1805
        %3067 = vmatpush.xpose.msra.mxu0 %v1803
        %3068 = vmatpush.xpose.msra.mxu0 %v1801
        %3069 = vmatpush.xpose.msra.mxu0 %v1799
        %3070 = vmatpush.xpose.msra.mxu0 %v1797
        %3071 = vmatpush.xpose.msra.mxu0 %v1795
        %3072 = vmatpush.xpose.msra.mxu0 %v1793
        %3073 = vmatpush.xpose.msra.mxu0 %v1791
        %3074 = vmatpush.xpose.msra.mxu0 %v1789
        %3075 = vmatpush.xpose.msra.mxu0 %v1787
        %3076 = vmatpush.xpose.msra.mxu0 %v1785
        %3077 = vmatpush.xpose.msra.mxu0 %v1783
        %3078 = vmatpush.xpose.msra.mxu0 %v1781
        %3079 = vmatmul.f32.gmra.mxu0 %v3042
        %v3080 = vpop.f32.mrf.mxu0
        %v3081 = vadd.f32 0.0, %v3080
        %3082 = vdwg.mxu0
        %v3083 = vlog2.pop %v3061
        %v3084 = vmul.f32 %v3083, 0.6931472
        %v3085 = vlog2.pop %v3081
        %v3086 = vmul.f32 %v3085, 0.6931472
        %v3087 = vadd.f32 %v3084, %v3033
        %v3088 = vadd.f32 %v3086, %v3036
        %v3089 = vmul.f32 %v3087, -0.1
        %v3090 = vmul.f32 %v3088, -0.1
        %v3091 = vmul.f32 %v3089, 10.0
        %v3092 = vmul.f32 %v3090, 10.0
        %v3093 = vadd.f32 %v3091, %v1707
        %v3094 = vadd.f32 %v3092, %v1709
        %v3095 = vsel %vm1814, %v3093, -inf
        %3096 = vmax.xlane.f32.xlu0 %v3095
        %v3097 = vpop.xlane.xlu0 %3096
        %v3098 = vsel %vm1814, %v3094, -inf
        %3099 = vmax.xlane.f32.xlu0 %v3098
        %v3100 = vpop.xlane.xlu0 %3099
        %v3101 = vsub.f32 %v3093, %v3097
        %v3102 = vsub.f32 %v3094, %v3100
        %v3103 = vmul.f32 %v3101, 1.442695
        %v3104 = vpow.pop %v3103
        %v3105 = vmul.f32 %v3102, 1.442695
        %v3106 = vpow.pop %v3105
        %3107 = vmatpush.msra.mxu0 %v1779
        %3108 = vmatpush.msra.mxu0 %v1777
        %3109 = vmatpush.msra.mxu0 %v1775
        %3110 = vmatpush.msra.mxu0 %v1773
        %3111 = vmatpush.msra.mxu0 %v1771
        %3112 = vmatpush.msra.mxu0 %v1769
        %3113 = vmatpush.msra.mxu0 %v1767
        %3114 = vmatpush.msra.mxu0 %v1765
        %3115 = vmatpush.msra.mxu0 %v1763
        %3116 = vmatpush.msra.mxu0 %v1761
        %3117 = vmatpush.msra.mxu0 %v1759
        %3118 = vmatpush.msra.mxu0 %v1757
        %3119 = vmatpush.msra.mxu0 %v1755
        %3120 = vmatpush.msra.mxu0 %v1753
        %3121 = vmatpush.msra.mxu0 %v1751
        %3122 = vmatpush.msra.mxu0 %v1749
        %3123 = vmatmul.f32.gmra.mxu0 %v3104
        %v3124 = vpop.f32.mrf.mxu0
        %v3125 = vadd.f32 0.0, %v3124
        %3126 = vdwg.mxu0
        %3127 = vmatpush.msra.mxu0 %v1811
        %3128 = vmatpush.msra.mxu0 %v1809
        %3129 = vmatpush.msra.mxu0 %v1807
        %3130 = vmatpush.msra.mxu0 %v1805
        %3131 = vmatpush.msra.mxu0 %v1803
        %3132 = vmatpush.msra.mxu0 %v1801
        %3133 = vmatpush.msra.mxu0 %v1799
        %3134 = vmatpush.msra.mxu0 %v1797
        %3135 = vmatpush.msra.mxu0 %v1795
        %3136 = vmatpush.msra.mxu0 %v1793
        %3137 = vmatpush.msra.mxu0 %v1791
        %3138 = vmatpush.msra.mxu0 %v1789
        %3139 = vmatpush.msra.mxu0 %v1787
        %3140 = vmatpush.msra.mxu0 %v1785
        %3141 = vmatpush.msra.mxu0 %v1783
        %3142 = vmatpush.msra.mxu0 %v1781
        %3143 = vmatmul.f32.gmra.mxu0 %v3106
        %v3144 = vpop.f32.mrf.mxu0
        %v3145 = vadd.f32 0.0, %v3144
        %3146 = vdwg.mxu0
        %v3147 = vlog2.pop %v3125
        %v3148 = vmul.f32 %v3147, 0.6931472
        %v3149 = vlog2.pop %v3145
        %v3150 = vmul.f32 %v3149, 0.6931472
        %v3151 = vadd.f32 %v3148, %v3097
        %v3152 = vadd.f32 %v3150, %v3100
        %v3153 = vmul.f32 %v3151, -0.1
        %v3154 = vmul.f32 %v3152, -0.1
        %v3155 = vmul.f32 %v3153, 10.0
        %v3156 = vmul.f32 %v3154, 10.0
        %v3157 = vadd.f32 %v3155, %v1713
        %v3158 = vadd.f32 %v3156, %v1715
        %v3159 = vsel %vm1814, %v3157, -inf
        %3160 = vmax.xlane.f32.xlu0 %v3159
        %v3161 = vpop.xlane.xlu0 %3160
        %v3162 = vsel %vm1814, %v3158, -inf
        %3163 = vmax.xlane.f32.xlu0 %v3162
        %v3164 = vpop.xlane.xlu0 %3163
        %v3165 = vsub.f32 %v3157, %v3161
        %v3166 = vsub.f32 %v3158, %v3164
        %v3167 = vmul.f32 %v3165, 1.442695
        %v3168 = vpow.pop %v3167
        %v3169 = vmul.f32 %v3166, 1.442695
        %v3170 = vpow.pop %v3169
        %3171 = vmatpush.xpose.msra.mxu0 %v1779
        %3172 = vmatpush.xpose.msra.mxu0 %v1777
        %3173 = vmatpush.xpose.msra.mxu0 %v1775
        %3174 = vmatpush.xpose.msra.mxu0 %v1773
        %3175 = vmatpush.xpose.msra.mxu0 %v1771
        %3176 = vmatpush.xpose.msra.mxu0 %v1769
        %3177 = vmatpush.xpose.msra.mxu0 %v1767
        %3178 = vmatpush.xpose.msra.mxu0 %v1765
        %3179 = vmatpush.xpose.msra.mxu0 %v1763
        %3180 = vmatpush.xpose.msra.mxu0 %v1761
        %3181 = vmatpush.xpose.msra.mxu0 %v1759
        %3182 = vmatpush.xpose.msra.mxu0 %v1757
        %3183 = vmatpush.xpose.msra.mxu0 %v1755
        %3184 = vmatpush.xpose.msra.mxu0 %v1753
        %3185 = vmatpush.xpose.msra.mxu0 %v1751
        %3186 = vmatpush.xpose.msra.mxu0 %v1749
        %3187 = vmatmul.f32.gmra.mxu0 %v3168
        %v3188 = vpop.f32.mrf.mxu0
        %v3189 = vadd.f32 0.0, %v3188
        %3190 = vdwg.mxu0
        %3191 = vmatpush.xpose.msra.mxu0 %v1811
        %3192 = vmatpush.xpose.msra.mxu0 %v1809
        %3193 = vmatpush.xpose.msra.mxu0 %v1807
        %3194 = vmatpush.xpose.msra.mxu0 %v1805
        %3195 = vmatpush.xpose.msra.mxu0 %v1803
        %3196 = vmatpush.xpose.msra.mxu0 %v1801
        %3197 = vmatpush.xpose.msra.mxu0 %v1799
        %3198 = vmatpush.xpose.msra.mxu0 %v1797
        %3199 = vmatpush.xpose.msra.mxu0 %v1795
        %3200 = vmatpush.xpose.msra.mxu0 %v1793
        %3201 = vmatpush.xpose.msra.mxu0 %v1791
        %3202 = vmatpush.xpose.msra.mxu0 %v1789
        %3203 = vmatpush.xpose.msra.mxu0 %v1787
        %3204 = vmatpush.xpose.msra.mxu0 %v1785
        %3205 = vmatpush.xpose.msra.mxu0 %v1783
        %3206 = vmatpush.xpose.msra.mxu0 %v1781
        %3207 = vmatmul.f32.gmra.mxu0 %v3170
        %v3208 = vpop.f32.mrf.mxu0
        %v3209 = vadd.f32 0.0, %v3208
        %3210 = vdwg.mxu0
        %v3211 = vlog2.pop %v3189
        %v3212 = vmul.f32 %v3211, 0.6931472
        %v3213 = vlog2.pop %v3209
        %v3214 = vmul.f32 %v3213, 0.6931472
        %v3215 = vadd.f32 %v3212, %v3161
        %v3216 = vadd.f32 %v3214, %v3164
        %v3217 = vmul.f32 %v3215, -0.1
        %v3218 = vmul.f32 %v3216, -0.1
        %v3219 = vmul.f32 %v3217, 10.0
        %v3220 = vmul.f32 %v3218, 10.0
        %v3221 = vadd.f32 %v3219, %v1707
        %v3222 = vadd.f32 %v3220, %v1709
        %v3223 = vsel %vm1814, %v3221, -inf
        %3224 = vmax.xlane.f32.xlu0 %v3223
        %v3225 = vpop.xlane.xlu0 %3224
        %v3226 = vsel %vm1814, %v3222, -inf
        %3227 = vmax.xlane.f32.xlu0 %v3226
        %v3228 = vpop.xlane.xlu0 %3227
        %v3229 = vsub.f32 %v3221, %v3225
        %v3230 = vsub.f32 %v3222, %v3228
        %v3231 = vmul.f32 %v3229, 1.442695
        %v3232 = vpow.pop %v3231
        %v3233 = vmul.f32 %v3230, 1.442695
        %v3234 = vpow.pop %v3233
        %3235 = vmatpush.msra.mxu0 %v1779
        %3236 = vmatpush.msra.mxu0 %v1777
        %3237 = vmatpush.msra.mxu0 %v1775
        %3238 = vmatpush.msra.mxu0 %v1773
        %3239 = vmatpush.msra.mxu0 %v1771
        %3240 = vmatpush.msra.mxu0 %v1769
        %3241 = vmatpush.msra.mxu0 %v1767
        %3242 = vmatpush.msra.mxu0 %v1765
        %3243 = vmatpush.msra.mxu0 %v1763
        %3244 = vmatpush.msra.mxu0 %v1761
        %3245 = vmatpush.msra.mxu0 %v1759
        %3246 = vmatpush.msra.mxu0 %v1757
        %3247 = vmatpush.msra.mxu0 %v1755
        %3248 = vmatpush.msra.mxu0 %v1753
        %3249 = vmatpush.msra.mxu0 %v1751
        %3250 = vmatpush.msra.mxu0 %v1749
        %3251 = vmatmul.f32.gmra.mxu0 %v3232
        %v3252 = vpop.f32.mrf.mxu0
        %v3253 = vadd.f32 0.0, %v3252
        %3254 = vdwg.mxu0
        %3255 = vmatpush.msra.mxu0 %v1811
        %3256 = vmatpush.msra.mxu0 %v1809
        %3257 = vmatpush.msra.mxu0 %v1807
        %3258 = vmatpush.msra.mxu0 %v1805
        %3259 = vmatpush.msra.mxu0 %v1803
        %3260 = vmatpush.msra.mxu0 %v1801
        %3261 = vmatpush.msra.mxu0 %v1799
        %3262 = vmatpush.msra.mxu0 %v1797
        %3263 = vmatpush.msra.mxu0 %v1795
        %3264 = vmatpush.msra.mxu0 %v1793
        %3265 = vmatpush.msra.mxu0 %v1791
        %3266 = vmatpush.msra.mxu0 %v1789
        %3267 = vmatpush.msra.mxu0 %v1787
        %3268 = vmatpush.msra.mxu0 %v1785
        %3269 = vmatpush.msra.mxu0 %v1783
        %3270 = vmatpush.msra.mxu0 %v1781
        %3271 = vmatmul.f32.gmra.mxu0 %v3234
        %v3272 = vpop.f32.mrf.mxu0
        %v3273 = vadd.f32 0.0, %v3272
        %3274 = vdwg.mxu0
        %v3275 = vlog2.pop %v3253
        %v3276 = vmul.f32 %v3275, 0.6931472
        %v3277 = vlog2.pop %v3273
        %v3278 = vmul.f32 %v3277, 0.6931472
        %v3279 = vadd.f32 %v3276, %v3225
        %v3280 = vadd.f32 %v3278, %v3228
        %v3281 = vmul.f32 %v3279, -0.1
        %v3282 = vmul.f32 %v3280, -0.1
        %v3283 = vmul.f32 %v3281, 10.0
        %v3284 = vmul.f32 %v3282, 10.0
        %v3285 = vadd.f32 %v3283, %v1713
        %v3286 = vadd.f32 %v3284, %v1715
        %v3287 = vsel %vm1814, %v3285, -inf
        %3288 = vmax.xlane.f32.xlu0 %v3287
        %v3289 = vpop.xlane.xlu0 %3288
        %v3290 = vsel %vm1814, %v3286, -inf
        %3291 = vmax.xlane.f32.xlu0 %v3290
        %v3292 = vpop.xlane.xlu0 %3291
        %v3293 = vsub.f32 %v3285, %v3289
        %v3294 = vsub.f32 %v3286, %v3292
        %v3295 = vmul.f32 %v3293, 1.442695
        %v3296 = vpow.pop %v3295
        %v3297 = vmul.f32 %v3294, 1.442695
        %v3298 = vpow.pop %v3297
        %3299 = vmatpush.xpose.msra.mxu0 %v1779
        %3300 = vmatpush.xpose.msra.mxu0 %v1777
        %3301 = vmatpush.xpose.msra.mxu0 %v1775
        %3302 = vmatpush.xpose.msra.mxu0 %v1773
        %3303 = vmatpush.xpose.msra.mxu0 %v1771
        %3304 = vmatpush.xpose.msra.mxu0 %v1769
        %3305 = vmatpush.xpose.msra.mxu0 %v1767
        %3306 = vmatpush.xpose.msra.mxu0 %v1765
        %3307 = vmatpush.xpose.msra.mxu0 %v1763
        %3308 = vmatpush.xpose.msra.mxu0 %v1761
        %3309 = vmatpush.xpose.msra.mxu0 %v1759
        %3310 = vmatpush.xpose.msra.mxu0 %v1757
        %3311 = vmatpush.xpose.msra.mxu0 %v1755
        %3312 = vmatpush.xpose.msra.mxu0 %v1753
        %3313 = vmatpush.xpose.msra.mxu0 %v1751
        %3314 = vmatpush.xpose.msra.mxu0 %v1749
        %3315 = vmatmul.f32.gmra.mxu0 %v3296
        %v3316 = vpop.f32.mrf.mxu0
        %v3317 = vadd.f32 0.0, %v3316
        %3318 = vdwg.mxu0
        %3319 = vmatpush.xpose.msra.mxu0 %v1811
        %3320 = vmatpush.xpose.msra.mxu0 %v1809
        %3321 = vmatpush.xpose.msra.mxu0 %v1807
        %3322 = vmatpush.xpose.msra.mxu0 %v1805
        %3323 = vmatpush.xpose.msra.mxu0 %v1803
        %3324 = vmatpush.xpose.msra.mxu0 %v1801
        %3325 = vmatpush.xpose.msra.mxu0 %v1799
        %3326 = vmatpush.xpose.msra.mxu0 %v1797
        %3327 = vmatpush.xpose.msra.mxu0 %v1795
        %3328 = vmatpush.xpose.msra.mxu0 %v1793
        %3329 = vmatpush.xpose.msra.mxu0 %v1791
        %3330 = vmatpush.xpose.msra.mxu0 %v1789
        %3331 = vmatpush.xpose.msra.mxu0 %v1787
        %3332 = vmatpush.xpose.msra.mxu0 %v1785
        %3333 = vmatpush.xpose.msra.mxu0 %v1783
        %3334 = vmatpush.xpose.msra.mxu0 %v1781
        %3335 = vmatmul.f32.gmra.mxu0 %v3298
        %v3336 = vpop.f32.mrf.mxu0
        %v3337 = vadd.f32 0.0, %v3336
        %3338 = vdwg.mxu0
        %v3339 = vlog2.pop %v3317
        %v3340 = vmul.f32 %v3339, 0.6931472
        %v3341 = vlog2.pop %v3337
        %v3342 = vmul.f32 %v3341, 0.6931472
        %v3343 = vadd.f32 %v3340, %v3289
        %v3344 = vadd.f32 %v3342, %v3292
        %v3345 = vmul.f32 %v3343, -0.1
        %v3346 = vmul.f32 %v3344, -0.1
        %v3347 = vmul.f32 %v3345, 10.0
        %v3348 = vmul.f32 %v3346, 10.0
        %v3349 = vadd.f32 %v3347, %v1707
        %v3350 = vadd.f32 %v3348, %v1709
        %v3351 = vsel %vm1814, %v3349, -inf
        %3352 = vmax.xlane.f32.xlu0 %v3351
        %v3353 = vpop.xlane.xlu0 %3352
        %v3354 = vsel %vm1814, %v3350, -inf
        %3355 = vmax.xlane.f32.xlu0 %v3354
        %v3356 = vpop.xlane.xlu0 %3355
        %v3357 = vsub.f32 %v3349, %v3353
        %v3358 = vsub.f32 %v3350, %v3356
        %v3359 = vmul.f32 %v3357, 1.442695
        %v3360 = vpow.pop %v3359
        %v3361 = vmul.f32 %v3358, 1.442695
        %v3362 = vpow.pop %v3361
        %3363 = vmatpush.msra.mxu0 %v1779
        %3364 = vmatpush.msra.mxu0 %v1777
        %3365 = vmatpush.msra.mxu0 %v1775
        %3366 = vmatpush.msra.mxu0 %v1773
        %3367 = vmatpush.msra.mxu0 %v1771
        %3368 = vmatpush.msra.mxu0 %v1769
        %3369 = vmatpush.msra.mxu0 %v1767
        %3370 = vmatpush.msra.mxu0 %v1765
        %3371 = vmatpush.msra.mxu0 %v1763
        %3372 = vmatpush.msra.mxu0 %v1761
        %3373 = vmatpush.msra.mxu0 %v1759
        %3374 = vmatpush.msra.mxu0 %v1757
        %3375 = vmatpush.msra.mxu0 %v1755
        %3376 = vmatpush.msra.mxu0 %v1753
        %3377 = vmatpush.msra.mxu0 %v1751
        %3378 = vmatpush.msra.mxu0 %v1749
        %3379 = vmatmul.f32.gmra.mxu0 %v3360
        %v3380 = vpop.f32.mrf.mxu0
        %v3381 = vadd.f32 0.0, %v3380
        %3382 = vdwg.mxu0
        %3383 = vmatpush.msra.mxu0 %v1811
        %3384 = vmatpush.msra.mxu0 %v1809
        %3385 = vmatpush.msra.mxu0 %v1807
        %3386 = vmatpush.msra.mxu0 %v1805
        %3387 = vmatpush.msra.mxu0 %v1803
        %3388 = vmatpush.msra.mxu0 %v1801
        %3389 = vmatpush.msra.mxu0 %v1799
        %3390 = vmatpush.msra.mxu0 %v1797
        %3391 = vmatpush.msra.mxu0 %v1795
        %3392 = vmatpush.msra.mxu0 %v1793
        %3393 = vmatpush.msra.mxu0 %v1791
        %3394 = vmatpush.msra.mxu0 %v1789
        %3395 = vmatpush.msra.mxu0 %v1787
        %3396 = vmatpush.msra.mxu0 %v1785
        %3397 = vmatpush.msra.mxu0 %v1783
        %3398 = vmatpush.msra.mxu0 %v1781
        %3399 = vmatmul.f32.gmra.mxu0 %v3362
        %v3400 = vpop.f32.mrf.mxu0
        %v3401 = vadd.f32 0.0, %v3400
        %3402 = vdwg.mxu0
        %v3403 = vlog2.pop %v3381
        %v3404 = vmul.f32 %v3403, 0.6931472
        %v3405 = vlog2.pop %v3401
        %v3406 = vmul.f32 %v3405, 0.6931472
        %v3407 = vadd.f32 %v3404, %v3353
        %v3408 = vadd.f32 %v3406, %v3356
        %v3409 = vmul.f32 %v3407, -0.1
        %v3410 = vmul.f32 %v3408, -0.1
        %v3411 = vmul.f32 %v3409, 10.0
        %v3412 = vmul.f32 %v3410, 10.0
        %v3413 = vadd.f32 %v3411, %v1713
        %v3414 = vadd.f32 %v3412, %v1715
        %v3415 = vsel %vm1814, %v3413, -inf
        %3416 = vmax.xlane.f32.xlu0 %v3415
        %v3417 = vpop.xlane.xlu0 %3416
        %v3418 = vsel %vm1814, %v3414, -inf
        %3419 = vmax.xlane.f32.xlu0 %v3418
        %v3420 = vpop.xlane.xlu0 %3419
        %v3421 = vsub.f32 %v3413, %v3417
        %v3422 = vsub.f32 %v3414, %v3420
        %v3423 = vmul.f32 %v3421, 1.442695
        %v3424 = vpow.pop %v3423
        %v3425 = vmul.f32 %v3422, 1.442695
        %v3426 = vpow.pop %v3425
        %3427 = vmatpush.xpose.msra.mxu0 %v1779
        %3428 = vmatpush.xpose.msra.mxu0 %v1777
        %3429 = vmatpush.xpose.msra.mxu0 %v1775
        %3430 = vmatpush.xpose.msra.mxu0 %v1773
        %3431 = vmatpush.xpose.msra.mxu0 %v1771
        %3432 = vmatpush.xpose.msra.mxu0 %v1769
        %3433 = vmatpush.xpose.msra.mxu0 %v1767
        %3434 = vmatpush.xpose.msra.mxu0 %v1765
        %3435 = vmatpush.xpose.msra.mxu0 %v1763
        %3436 = vmatpush.xpose.msra.mxu0 %v1761
        %3437 = vmatpush.xpose.msra.mxu0 %v1759
        %3438 = vmatpush.xpose.msra.mxu0 %v1757
        %3439 = vmatpush.xpose.msra.mxu0 %v1755
        %3440 = vmatpush.xpose.msra.mxu0 %v1753
        %3441 = vmatpush.xpose.msra.mxu0 %v1751
        %3442 = vmatpush.xpose.msra.mxu0 %v1749
        %3443 = vmatmul.f32.gmra.mxu0 %v3424
        %v3444 = vpop.f32.mrf.mxu0
        %v3445 = vadd.f32 0.0, %v3444
        %3446 = vdwg.mxu0
        %3447 = vmatpush.xpose.msra.mxu0 %v1811
        %3448 = vmatpush.xpose.msra.mxu0 %v1809
        %3449 = vmatpush.xpose.msra.mxu0 %v1807
        %3450 = vmatpush.xpose.msra.mxu0 %v1805
        %3451 = vmatpush.xpose.msra.mxu0 %v1803
        %3452 = vmatpush.xpose.msra.mxu0 %v1801
        %3453 = vmatpush.xpose.msra.mxu0 %v1799
        %3454 = vmatpush.xpose.msra.mxu0 %v1797
        %3455 = vmatpush.xpose.msra.mxu0 %v1795
        %3456 = vmatpush.xpose.msra.mxu0 %v1793
        %3457 = vmatpush.xpose.msra.mxu0 %v1791
        %3458 = vmatpush.xpose.msra.mxu0 %v1789
        %3459 = vmatpush.xpose.msra.mxu0 %v1787
        %3460 = vmatpush.xpose.msra.mxu0 %v1785
        %3461 = vmatpush.xpose.msra.mxu0 %v1783
        %3462 = vmatpush.xpose.msra.mxu0 %v1781
        %3463 = vmatmul.f32.gmra.mxu0 %v3426
        %v3464 = vpop.f32.mrf.mxu0
        %v3465 = vadd.f32 0.0, %v3464
        %3466 = vdwg.mxu0
        %v3467 = vlog2.pop %v3445
        %v3468 = vmul.f32 %v3467, 0.6931472
        %v3469 = vlog2.pop %v3465
        %v3470 = vmul.f32 %v3469, 0.6931472
        %v3471 = vadd.f32 %v3468, %v3417
        %v3472 = vadd.f32 %v3470, %v3420
        %v3473 = vmul.f32 %v3471, -0.1
        %v3474 = vmul.f32 %v3472, -0.1
        %v3475 = vmul.f32 %v3473, 10.0
        %v3476 = vmul.f32 %v3474, 10.0
        %v3477 = vadd.f32 %v3475, %v1707
        %v3478 = vadd.f32 %v3476, %v1709
        %v3479 = vsel %vm1814, %v3477, -inf
        %3480 = vmax.xlane.f32.xlu0 %v3479
        %v3481 = vpop.xlane.xlu0 %3480
        %v3482 = vsel %vm1814, %v3478, -inf
        %3483 = vmax.xlane.f32.xlu0 %v3482
        %v3484 = vpop.xlane.xlu0 %3483
        %v3485 = vsub.f32 %v3477, %v3481
        %v3486 = vsub.f32 %v3478, %v3484
        %v3487 = vmul.f32 %v3485, 1.442695
        %v3488 = vpow.pop %v3487
        %v3489 = vmul.f32 %v3486, 1.442695
        %v3490 = vpow.pop %v3489
        %3491 = vmatpush.msra.mxu0 %v1779
        %3492 = vmatpush.msra.mxu0 %v1777
        %3493 = vmatpush.msra.mxu0 %v1775
        %3494 = vmatpush.msra.mxu0 %v1773
        %3495 = vmatpush.msra.mxu0 %v1771
        %3496 = vmatpush.msra.mxu0 %v1769
        %3497 = vmatpush.msra.mxu0 %v1767
        %3498 = vmatpush.msra.mxu0 %v1765
        %3499 = vmatpush.msra.mxu0 %v1763
        %3500 = vmatpush.msra.mxu0 %v1761
        %3501 = vmatpush.msra.mxu0 %v1759
        %3502 = vmatpush.msra.mxu0 %v1757
        %3503 = vmatpush.msra.mxu0 %v1755
        %3504 = vmatpush.msra.mxu0 %v1753
        %3505 = vmatpush.msra.mxu0 %v1751
        %3506 = vmatpush.msra.mxu0 %v1749
        %3507 = vmatmul.f32.gmra.mxu0 %v3488
        %v3508 = vpop.f32.mrf.mxu0
        %v3509 = vadd.f32 0.0, %v3508
        %3510 = vdwg.mxu0
        %3511 = vmatpush.msra.mxu0 %v1811
        %3512 = vmatpush.msra.mxu0 %v1809
        %3513 = vmatpush.msra.mxu0 %v1807
        %3514 = vmatpush.msra.mxu0 %v1805
        %3515 = vmatpush.msra.mxu0 %v1803
        %3516 = vmatpush.msra.mxu0 %v1801
        %3517 = vmatpush.msra.mxu0 %v1799
        %3518 = vmatpush.msra.mxu0 %v1797
        %3519 = vmatpush.msra.mxu0 %v1795
        %3520 = vmatpush.msra.mxu0 %v1793
        %3521 = vmatpush.msra.mxu0 %v1791
        %3522 = vmatpush.msra.mxu0 %v1789
        %3523 = vmatpush.msra.mxu0 %v1787
        %3524 = vmatpush.msra.mxu0 %v1785
        %3525 = vmatpush.msra.mxu0 %v1783
        %3526 = vmatpush.msra.mxu0 %v1781
        %3527 = vmatmul.f32.gmra.mxu0 %v3490
        %v3528 = vpop.f32.mrf.mxu0
        %v3529 = vadd.f32 0.0, %v3528
        %3530 = vdwg.mxu0
        %v3531 = vlog2.pop %v3509
        %v3532 = vmul.f32 %v3531, 0.6931472
        %v3533 = vlog2.pop %v3529
        %v3534 = vmul.f32 %v3533, 0.6931472
        %v3535 = vadd.f32 %v3532, %v3481
        %v3536 = vadd.f32 %v3534, %v3484
        %v3537 = vmul.f32 %v3535, -0.1
        %v3538 = vmul.f32 %v3536, -0.1
        %v3539 = vmul.f32 %v3537, 10.0
        %v3540 = vmul.f32 %v3538, 10.0
        %v3541 = vadd.f32 %v3539, %v1713
        %v3542 = vadd.f32 %v3540, %v1715
        %v3543 = vsel %vm1814, %v3541, -inf
        %3544 = vmax.xlane.f32.xlu0 %v3543
        %v3545 = vpop.xlane.xlu0 %3544
        %v3546 = vsel %vm1814, %v3542, -inf
        %3547 = vmax.xlane.f32.xlu0 %v3546
        %v3548 = vpop.xlane.xlu0 %3547
        %v3549 = vsub.f32 %v3541, %v3545
        %v3550 = vsub.f32 %v3542, %v3548
        %v3551 = vmul.f32 %v3549, 1.442695
        %v3552 = vpow.pop %v3551
        %v3553 = vmul.f32 %v3550, 1.442695
        %v3554 = vpow.pop %v3553
        %3555 = vmatpush.xpose.msra.mxu0 %v1779
        %3556 = vmatpush.xpose.msra.mxu0 %v1777
        %3557 = vmatpush.xpose.msra.mxu0 %v1775
        %3558 = vmatpush.xpose.msra.mxu0 %v1773
        %3559 = vmatpush.xpose.msra.mxu0 %v1771
        %3560 = vmatpush.xpose.msra.mxu0 %v1769
        %3561 = vmatpush.xpose.msra.mxu0 %v1767
        %3562 = vmatpush.xpose.msra.mxu0 %v1765
        %3563 = vmatpush.xpose.msra.mxu0 %v1763
        %3564 = vmatpush.xpose.msra.mxu0 %v1761
        %3565 = vmatpush.xpose.msra.mxu0 %v1759
        %3566 = vmatpush.xpose.msra.mxu0 %v1757
        %3567 = vmatpush.xpose.msra.mxu0 %v1755
        %3568 = vmatpush.xpose.msra.mxu0 %v1753
        %3569 = vmatpush.xpose.msra.mxu0 %v1751
        %3570 = vmatpush.xpose.msra.mxu0 %v1749
        %3571 = vmatmul.f32.gmra.mxu0 %v3552
        %v3572 = vpop.f32.mrf.mxu0
        %v3573 = vadd.f32 0.0, %v3572
        %3574 = vdwg.mxu0
        %3575 = vmatpush.xpose.msra.mxu0 %v1811
        %3576 = vmatpush.xpose.msra.mxu0 %v1809
        %3577 = vmatpush.xpose.msra.mxu0 %v1807
        %3578 = vmatpush.xpose.msra.mxu0 %v1805
        %3579 = vmatpush.xpose.msra.mxu0 %v1803
        %3580 = vmatpush.xpose.msra.mxu0 %v1801
        %3581 = vmatpush.xpose.msra.mxu0 %v1799
        %3582 = vmatpush.xpose.msra.mxu0 %v1797
        %3583 = vmatpush.xpose.msra.mxu0 %v1795
        %3584 = vmatpush.xpose.msra.mxu0 %v1793
        %3585 = vmatpush.xpose.msra.mxu0 %v1791
        %3586 = vmatpush.xpose.msra.mxu0 %v1789
        %3587 = vmatpush.xpose.msra.mxu0 %v1787
        %3588 = vmatpush.xpose.msra.mxu0 %v1785
        %3589 = vmatpush.xpose.msra.mxu0 %v1783
        %3590 = vmatpush.xpose.msra.mxu0 %v1781
        %3591 = vmatmul.f32.gmra.mxu0 %v3554
        %v3592 = vpop.f32.mrf.mxu0
        %v3593 = vadd.f32 0.0, %v3592
        %3594 = vdwg.mxu0
        %v3595 = vlog2.pop %v3573
        %v3596 = vmul.f32 %v3595, 0.6931472
        %v3597 = vlog2.pop %v3593
        %v3598 = vmul.f32 %v3597, 0.6931472
        %v3599 = vadd.f32 %v3596, %v3545
        %v3600 = vadd.f32 %v3598, %v3548
        %v3601 = vmul.f32 %v3599, -0.1
        %v3602 = vmul.f32 %v3600, -0.1
        %v3603 = vmul.f32 %v3601, 10.0
        %v3604 = vmul.f32 %v3602, 10.0
        %v3605 = vadd.f32 %v3603, %v1707
        %v3606 = vadd.f32 %v3604, %v1709
        %v3607 = vsel %vm1814, %v3605, -inf
        %3608 = vmax.xlane.f32.xlu0 %v3607
        %v3609 = vpop.xlane.xlu0 %3608
        %v3610 = vsel %vm1814, %v3606, -inf
        %3611 = vmax.xlane.f32.xlu0 %v3610
        %v3612 = vpop.xlane.xlu0 %3611
        %v3613 = vsub.f32 %v3605, %v3609
        %v3614 = vsub.f32 %v3606, %v3612
        %v3615 = vmul.f32 %v3613, 1.442695
        %v3616 = vpow.pop %v3615
        %v3617 = vmul.f32 %v3614, 1.442695
        %v3618 = vpow.pop %v3617
        %3619 = vmatpush.msra.mxu0 %v1779
        %3620 = vmatpush.msra.mxu0 %v1777
        %3621 = vmatpush.msra.mxu0 %v1775
        %3622 = vmatpush.msra.mxu0 %v1773
        %3623 = vmatpush.msra.mxu0 %v1771
        %3624 = vmatpush.msra.mxu0 %v1769
        %3625 = vmatpush.msra.mxu0 %v1767
        %3626 = vmatpush.msra.mxu0 %v1765
        %3627 = vmatpush.msra.mxu0 %v1763
        %3628 = vmatpush.msra.mxu0 %v1761
        %3629 = vmatpush.msra.mxu0 %v1759
        %3630 = vmatpush.msra.mxu0 %v1757
        %3631 = vmatpush.msra.mxu0 %v1755
        %3632 = vmatpush.msra.mxu0 %v1753
        %3633 = vmatpush.msra.mxu0 %v1751
        %3634 = vmatpush.msra.mxu0 %v1749
        %3635 = vmatmul.f32.gmra.mxu0 %v3616
        %v3636 = vpop.f32.mrf.mxu0
        %v3637 = vadd.f32 0.0, %v3636
        %3638 = vdwg.mxu0
        %3639 = vmatpush.msra.mxu0 %v1811
        %3640 = vmatpush.msra.mxu0 %v1809
        %3641 = vmatpush.msra.mxu0 %v1807
        %3642 = vmatpush.msra.mxu0 %v1805
        %3643 = vmatpush.msra.mxu0 %v1803
        %3644 = vmatpush.msra.mxu0 %v1801
        %3645 = vmatpush.msra.mxu0 %v1799
        %3646 = vmatpush.msra.mxu0 %v1797
        %3647 = vmatpush.msra.mxu0 %v1795
        %3648 = vmatpush.msra.mxu0 %v1793
        %3649 = vmatpush.msra.mxu0 %v1791
        %3650 = vmatpush.msra.mxu0 %v1789
        %3651 = vmatpush.msra.mxu0 %v1787
        %3652 = vmatpush.msra.mxu0 %v1785
        %3653 = vmatpush.msra.mxu0 %v1783
        %3654 = vmatpush.msra.mxu0 %v1781
        %3655 = vmatmul.f32.gmra.mxu0 %v3618
        %v3656 = vpop.f32.mrf.mxu0
        %v3657 = vadd.f32 0.0, %v3656
        %3658 = vdwg.mxu0
        %v3659 = vlog2.pop %v3637
        %v3660 = vmul.f32 %v3659, 0.6931472
        %v3661 = vlog2.pop %v3657
        %v3662 = vmul.f32 %v3661, 0.6931472
        %v3663 = vadd.f32 %v3660, %v3609
        %v3664 = vadd.f32 %v3662, %v3612
        %v3665 = vmul.f32 %v3663, -0.1
        %v3666 = vmul.f32 %v3664, -0.1
        %v3667 = vmul.f32 %v3665, 10.0
        %v3668 = vmul.f32 %v3666, 10.0
        %v3669 = vadd.f32 %v3667, %v1713
        %v3670 = vadd.f32 %v3668, %v1715
        %v3671 = vsel %vm1814, %v3669, -inf
        %3672 = vmax.xlane.f32.xlu0 %v3671
        %v3673 = vpop.xlane.xlu0 %3672
        %v3674 = vsel %vm1814, %v3670, -inf
        %3675 = vmax.xlane.f32.xlu0 %v3674
        %v3676 = vpop.xlane.xlu0 %3675
        %v3677 = vsub.f32 %v3669, %v3673
        %v3678 = vsub.f32 %v3670, %v3676
        %v3679 = vmul.f32 %v3677, 1.442695
        %v3680 = vpow.pop %v3679
        %v3681 = vmul.f32 %v3678, 1.442695
        %v3682 = vpow.pop %v3681
        %3683 = vmatpush.xpose.msra.mxu0 %v1779
        %3684 = vmatpush.xpose.msra.mxu0 %v1777
        %3685 = vmatpush.xpose.msra.mxu0 %v1775
        %3686 = vmatpush.xpose.msra.mxu0 %v1773
        %3687 = vmatpush.xpose.msra.mxu0 %v1771
        %3688 = vmatpush.xpose.msra.mxu0 %v1769
        %3689 = vmatpush.xpose.msra.mxu0 %v1767
        %3690 = vmatpush.xpose.msra.mxu0 %v1765
        %3691 = vmatpush.xpose.msra.mxu0 %v1763
        %3692 = vmatpush.xpose.msra.mxu0 %v1761
        %3693 = vmatpush.xpose.msra.mxu0 %v1759
        %3694 = vmatpush.xpose.msra.mxu0 %v1757
        %3695 = vmatpush.xpose.msra.mxu0 %v1755
        %3696 = vmatpush.xpose.msra.mxu0 %v1753
        %3697 = vmatpush.xpose.msra.mxu0 %v1751
        %3698 = vmatpush.xpose.msra.mxu0 %v1749
        %3699 = vmatmul.f32.gmra.mxu0 %v3680
        %v3700 = vpop.f32.mrf.mxu0
        %v3701 = vadd.f32 0.0, %v3700
        %3702 = vdwg.mxu0
        %3703 = vmatpush.xpose.msra.mxu0 %v1811
        %3704 = vmatpush.xpose.msra.mxu0 %v1809
        %3705 = vmatpush.xpose.msra.mxu0 %v1807
        %3706 = vmatpush.xpose.msra.mxu0 %v1805
        %3707 = vmatpush.xpose.msra.mxu0 %v1803
        %3708 = vmatpush.xpose.msra.mxu0 %v1801
        %3709 = vmatpush.xpose.msra.mxu0 %v1799
        %3710 = vmatpush.xpose.msra.mxu0 %v1797
        %3711 = vmatpush.xpose.msra.mxu0 %v1795
        %3712 = vmatpush.xpose.msra.mxu0 %v1793
        %3713 = vmatpush.xpose.msra.mxu0 %v1791
        %3714 = vmatpush.xpose.msra.mxu0 %v1789
        %3715 = vmatpush.xpose.msra.mxu0 %v1787
        %3716 = vmatpush.xpose.msra.mxu0 %v1785
        %3717 = vmatpush.xpose.msra.mxu0 %v1783
        %3718 = vmatpush.xpose.msra.mxu0 %v1781
        %3719 = vmatmul.f32.gmra.mxu0 %v3682
        %v3720 = vpop.f32.mrf.mxu0
        %v3721 = vadd.f32 0.0, %v3720
        %3722 = vdwg.mxu0
        %v3723 = vlog2.pop %v3701
        %v3724 = vmul.f32 %v3723, 0.6931472
        %v3725 = vlog2.pop %v3721
        %v3726 = vmul.f32 %v3725, 0.6931472
        %v3727 = vadd.f32 %v3724, %v3673
        %v3728 = vadd.f32 %v3726, %v3676
        %v3729 = vmul.f32 %v3727, -0.1
        %v3730 = vmul.f32 %v3728, -0.1
        %v3731 = vmul.f32 %v3729, 10.0
        %v3732 = vmul.f32 %v3730, 10.0
        %v3733 = vadd.f32 %v3731, %v1707
        %v3734 = vadd.f32 %v3732, %v1709
        %v3735 = vsel %vm1814, %v3733, -inf
        %3736 = vmax.xlane.f32.xlu0 %v3735
        %v3737 = vpop.xlane.xlu0 %3736
        %v3738 = vsel %vm1814, %v3734, -inf
        %3739 = vmax.xlane.f32.xlu0 %v3738
        %v3740 = vpop.xlane.xlu0 %3739
        %v3741 = vsub.f32 %v3733, %v3737
        %v3742 = vsub.f32 %v3734, %v3740
        %v3743 = vmul.f32 %v3741, 1.442695
        %v3744 = vpow.pop %v3743
        %v3745 = vmul.f32 %v3742, 1.442695
        %v3746 = vpow.pop %v3745
        %3747 = vmatpush.msra.mxu0 %v1779
        %3748 = vmatpush.msra.mxu0 %v1777
        %3749 = vmatpush.msra.mxu0 %v1775
        %3750 = vmatpush.msra.mxu0 %v1773
        %3751 = vmatpush.msra.mxu0 %v1771
        %3752 = vmatpush.msra.mxu0 %v1769
        %3753 = vmatpush.msra.mxu0 %v1767
        %3754 = vmatpush.msra.mxu0 %v1765
        %3755 = vmatpush.msra.mxu0 %v1763
        %3756 = vmatpush.msra.mxu0 %v1761
        %3757 = vmatpush.msra.mxu0 %v1759
        %3758 = vmatpush.msra.mxu0 %v1757
        %3759 = vmatpush.msra.mxu0 %v1755
        %3760 = vmatpush.msra.mxu0 %v1753
        %3761 = vmatpush.msra.mxu0 %v1751
        %3762 = vmatpush.msra.mxu0 %v1749
        %3763 = vmatmul.f32.gmra.mxu0 %v3744
        %v3764 = vpop.f32.mrf.mxu0
        %v3765 = vadd.f32 0.0, %v3764
        %3766 = vdwg.mxu0
        %3767 = vmatpush.msra.mxu0 %v1811
        %3768 = vmatpush.msra.mxu0 %v1809
        %3769 = vmatpush.msra.mxu0 %v1807
        %3770 = vmatpush.msra.mxu0 %v1805
        %3771 = vmatpush.msra.mxu0 %v1803
        %3772 = vmatpush.msra.mxu0 %v1801
        %3773 = vmatpush.msra.mxu0 %v1799
        %3774 = vmatpush.msra.mxu0 %v1797
        %3775 = vmatpush.msra.mxu0 %v1795
        %3776 = vmatpush.msra.mxu0 %v1793
        %3777 = vmatpush.msra.mxu0 %v1791
        %3778 = vmatpush.msra.mxu0 %v1789
        %3779 = vmatpush.msra.mxu0 %v1787
        %3780 = vmatpush.msra.mxu0 %v1785
        %3781 = vmatpush.msra.mxu0 %v1783
        %3782 = vmatpush.msra.mxu0 %v1781
        %3783 = vmatmul.f32.gmra.mxu0 %v3746
        %v3784 = vpop.f32.mrf.mxu0
        %v3785 = vadd.f32 0.0, %v3784
        %3786 = vdwg.mxu0
        %v3787 = vlog2.pop %v3765
        %v3788 = vmul.f32 %v3787, 0.6931472
        %v3789 = vlog2.pop %v3785
        %v3790 = vmul.f32 %v3789, 0.6931472
        %v3791 = vadd.f32 %v3788, %v3737
        %v3792 = vadd.f32 %v3790, %v3740
        %v3793 = vmul.f32 %v3791, -0.1
        %v3794 = vmul.f32 %v3792, -0.1
        %v3795 = vmul.f32 %v3793, 10.0
        %v3796 = vmul.f32 %v3794, 10.0
        %v3797 = vadd.f32 %v3795, %v1713
        %v3798 = vadd.f32 %v3796, %v1715
        %v3799 = vsel %vm1814, %v3797, -inf
        %3800 = vmax.xlane.f32.xlu0 %v3799
        %v3801 = vpop.xlane.xlu0 %3800
        %v3802 = vsel %vm1814, %v3798, -inf
        %3803 = vmax.xlane.f32.xlu0 %v3802
        %v3804 = vpop.xlane.xlu0 %3803
        %v3805 = vsub.f32 %v3797, %v3801
        %v3806 = vsub.f32 %v3798, %v3804
        %v3807 = vmul.f32 %v3805, 1.442695
        %v3808 = vpow.pop %v3807
        %v3809 = vmul.f32 %v3806, 1.442695
        %v3810 = vpow.pop %v3809
        %3811 = vmatpush.xpose.msra.mxu0 %v1779
        %3812 = vmatpush.xpose.msra.mxu0 %v1777
        %3813 = vmatpush.xpose.msra.mxu0 %v1775
        %3814 = vmatpush.xpose.msra.mxu0 %v1773
        %3815 = vmatpush.xpose.msra.mxu0 %v1771
        %3816 = vmatpush.xpose.msra.mxu0 %v1769
        %3817 = vmatpush.xpose.msra.mxu0 %v1767
        %3818 = vmatpush.xpose.msra.mxu0 %v1765
        %3819 = vmatpush.xpose.msra.mxu0 %v1763
        %3820 = vmatpush.xpose.msra.mxu0 %v1761
        %3821 = vmatpush.xpose.msra.mxu0 %v1759
        %3822 = vmatpush.xpose.msra.mxu0 %v1757
        %3823 = vmatpush.xpose.msra.mxu0 %v1755
        %3824 = vmatpush.xpose.msra.mxu0 %v1753
        %3825 = vmatpush.xpose.msra.mxu0 %v1751
        %3826 = vmatpush.xpose.msra.mxu0 %v1749
        %3827 = vmatmul.f32.gmra.mxu0 %v3808
        %v3828 = vpop.f32.mrf.mxu0
        %v3829 = vadd.f32 0.0, %v3828
        %3830 = vdwg.mxu0
        %3831 = vmatpush.xpose.msra.mxu0 %v1811
        %3832 = vmatpush.xpose.msra.mxu0 %v1809
        %3833 = vmatpush.xpose.msra.mxu0 %v1807
        %3834 = vmatpush.xpose.msra.mxu0 %v1805
        %3835 = vmatpush.xpose.msra.mxu0 %v1803
        %3836 = vmatpush.xpose.msra.mxu0 %v1801
        %3837 = vmatpush.xpose.msra.mxu0 %v1799
        %3838 = vmatpush.xpose.msra.mxu0 %v1797
        %3839 = vmatpush.xpose.msra.mxu0 %v1795
        %3840 = vmatpush.xpose.msra.mxu0 %v1793
        %3841 = vmatpush.xpose.msra.mxu0 %v1791
        %3842 = vmatpush.xpose.msra.mxu0 %v1789
        %3843 = vmatpush.xpose.msra.mxu0 %v1787
        %3844 = vmatpush.xpose.msra.mxu0 %v1785
        %3845 = vmatpush.xpose.msra.mxu0 %v1783
        %3846 = vmatpush.xpose.msra.mxu0 %v1781
        %3847 = vmatmul.f32.gmra.mxu0 %v3810
        %v3848 = vpop.f32.mrf.mxu0
        %v3849 = vadd.f32 0.0, %v3848
        %3850 = vdwg.mxu0
        %v3851 = vlog2.pop %v3829
        %v3852 = vmul.f32 %v3851, 0.6931472
        %v3853 = vlog2.pop %v3849
        %v3854 = vmul.f32 %v3853, 0.6931472
        %v3855 = vadd.f32 %v3852, %v3801
        %v3856 = vadd.f32 %v3854, %v3804
        %v3857 = vmul.f32 %v3855, -0.1
        %v3858 = vmul.f32 %v3856, -0.1
        %v3859 = vmul.f32 %v3857, 10.0
        %v3860 = vmul.f32 %v3858, 10.0
        %v3861 = vadd.f32 %v3859, %v1707
        %v3862 = vadd.f32 %v3860, %v1709
        %v3863 = vsel %vm1814, %v3861, -inf
        %3864 = vmax.xlane.f32.xlu0 %v3863
        %v3865 = vpop.xlane.xlu0 %3864
        %v3866 = vsel %vm1814, %v3862, -inf
        %3867 = vmax.xlane.f32.xlu0 %v3866
        %v3868 = vpop.xlane.xlu0 %3867
        %v3869 = vsub.f32 %v3861, %v3865
        %v3870 = vsub.f32 %v3862, %v3868
        %v3871 = vmul.f32 %v3869, 1.442695
        %v3872 = vpow.pop %v3871
        %v3873 = vmul.f32 %v3870, 1.442695
        %v3874 = vpow.pop %v3873
        %3875 = vmatpush.msra.mxu0 %v1779
        %3876 = vmatpush.msra.mxu0 %v1777
        %3877 = vmatpush.msra.mxu0 %v1775
        %3878 = vmatpush.msra.mxu0 %v1773
        %3879 = vmatpush.msra.mxu0 %v1771
        %3880 = vmatpush.msra.mxu0 %v1769
        %3881 = vmatpush.msra.mxu0 %v1767
        %3882 = vmatpush.msra.mxu0 %v1765
        %3883 = vmatpush.msra.mxu0 %v1763
        %3884 = vmatpush.msra.mxu0 %v1761
        %3885 = vmatpush.msra.mxu0 %v1759
        %3886 = vmatpush.msra.mxu0 %v1757
        %3887 = vmatpush.msra.mxu0 %v1755
        %3888 = vmatpush.msra.mxu0 %v1753
        %3889 = vmatpush.msra.mxu0 %v1751
        %3890 = vmatpush.msra.mxu0 %v1749
        %3891 = vmatmul.f32.gmra.mxu0 %v3872
        %v3892 = vpop.f32.mrf.mxu0
        %v3893 = vadd.f32 0.0, %v3892
        %3894 = vdwg.mxu0
        %3895 = vmatpush.msra.mxu0 %v1811
        %3896 = vmatpush.msra.mxu0 %v1809
        %3897 = vmatpush.msra.mxu0 %v1807
        %3898 = vmatpush.msra.mxu0 %v1805
        %3899 = vmatpush.msra.mxu0 %v1803
        %3900 = vmatpush.msra.mxu0 %v1801
        %3901 = vmatpush.msra.mxu0 %v1799
        %3902 = vmatpush.msra.mxu0 %v1797
        %3903 = vmatpush.msra.mxu0 %v1795
        %3904 = vmatpush.msra.mxu0 %v1793
        %3905 = vmatpush.msra.mxu0 %v1791
        %3906 = vmatpush.msra.mxu0 %v1789
        %3907 = vmatpush.msra.mxu0 %v1787
        %3908 = vmatpush.msra.mxu0 %v1785
        %3909 = vmatpush.msra.mxu0 %v1783
        %3910 = vmatpush.msra.mxu0 %v1781
        %3911 = vmatmul.f32.gmra.mxu0 %v3874
        %v3912 = vpop.f32.mrf.mxu0
        %v3913 = vadd.f32 0.0, %v3912
        %3914 = vdwg.mxu0
        %v3915 = vlog2.pop %v3893
        %v3916 = vmul.f32 %v3915, 0.6931472
        %v3917 = vlog2.pop %v3913
        %v3918 = vmul.f32 %v3917, 0.6931472
        %v3919 = vadd.f32 %v3916, %v3865
        %v3920 = vadd.f32 %v3918, %v3868
        %v3921 = vmul.f32 %v3919, -0.1
        %v3922 = vmul.f32 %v3920, -0.1
        %v3923 = vmul.f32 %v3921, 10.0
        %v3924 = vmul.f32 %v3922, 10.0
        %v3925 = vadd.f32 %v3923, %v1713
        %v3926 = vadd.f32 %v3924, %v1715
        %v3927 = vsel %vm1814, %v3925, -inf
        %3928 = vmax.xlane.f32.xlu0 %v3927
        %v3929 = vpop.xlane.xlu0 %3928
        %v3930 = vsel %vm1814, %v3926, -inf
        %3931 = vmax.xlane.f32.xlu0 %v3930
        %v3932 = vpop.xlane.xlu0 %3931
        %v3933 = vsub.f32 %v3925, %v3929
        %v3934 = vsub.f32 %v3926, %v3932
        %v3935 = vmul.f32 %v3933, 1.442695
        %v3936 = vpow.pop %v3935
        %v3937 = vmul.f32 %v3934, 1.442695
        %v3938 = vpow.pop %v3937
        %3939 = vmatpush.xpose.msra.mxu0 %v1779
        %3940 = vmatpush.xpose.msra.mxu0 %v1777
        %3941 = vmatpush.xpose.msra.mxu0 %v1775
        %3942 = vmatpush.xpose.msra.mxu0 %v1773
        %3943 = vmatpush.xpose.msra.mxu0 %v1771
        %3944 = vmatpush.xpose.msra.mxu0 %v1769
        %3945 = vmatpush.xpose.msra.mxu0 %v1767
        %3946 = vmatpush.xpose.msra.mxu0 %v1765
        %3947 = vmatpush.xpose.msra.mxu0 %v1763
        %3948 = vmatpush.xpose.msra.mxu0 %v1761
        %3949 = vmatpush.xpose.msra.mxu0 %v1759
        %3950 = vmatpush.xpose.msra.mxu0 %v1757
        %3951 = vmatpush.xpose.msra.mxu0 %v1755
        %3952 = vmatpush.xpose.msra.mxu0 %v1753
        %3953 = vmatpush.xpose.msra.mxu0 %v1751
        %3954 = vmatpush.xpose.msra.mxu0 %v1749
        %3955 = vmatmul.f32.gmra.mxu0 %v3936
        %v3956 = vpop.f32.mrf.mxu0
        %v3957 = vadd.f32 0.0, %v3956
        %3958 = vdwg.mxu0
        %3959 = vmatpush.xpose.msra.mxu0 %v1811
        %3960 = vmatpush.xpose.msra.mxu0 %v1809
        %3961 = vmatpush.xpose.msra.mxu0 %v1807
        %3962 = vmatpush.xpose.msra.mxu0 %v1805
        %3963 = vmatpush.xpose.msra.mxu0 %v1803
        %3964 = vmatpush.xpose.msra.mxu0 %v1801
        %3965 = vmatpush.xpose.msra.mxu0 %v1799
        %3966 = vmatpush.xpose.msra.mxu0 %v1797
        %3967 = vmatpush.xpose.msra.mxu0 %v1795
        %3968 = vmatpush.xpose.msra.mxu0 %v1793
        %3969 = vmatpush.xpose.msra.mxu0 %v1791
        %3970 = vmatpush.xpose.msra.mxu0 %v1789
        %3971 = vmatpush.xpose.msra.mxu0 %v1787
        %3972 = vmatpush.xpose.msra.mxu0 %v1785
        %3973 = vmatpush.xpose.msra.mxu0 %v1783
        %3974 = vmatpush.xpose.msra.mxu0 %v1781
        %3975 = vmatmul.f32.gmra.mxu0 %v3938
        %v3976 = vpop.f32.mrf.mxu0
        %v3977 = vadd.f32 0.0, %v3976
        %3978 = vdwg.mxu0
        %v3979 = vlog2.pop %v3957
        %v3980 = vmul.f32 %v3979, 0.6931472
        %v3981 = vlog2.pop %v3977
        %v3982 = vmul.f32 %v3981, 0.6931472
        %v3983 = vadd.f32 %v3980, %v3929
        %v3984 = vadd.f32 %v3982, %v3932
        %v3985 = vmul.f32 %v3983, -0.1
        %v3986 = vmul.f32 %v3984, -0.1
        %v3987 = vmul.f32 %v3985, 10.0
        %v3988 = vmul.f32 %v3986, 10.0
        %v3989 = vadd.f32 %v3987, %v1707
        %v3990 = vadd.f32 %v3988, %v1709
        %v3991 = vsel %vm1814, %v3989, -inf
        %3992 = vmax.xlane.f32.xlu0 %v3991
        %v3993 = vpop.xlane.xlu0 %3992
        %v3994 = vsel %vm1814, %v3990, -inf
        %3995 = vmax.xlane.f32.xlu0 %v3994
        %v3996 = vpop.xlane.xlu0 %3995
        %v3997 = vsub.f32 %v3989, %v3993
        %v3998 = vsub.f32 %v3990, %v3996
        %v3999 = vmul.f32 %v3997, 1.442695
        %v4000 = vpow.pop %v3999
        %v4001 = vmul.f32 %v3998, 1.442695
        %v4002 = vpow.pop %v4001
        %4003 = vmatpush.msra.mxu0 %v1779
        %4004 = vmatpush.msra.mxu0 %v1777
        %4005 = vmatpush.msra.mxu0 %v1775
        %4006 = vmatpush.msra.mxu0 %v1773
        %4007 = vmatpush.msra.mxu0 %v1771
        %4008 = vmatpush.msra.mxu0 %v1769
        %4009 = vmatpush.msra.mxu0 %v1767
        %4010 = vmatpush.msra.mxu0 %v1765
        %4011 = vmatpush.msra.mxu0 %v1763
        %4012 = vmatpush.msra.mxu0 %v1761
        %4013 = vmatpush.msra.mxu0 %v1759
        %4014 = vmatpush.msra.mxu0 %v1757
        %4015 = vmatpush.msra.mxu0 %v1755
        %4016 = vmatpush.msra.mxu0 %v1753
        %4017 = vmatpush.msra.mxu0 %v1751
        %4018 = vmatpush.msra.mxu0 %v1749
        %4019 = vmatmul.f32.gmra.mxu0 %v4000
        %v4020 = vpop.f32.mrf.mxu0
        %v4021 = vadd.f32 0.0, %v4020
        %4022 = vdwg.mxu0
        %4023 = vmatpush.msra.mxu0 %v1811
        %4024 = vmatpush.msra.mxu0 %v1809
        %4025 = vmatpush.msra.mxu0 %v1807
        %4026 = vmatpush.msra.mxu0 %v1805
        %4027 = vmatpush.msra.mxu0 %v1803
        %4028 = vmatpush.msra.mxu0 %v1801
        %4029 = vmatpush.msra.mxu0 %v1799
        %4030 = vmatpush.msra.mxu0 %v1797
        %4031 = vmatpush.msra.mxu0 %v1795
        %4032 = vmatpush.msra.mxu0 %v1793
        %4033 = vmatpush.msra.mxu0 %v1791
        %4034 = vmatpush.msra.mxu0 %v1789
        %4035 = vmatpush.msra.mxu0 %v1787
        %4036 = vmatpush.msra.mxu0 %v1785
        %4037 = vmatpush.msra.mxu0 %v1783
        %4038 = vmatpush.msra.mxu0 %v1781
        %4039 = vmatmul.f32.gmra.mxu0 %v4002
        %v4040 = vpop.f32.mrf.mxu0
        %v4041 = vadd.f32 0.0, %v4040
        %4042 = vdwg.mxu0
        %v4043 = vlog2.pop %v4021
        %v4044 = vmul.f32 %v4043, 0.6931472
        %v4045 = vlog2.pop %v4041
        %v4046 = vmul.f32 %v4045, 0.6931472
        %v4047 = vadd.f32 %v4044, %v3993
        %v4048 = vadd.f32 %v4046, %v3996
        %v4049 = vmul.f32 %v4047, -0.1
        %v4050 = vmul.f32 %v4048, -0.1
        %v4051 = vmul.f32 %v4049, 10.0
        %v4052 = vmul.f32 %v4050, 10.0
        %v4053 = vadd.f32 %v4051, %v1713
        %v4054 = vadd.f32 %v4052, %v1715
        %v4055 = vsel %vm1814, %v4053, -inf
        %4056 = vmax.xlane.f32.xlu0 %v4055
        %v4057 = vpop.xlane.xlu0 %4056
        %v4058 = vsel %vm1814, %v4054, -inf
        %4059 = vmax.xlane.f32.xlu0 %v4058
        %v4060 = vpop.xlane.xlu0 %4059
        %v4061 = vsub.f32 %v4053, %v4057
        %v4062 = vsub.f32 %v4054, %v4060
        %v4063 = vmul.f32 %v4061, 1.442695
        %v4064 = vpow.pop %v4063
        %v4065 = vmul.f32 %v4062, 1.442695
        %v4066 = vpow.pop %v4065
        %4067 = vmatpush.xpose.msra.mxu0 %v1779
        %4068 = vmatpush.xpose.msra.mxu0 %v1777
        %4069 = vmatpush.xpose.msra.mxu0 %v1775
        %4070 = vmatpush.xpose.msra.mxu0 %v1773
        %4071 = vmatpush.xpose.msra.mxu0 %v1771
        %4072 = vmatpush.xpose.msra.mxu0 %v1769
        %4073 = vmatpush.xpose.msra.mxu0 %v1767
        %4074 = vmatpush.xpose.msra.mxu0 %v1765
        %4075 = vmatpush.xpose.msra.mxu0 %v1763
        %4076 = vmatpush.xpose.msra.mxu0 %v1761
        %4077 = vmatpush.xpose.msra.mxu0 %v1759
        %4078 = vmatpush.xpose.msra.mxu0 %v1757
        %4079 = vmatpush.xpose.msra.mxu0 %v1755
        %4080 = vmatpush.xpose.msra.mxu0 %v1753
        %4081 = vmatpush.xpose.msra.mxu0 %v1751
        %4082 = vmatpush.xpose.msra.mxu0 %v1749
        %4083 = vmatmul.f32.gmra.mxu0 %v4064
        %v4084 = vpop.f32.mrf.mxu0
        %v4085 = vadd.f32 0.0, %v4084
        %4086 = vdwg.mxu0
        %4087 = vmatpush.xpose.msra.mxu0 %v1811
        %4088 = vmatpush.xpose.msra.mxu0 %v1809
        %4089 = vmatpush.xpose.msra.mxu0 %v1807
        %4090 = vmatpush.xpose.msra.mxu0 %v1805
        %4091 = vmatpush.xpose.msra.mxu0 %v1803
        %4092 = vmatpush.xpose.msra.mxu0 %v1801
        %4093 = vmatpush.xpose.msra.mxu0 %v1799
        %4094 = vmatpush.xpose.msra.mxu0 %v1797
        %4095 = vmatpush.xpose.msra.mxu0 %v1795
        %4096 = vmatpush.xpose.msra.mxu0 %v1793
        %4097 = vmatpush.xpose.msra.mxu0 %v1791
        %4098 = vmatpush.xpose.msra.mxu0 %v1789
        %4099 = vmatpush.xpose.msra.mxu0 %v1787
        %4100 = vmatpush.xpose.msra.mxu0 %v1785
        %4101 = vmatpush.xpose.msra.mxu0 %v1783
        %4102 = vmatpush.xpose.msra.mxu0 %v1781
        %4103 = vmatmul.f32.gmra.mxu0 %v4066
        %v4104 = vpop.f32.mrf.mxu0
        %v4105 = vadd.f32 0.0, %v4104
        %4106 = vdwg.mxu0
        %v4107 = vlog2.pop %v4085
        %v4108 = vmul.f32 %v4107, 0.6931472
        %v4109 = vlog2.pop %v4105
        %v4110 = vmul.f32 %v4109, 0.6931472
        %v4111 = vadd.f32 %v4108, %v4057
        %v4112 = vadd.f32 %v4110, %v4060
        %v4113 = vmul.f32 %v4111, -0.1
        %v4114 = vmul.f32 %v4112, -0.1
        %v4115 = vmul.f32 %v4113, 10.0
        %v4116 = vmul.f32 %v4114, 10.0
        %v4117 = vadd.f32 %v4115, %v1707
        %v4118 = vadd.f32 %v4116, %v1709
        %v4119 = vsel %vm1814, %v4117, -inf
        %4120 = vmax.xlane.f32.xlu0 %v4119
        %v4121 = vpop.xlane.xlu0 %4120
        %v4122 = vsel %vm1814, %v4118, -inf
        %4123 = vmax.xlane.f32.xlu0 %v4122
        %v4124 = vpop.xlane.xlu0 %4123
        %v4125 = vsub.f32 %v4117, %v4121
        %v4126 = vsub.f32 %v4118, %v4124
        %v4127 = vmul.f32 %v4125, 1.442695
        %v4128 = vpow.pop %v4127
        %v4129 = vmul.f32 %v4126, 1.442695
        %v4130 = vpow.pop %v4129
        %4131 = vmatpush.msra.mxu0 %v1779
        %4132 = vmatpush.msra.mxu0 %v1777
        %4133 = vmatpush.msra.mxu0 %v1775
        %4134 = vmatpush.msra.mxu0 %v1773
        %4135 = vmatpush.msra.mxu0 %v1771
        %4136 = vmatpush.msra.mxu0 %v1769
        %4137 = vmatpush.msra.mxu0 %v1767
        %4138 = vmatpush.msra.mxu0 %v1765
        %4139 = vmatpush.msra.mxu0 %v1763
        %4140 = vmatpush.msra.mxu0 %v1761
        %4141 = vmatpush.msra.mxu0 %v1759
        %4142 = vmatpush.msra.mxu0 %v1757
        %4143 = vmatpush.msra.mxu0 %v1755
        %4144 = vmatpush.msra.mxu0 %v1753
        %4145 = vmatpush.msra.mxu0 %v1751
        %4146 = vmatpush.msra.mxu0 %v1749
        %4147 = vmatmul.f32.gmra.mxu0 %v4128
        %v4148 = vpop.f32.mrf.mxu0
        %v4149 = vadd.f32 0.0, %v4148
        %4150 = vdwg.mxu0
        %4151 = vmatpush.msra.mxu0 %v1811
        %4152 = vmatpush.msra.mxu0 %v1809
        %4153 = vmatpush.msra.mxu0 %v1807
        %4154 = vmatpush.msra.mxu0 %v1805
        %4155 = vmatpush.msra.mxu0 %v1803
        %4156 = vmatpush.msra.mxu0 %v1801
        %4157 = vmatpush.msra.mxu0 %v1799
        %4158 = vmatpush.msra.mxu0 %v1797
        %4159 = vmatpush.msra.mxu0 %v1795
        %4160 = vmatpush.msra.mxu0 %v1793
        %4161 = vmatpush.msra.mxu0 %v1791
        %4162 = vmatpush.msra.mxu0 %v1789
        %4163 = vmatpush.msra.mxu0 %v1787
        %4164 = vmatpush.msra.mxu0 %v1785
        %4165 = vmatpush.msra.mxu0 %v1783
        %4166 = vmatpush.msra.mxu0 %v1781
        %4167 = vmatmul.f32.gmra.mxu0 %v4130
        %v4168 = vpop.f32.mrf.mxu0
        %v4169 = vadd.f32 0.0, %v4168
        %4170 = vdwg.mxu0
        %v4171 = vlog2.pop %v4149
        %v4172 = vmul.f32 %v4171, 0.6931472
        %v4173 = vlog2.pop %v4169
        %v4174 = vmul.f32 %v4173, 0.6931472
        %v4175 = vadd.f32 %v4172, %v4121
        %v4176 = vadd.f32 %v4174, %v4124
        %v4177 = vmul.f32 %v4175, -0.1
        %v4178 = vmul.f32 %v4176, -0.1
        %v4179 = vmul.f32 %v4177, 10.0
        %v4180 = vmul.f32 %v4178, 10.0
        %v4181 = vadd.f32 %v4179, %v1713
        %v4182 = vadd.f32 %v4180, %v1715
        %v4183 = vsel %vm1814, %v4181, -inf
        %4184 = vmax.xlane.f32.xlu0 %v4183
        %v4185 = vpop.xlane.xlu0 %4184
        %v4186 = vsel %vm1814, %v4182, -inf
        %4187 = vmax.xlane.f32.xlu0 %v4186
        %v4188 = vpop.xlane.xlu0 %4187
        %v4189 = vsub.f32 %v4181, %v4185
        %v4190 = vsub.f32 %v4182, %v4188
        %v4191 = vmul.f32 %v4189, 1.442695
        %v4192 = vpow.pop %v4191
        %v4193 = vmul.f32 %v4190, 1.442695
        %v4194 = vpow.pop %v4193
        %4195 = vmatpush.xpose.msra.mxu0 %v1779
        %4196 = vmatpush.xpose.msra.mxu0 %v1777
        %4197 = vmatpush.xpose.msra.mxu0 %v1775
        %4198 = vmatpush.xpose.msra.mxu0 %v1773
        %4199 = vmatpush.xpose.msra.mxu0 %v1771
        %4200 = vmatpush.xpose.msra.mxu0 %v1769
        %4201 = vmatpush.xpose.msra.mxu0 %v1767
        %4202 = vmatpush.xpose.msra.mxu0 %v1765
        %4203 = vmatpush.xpose.msra.mxu0 %v1763
        %4204 = vmatpush.xpose.msra.mxu0 %v1761
        %4205 = vmatpush.xpose.msra.mxu0 %v1759
        %4206 = vmatpush.xpose.msra.mxu0 %v1757
        %4207 = vmatpush.xpose.msra.mxu0 %v1755
        %4208 = vmatpush.xpose.msra.mxu0 %v1753
        %4209 = vmatpush.xpose.msra.mxu0 %v1751
        %4210 = vmatpush.xpose.msra.mxu0 %v1749
        %4211 = vmatmul.f32.gmra.mxu0 %v4192
        %v4212 = vpop.f32.mrf.mxu0
        %v4213 = vadd.f32 0.0, %v4212
        %4214 = vdwg.mxu0
        %4215 = vmatpush.xpose.msra.mxu0 %v1811
        %4216 = vmatpush.xpose.msra.mxu0 %v1809
        %4217 = vmatpush.xpose.msra.mxu0 %v1807
        %4218 = vmatpush.xpose.msra.mxu0 %v1805
        %4219 = vmatpush.xpose.msra.mxu0 %v1803
        %4220 = vmatpush.xpose.msra.mxu0 %v1801
        %4221 = vmatpush.xpose.msra.mxu0 %v1799
        %4222 = vmatpush.xpose.msra.mxu0 %v1797
        %4223 = vmatpush.xpose.msra.mxu0 %v1795
        %4224 = vmatpush.xpose.msra.mxu0 %v1793
        %4225 = vmatpush.xpose.msra.mxu0 %v1791
        %4226 = vmatpush.xpose.msra.mxu0 %v1789
        %4227 = vmatpush.xpose.msra.mxu0 %v1787
        %4228 = vmatpush.xpose.msra.mxu0 %v1785
        %4229 = vmatpush.xpose.msra.mxu0 %v1783
        %4230 = vmatpush.xpose.msra.mxu0 %v1781
        %4231 = vmatmul.f32.gmra.mxu0 %v4194
        %v4232 = vpop.f32.mrf.mxu0
        %v4233 = vadd.f32 0.0, %v4232
        %4234 = vdwg.mxu0
        %v4235 = vlog2.pop %v4213
        %v4236 = vmul.f32 %v4235, 0.6931472
        %v4237 = vlog2.pop %v4233
        %v4238 = vmul.f32 %v4237, 0.6931472
        %v4239 = vadd.f32 %v4236, %v4185
        %v4240 = vadd.f32 %v4238, %v4188
        %v4241 = vmul.f32 %v4239, -0.1
        %v4242 = vmul.f32 %v4240, -0.1
        %v4243 = vmul.f32 %v4241, 10.0
        %v4244 = vmul.f32 %v4242, 10.0
        %v4245 = vadd.f32 %v4243, %v1707
        %v4246 = vadd.f32 %v4244, %v1709
        %v4247 = vsel %vm1814, %v4245, -inf
        %4248 = vmax.xlane.f32.xlu0 %v4247
        %v4249 = vpop.xlane.xlu0 %4248
        %v4250 = vsel %vm1814, %v4246, -inf
        %4251 = vmax.xlane.f32.xlu0 %v4250
        %v4252 = vpop.xlane.xlu0 %4251
        %v4253 = vsub.f32 %v4245, %v4249
        %v4254 = vsub.f32 %v4246, %v4252
        %v4255 = vmul.f32 %v4253, 1.442695
        %v4256 = vpow.pop %v4255
        %v4257 = vmul.f32 %v4254, 1.442695
        %v4258 = vpow.pop %v4257
        %4259 = vmatpush.msra.mxu0 %v1779
        %4260 = vmatpush.msra.mxu0 %v1777
        %4261 = vmatpush.msra.mxu0 %v1775
        %4262 = vmatpush.msra.mxu0 %v1773
        %4263 = vmatpush.msra.mxu0 %v1771
        %4264 = vmatpush.msra.mxu0 %v1769
        %4265 = vmatpush.msra.mxu0 %v1767
        %4266 = vmatpush.msra.mxu0 %v1765
        %4267 = vmatpush.msra.mxu0 %v1763
        %4268 = vmatpush.msra.mxu0 %v1761
        %4269 = vmatpush.msra.mxu0 %v1759
        %4270 = vmatpush.msra.mxu0 %v1757
        %4271 = vmatpush.msra.mxu0 %v1755
        %4272 = vmatpush.msra.mxu0 %v1753
        %4273 = vmatpush.msra.mxu0 %v1751
        %4274 = vmatpush.msra.mxu0 %v1749
        %4275 = vmatmul.f32.gmra.mxu0 %v4256
        %v4276 = vpop.f32.mrf.mxu0
        %v4277 = vadd.f32 0.0, %v4276
        %4278 = vdwg.mxu0
        %4279 = vmatpush.msra.mxu0 %v1811
        %4280 = vmatpush.msra.mxu0 %v1809
        %4281 = vmatpush.msra.mxu0 %v1807
        %4282 = vmatpush.msra.mxu0 %v1805
        %4283 = vmatpush.msra.mxu0 %v1803
        %4284 = vmatpush.msra.mxu0 %v1801
        %4285 = vmatpush.msra.mxu0 %v1799
        %4286 = vmatpush.msra.mxu0 %v1797
        %4287 = vmatpush.msra.mxu0 %v1795
        %4288 = vmatpush.msra.mxu0 %v1793
        %4289 = vmatpush.msra.mxu0 %v1791
        %4290 = vmatpush.msra.mxu0 %v1789
        %4291 = vmatpush.msra.mxu0 %v1787
        %4292 = vmatpush.msra.mxu0 %v1785
        %4293 = vmatpush.msra.mxu0 %v1783
        %4294 = vmatpush.msra.mxu0 %v1781
        %4295 = vmatmul.f32.gmra.mxu0 %v4258
        %v4296 = vpop.f32.mrf.mxu0
        %v4297 = vadd.f32 0.0, %v4296
        %4298 = vdwg.mxu0
        %v4299 = vlog2.pop %v4277
        %v4300 = vmul.f32 %v4299, 0.6931472
        %v4301 = vlog2.pop %v4297
        %v4302 = vmul.f32 %v4301, 0.6931472
        %v4303 = vadd.f32 %v4300, %v4249
        %v4304 = vadd.f32 %v4302, %v4252
        %v4305 = vmul.f32 %v4303, -0.1
        %v4306 = vmul.f32 %v4304, -0.1
        %v4307 = vmul.f32 %v4305, 10.0
        %v4308 = vmul.f32 %v4306, 10.0
        %v4309 = vadd.f32 %v4307, %v1713
        %v4310 = vadd.f32 %v4308, %v1715
        %v4311 = vsel %vm1814, %v4309, -inf
        %4312 = vmax.xlane.f32.xlu0 %v4311
        %v4313 = vpop.xlane.xlu0 %4312
        %v4314 = vsel %vm1814, %v4310, -inf
        %4315 = vmax.xlane.f32.xlu0 %v4314
        %v4316 = vpop.xlane.xlu0 %4315
        %v4317 = vsub.f32 %v4309, %v4313
        %v4318 = vsub.f32 %v4310, %v4316
        %v4319 = vmul.f32 %v4317, 1.442695
        %v4320 = vpow.pop %v4319
        %v4321 = vmul.f32 %v4318, 1.442695
        %v4322 = vpow.pop %v4321
        %4323 = vmatpush.xpose.msra.mxu0 %v1779
        %4324 = vmatpush.xpose.msra.mxu0 %v1777
        %4325 = vmatpush.xpose.msra.mxu0 %v1775
        %4326 = vmatpush.xpose.msra.mxu0 %v1773
        %4327 = vmatpush.xpose.msra.mxu0 %v1771
        %4328 = vmatpush.xpose.msra.mxu0 %v1769
        %4329 = vmatpush.xpose.msra.mxu0 %v1767
        %4330 = vmatpush.xpose.msra.mxu0 %v1765
        %4331 = vmatpush.xpose.msra.mxu0 %v1763
        %4332 = vmatpush.xpose.msra.mxu0 %v1761
        %4333 = vmatpush.xpose.msra.mxu0 %v1759
        %4334 = vmatpush.xpose.msra.mxu0 %v1757
        %4335 = vmatpush.xpose.msra.mxu0 %v1755
        %4336 = vmatpush.xpose.msra.mxu0 %v1753
        %4337 = vmatpush.xpose.msra.mxu0 %v1751
        %4338 = vmatpush.xpose.msra.mxu0 %v1749
        %4339 = vmatmul.f32.gmra.mxu0 %v4320
        %v4340 = vpop.f32.mrf.mxu0
        %v4341 = vadd.f32 0.0, %v4340
        %4342 = vdwg.mxu0
        %4343 = vmatpush.xpose.msra.mxu0 %v1811
        %4344 = vmatpush.xpose.msra.mxu0 %v1809
        %4345 = vmatpush.xpose.msra.mxu0 %v1807
        %4346 = vmatpush.xpose.msra.mxu0 %v1805
        %4347 = vmatpush.xpose.msra.mxu0 %v1803
        %4348 = vmatpush.xpose.msra.mxu0 %v1801
        %4349 = vmatpush.xpose.msra.mxu0 %v1799
        %4350 = vmatpush.xpose.msra.mxu0 %v1797
        %4351 = vmatpush.xpose.msra.mxu0 %v1795
        %4352 = vmatpush.xpose.msra.mxu0 %v1793
        %4353 = vmatpush.xpose.msra.mxu0 %v1791
        %4354 = vmatpush.xpose.msra.mxu0 %v1789
        %4355 = vmatpush.xpose.msra.mxu0 %v1787
        %4356 = vmatpush.xpose.msra.mxu0 %v1785
        %4357 = vmatpush.xpose.msra.mxu0 %v1783
        %4358 = vmatpush.xpose.msra.mxu0 %v1781
        %4359 = vmatmul.f32.gmra.mxu0 %v4322
        %v4360 = vpop.f32.mrf.mxu0
        %v4361 = vadd.f32 0.0, %v4360
        %4362 = vdwg.mxu0
        %v4363 = vlog2.pop %v4341
        %v4364 = vmul.f32 %v4363, 0.6931472
        %v4365 = vlog2.pop %v4361
        %v4366 = vmul.f32 %v4365, 0.6931472
        %v4367 = vadd.f32 %v4364, %v4313
        %v4368 = vadd.f32 %v4366, %v4316
        %v4369 = vmul.f32 %v4367, -0.1
        %v4370 = vmul.f32 %v4368, -0.1
        %v4371 = vmul.f32 %v346, %v4369
        %v4372 = vmul.f32 %v347, %v4370
        %v4373 = vsel %vm1814, %v4371, 0.0
        %4374 = vadd.xlane.f32.xlu0 %v4373
        %v4375 = vpop.xlane.xlu0 %4374
        %v4376 = vsel %vm1814, %v4372, 0.0
        %4377 = vadd.xlane.f32.xlu0 %v4376
        %v4378 = vpop.xlane.xlu0 %4377
        %v4379 = vmul.f32 %v348, %v4305
        %v4380 = vmul.f32 %v349, %v4306
        %v4381 = vsel %vm1814, %v4379, 0.0
        %4382 = vadd.xlane.f32.xlu0 %v4381
        %v4383 = vpop.xlane.xlu0 %4382
        %v4384 = vsel %vm1814, %v4380, 0.0
        %4385 = vadd.xlane.f32.xlu0 %v4384
        %v4386 = vpop.xlane.xlu0 %4385
        %v4387 = vadd.f32 %v4375, %v4383
        %v4388 = vadd.f32 %v4378, %v4386
        %v4391 = vrot.slane %v4388, 7
        %vm4392 = vcmask 1041409
        %v4393 = vsel %vm4392, %v4391, %v4387
        %v4394 = vlaneseq
        %v4395 = vand.u32 %v4394, 127
        %v4396 = vperm.slane %v4393, %v4395
        %vm4398 = vcmask 8192
        %4399 = vst.msk [vmem:[%s337] sm:$0x1] %vm4398, %v4396
        %s4400 = sand.u32 %s139, 1
        %s4401 = scalar_lea.sflag [#allocation4], %s4400
        %s4402 = sand.u32 %s139, 1
        %s4403 = scalar_lea.vmem [#allocation10], %s4402
        // Predicated region
        $region53: #{tpu_custom_call.1} parent=35 // pred_check
          %p4404 = pneg %p149
        $region54: #{tpu_custom_call.1} parent=35 // pred_check_branch
          %4406 = sbr.rel (%p4404) target = $region56
        $region55: #{tpu_custom_call.1} parent=35 // pred_region
          %4408 = vsyncadd %s4401, 0
          %s4409 = scalar_lea.hbm %s4, %s27
          %s4411 = sshll.u32 %s4403, 4
          %s4412 = int_to_ptr.vmem [resolvable:$true] %s4411
          %s4413 = sshll.u32 %s4409, 4
          %s4414 = int_to_ptr.hbm [resolvable:$true] %s4413
          %4416 = dma.vmem_to_hbm [thread:$0]  %s4412, 16, %s4414, %s4401
        $region56: #{tpu_custom_call.1} parent=35 // pred_fallthru
          _
      $region36: #{tpu_custom_call.1} parent=5 // pred_fallthru
        _
      %p4417 = scmp.le.s32.totalorder 2, %s22
      // Predicated region
      $region57: #{tpu_custom_call.1} parent=5 // pred_check
        %p4418 = pneg %p4417
      $region58: #{tpu_custom_call.1} parent=5 // pred_check_branch
        %4420 = sbr.rel (%p4418) target = $region60
      $region59: #{tpu_custom_call.1} parent=5 // pred_region
        %s4421 = ssub.s32 %s22, 2
        // Predicated region
        $region61: #{tpu_custom_call.1} parent=59 // pred_check
          %p4422 = pneg %p155
        $region62: #{tpu_custom_call.1} parent=59 // pred_check_branch
          %4424 = sbr.rel (%p4422) target = $region64
        $region63: #{tpu_custom_call.1} parent=59 // pred_region
          %s4425 = sand.u32 %s140, 1
          %s4426 = scalar_lea.sflag [#allocation4], %s4425
          %s4427 = sand.u32 %s140, 1
          %s4428 = scalar_lea.vmem [#allocation10], %s4427
          %4430 = dma.done %s4426, 16
        $region64: #{tpu_custom_call.1} parent=59 // pred_fallthru
          _
      $region60: #{tpu_custom_call.1} parent=5 // pred_fallthru
        _
    $region6: #{tpu_custom_call.1} parent=1 // loop_footer
      %s26 = sadd.s32 1, %s22
    $region7: #{tpu_custom_call.1} parent=1 // loop_footer_branch
      %21 = sbr.rel target = $region3
    $region8: #{tpu_custom_call.1} parent=1 // loop_exit
      _
    %4431 = vsyncpa [#allocation3], 1
    %s4432 = scalar_lea.sflag [#allocation3], 1
    %4433 = vsyncpa %s4432, 1
    %4434 = vsyncpa [#allocation6], 1
    %s4435 = scalar_lea.sflag [#allocation6], 1
    %4436 = vsyncpa %s4435, 1
    %4437 = vsyncpa [#allocation9], 1
    %s4438 = scalar_lea.sflag [#allocation9], 1
    %4439 = vsyncpa %s4438, 1
    %4440 = vsyncpa [#allocation4], 1
    %s4441 = scalar_lea.sflag [#allocation4], 1
    %4442 = vsyncpa %s4441, 1

</llo_original>
